<compile_context>
chip_gen: v7x
topology: tpu7x:2x2x1
jax: 0.10.0
libtpu: 0.0.40
codegen_flags: <defaults>
</compile_context>

<pallas_src>
import functools

import jax
import jax.numpy as jnp
import numpy as np
from jax.experimental import pallas as pl
from jax.experimental.pallas import tpu as pltpu


# ------------------------------- Pallas kernel -------------------------------

def attention_kernel(x_ref, wqkv_ref, wo_ref, bo_ref, o_ref, *,
                     heads, dim_head, scale):
    x = x_ref[...].astype(jnp.float32)                      # (Bblk, n, dim)
    Bblk, n, dim = x.shape
    inner = heads * dim_head

    # Fused q/k/v projection for all rows at once: (Bblk*n, dim) @ (dim, 3*inner).
    w_qkv = wqkv_ref[...].astype(jnp.float32)               # (dim, 3*inner), lane-dense
    qkv = jnp.einsum("bnd,df->bnf", x, w_qkv,
                     preferred_element_type=jnp.float32)    # (Bblk, n, 3*inner)

    # Accumulator pre-loaded with the output-projection bias (saves a final add).
    out = jnp.broadcast_to(bo_ref[...].astype(jnp.float32), (Bblk, n, dim))

    for h in range(heads):                                  # heads is small; unrolled
        q = qkv[:, :, h * dim_head:(h + 1) * dim_head]                    # (Bblk, n, d)
        k = qkv[:, :, inner + h * dim_head: inner + (h + 1) * dim_head]   # (Bblk, n, d)
        v = qkv[:, :, 2 * inner + h * dim_head: 2 * inner + (h + 1) * dim_head]

        s = jnp.einsum("bqd,bkd->bqk", q, k,
                       preferred_element_type=jnp.float32) * scale        # (Bblk, n, n)
        s = s - jnp.max(s, axis=-1, keepdims=True)
        e = jnp.exp(s)                                                     # EUP
        l = jnp.sum(e, axis=-1, keepdims=True)                             # (Bblk, n, 1)

        oh = jnp.einsum("bqk,bkd->bqd", e, v,
                        preferred_element_type=jnp.float32)                # (Bblk, n, d)
        oh = oh * (1.0 / l)                        # exact softmax normalization, n*1 recips

        # Head-concat + output Linear folded into a per-head accumulation:
        # (Bblk*n, d) @ (d, dim) per head, over all slabs at once.
        out = out + jnp.einsum("bnd,de->bne", oh, wo_ref[h].astype(jnp.float32),
                               preferred_element_type=jnp.float32)

    o_ref[...] = out.astype(o_ref.dtype)


# --------------------------------- wrapper -----------------------------------

@functools.partial(jax.jit, static_argnames=("heads", "slab_blocks"))
def attention_forward(x, wqkv, wo, bo, heads, slab_blocks=1):
    """Forward of Attention(dim, heads, dim_head) for x of shape (b, p, n, dim)."""
    b, p, n, dim = x.shape
    inner = wqkv.shape[0] // 3
    d = inner // heads
    scale = float(d) ** -0.5
    B = b * p
    assert B % slab_blocks == 0
    Bblk = B // slab_blocks

    # PyTorch layouts -> kernel layouts (done once, outside the kernel).
    wqkv_t = jnp.transpose(wqkv, (1, 0))                     # (dim, 3*inner), lane-dense
    wo_h = jnp.transpose(wo, (1, 0)).reshape(heads, d, dim)  # (heads, d, dim)
    bo2 = bo.reshape(1, dim)
    xf = x.reshape(B, n, dim)                                # contiguous, no transpose

    # Advisory cost estimate so XLA can schedule around this small kernel.
    flops = B * (2 * n * dim * 3 * inner                     # fused q/k/v projection
                 + heads * (2 * 2 * n * n * d)               # qk^T and attn@v
                 + heads * (2 * n * d * dim))                # output projection
    cost = pl.CostEstimate(
        flops=int(flops),
        transcendentals=int(B * heads * n * n),
        bytes_accessed=int(4 * (2 * B * n * dim + dim * 3 * inner + inner * dim + dim)),
    )

    kernel = functools.partial(attention_kernel, heads=heads, dim_head=d, scale=scale)

    out = pl.pallas_call(
        kernel,
        out_shape=jax.ShapeDtypeStruct((B, n, dim), x.dtype),
        grid=(slab_blocks,),
        in_specs=[
            pl.BlockSpec((Bblk, n, dim), lambda i: (i, 0, 0)),   # x slabs
            pl.BlockSpec((dim, 3 * inner), lambda i: (0, 0)),    # fused qkv weight
            pl.BlockSpec((heads, d, dim), lambda i: (0, 0, 0)),  # per-head out weight
            pl.BlockSpec((1, dim), lambda i: (0, 0)),            # out bias
        ],
        out_specs=pl.BlockSpec((Bblk, n, dim), lambda i: (i, 0, 0)),
        compiler_params=pltpu.CompilerParams(
            dimension_semantics=("parallel",)),                  # megacore-friendly on v7x
        cost_estimate=cost,
    )(xf, wqkv_t, wo_h, bo2)

    return out.reshape(b, p, n, dim)


# --------------------------- pure-JAX reference -------------------------------

def attention_reference(x, wqkv, wo, bo, heads):
    b, p, n, dim = x.shape
    inner = wqkv.shape[0] // 3
    d = inner // heads
    scale = float(d) ** -0.5

    qkv = jnp.einsum("bpnd,fd->bpnf", x, wqkv)            # x @ Wqkv^T
    q, k, v = jnp.split(qkv, 3, axis=-1)

    def to_heads(t):                                      # 'b p n (h d) -> b p h n d'
        return jnp.transpose(t.reshape(b, p, n, heads, d), (0, 1, 3, 2, 4))

    q, k, v = map(to_heads, (q, k, v))
    dots = jnp.einsum("bphnd,bphmd->bphnm", q, k) * scale
    attn = jax.nn.softmax(dots, axis=-1)
    out = jnp.einsum("bphnm,bphmd->bphnd", attn, v)
    out = jnp.transpose(out, (0, 1, 3, 2, 4)).reshape(b, p, n, inner)
    return jnp.einsum("bpni,oi->bpno", out, wo) + bo


# ----------------------------------- main -------------------------------------

if __name__ == "__main__":
    # Attention(dim=32, heads=4, dim_head=16) -> inner_dim=64, project_out=True.
    b, p, n, dim = 2, 4, 8, 32
    heads, dim_head = 4, 16
    inner = heads * dim_head

    key = jax.random.PRNGKey(0)
    kx, kq, ko, kb = jax.random.split(key, 4)

    x = jax.random.normal(kx, (b, p, n, dim), jnp.float32)
    wqkv = 0.1 * jax.random.normal(kq, (3 * inner, dim), jnp.float32)   # to_qkv.weight
    wo = 0.1 * jax.random.normal(ko, (dim, inner), jnp.float32)         # to_out[0].weight
    bo = 0.1 * jax.random.normal(kb, (dim,), jnp.float32)               # to_out[0].bias

    # slab_blocks=1 collapses the grid fully (best on v5e/v6e; use 2 on v7x).
    out = attention_forward(x, wqkv, wo, bo, heads=heads, slab_blocks=1)
    out = jax.block_until_ready(out)

    ref = jax.block_until_ready(attention_reference(x, wqkv, wo, bo, heads))
    np.testing.assert_allclose(np.asarray(out), np.asarray(ref), rtol=1e-4, atol=1e-4)

    print("KERNEL_OK")
</pallas_src>

<mosaic_0001>
module attributes {stable_mosaic.version = 11 : i64} {
  func.func @attention_kernel(%arg0: i32, %arg1: memref<8x8x32xf32, #tpu.memory_space<vmem>>, %arg2: memref<32x192xf32, #tpu.memory_space<vmem>>, %arg3: memref<4x16x32xf32, #tpu.memory_space<vmem>>, %arg4: memref<1x32xf32, #tpu.memory_space<vmem>>, %arg5: memref<8x8x32xf32, #tpu.memory_space<vmem>>) attributes {dimension_semantics = [#tpu.dimension_semantics<parallel>], iteration_bounds = array<i64: 1>, scalar_prefetch = 0 : i64, scratch_operands = 0 : i64, tpu.core_type = #tpu.core_type<tc>, window_params = [{transform_indices = @transform_0, window_bounds = array<i64: 8, 8, 32>}, {pipeline_mode = #tpu.pipeline_mode<synchronous>, transform_indices = @transform_1, window_bounds = array<i64: 32, 192>}, {pipeline_mode = #tpu.pipeline_mode<synchronous>, transform_indices = @transform_2, window_bounds = array<i64: 4, 16, 32>}, {pipeline_mode = #tpu.pipeline_mode<synchronous>, transform_indices = @transform_3, window_bounds = array<i64: 1, 32>}, {transform_indices = @transform_4, window_bounds = array<i64: 8, 8, 32>}]} {
    %c0 = arith.constant 0 : index
    %c0_0 = arith.constant 0 : index
    %c0_1 = arith.constant 0 : index
    %0 = vector.load %arg1[%c0, %c0_0, %c0_1] : memref<8x8x32xf32, #tpu.memory_space<vmem>>, vector<8x8x32xf32>
    %c0_2 = arith.constant 0 : index
    %c0_3 = arith.constant 0 : index
    %1 = vector.load %arg2[%c0_2, %c0_3] : memref<32x192xf32, #tpu.memory_space<vmem>>, vector<32x192xf32>
    "tpu.trace_start"() <{level = 10 : i32, message = "bnd,df->bnf"}> : () -> ()
    %cst = arith.constant dense<0.000000e+00> : vector<8x8x192xf32>
    %2 = tpu.matmul %0, %1, %cst {dimension_numbers = #tpu.dot_dimension_numbers<[2], [0], [0, 1], [1], [0, 0, 0, 1, 1, 1], [], []>} : vector<8x8x32xf32>, vector<32x192xf32>, vector<8x8x192xf32> -> vector<8x8x192xf32>
    "tpu.trace_stop"() : () -> ()
    %c0_4 = arith.constant 0 : index
    %c0_5 = arith.constant 0 : index
    %3 = vector.load %arg4[%c0_4, %c0_5] : memref<1x32xf32, #tpu.memory_space<vmem>>, vector<1x32xf32>
    %4 = vector.shape_cast %3 : vector<1x32xf32> to vector<1x1x32xf32>
    %5 = vector.broadcast %4 : vector<1x1x32xf32> to vector<8x8x32xf32>
    %6 = vector.extract_strided_slice %2 {offsets = [0, 0, 0], sizes = [8, 8, 16], strides = [1, 1, 1]} : vector<8x8x192xf32> to vector<8x8x16xf32>
    %7 = vector.extract_strided_slice %2 {offsets = [0, 0, 64], sizes = [8, 8, 16], strides = [1, 1, 1]} : vector<8x8x192xf32> to vector<8x8x16xf32>
    %8 = vector.extract_strided_slice %2 {offsets = [0, 0, 128], sizes = [8, 8, 16], strides = [1, 1, 1]} : vector<8x8x192xf32> to vector<8x8x16xf32>
    "tpu.trace_start"() <{level = 10 : i32, message = "bqd,bkd->bqk"}> : () -> ()
    %cst_6 = arith.constant dense<0.000000e+00> : vector<8x8x8xf32>
    %9 = tpu.matmul %6, %7, %cst_6 {dimension_numbers = #tpu.dot_dimension_numbers<[2], [2], [1], [1], [0, 0, 0, 1, 1, 1], [0], [0]>} : vector<8x8x16xf32>, vector<8x8x16xf32>, vector<8x8x8xf32> -> vector<8x8x8xf32>
    "tpu.trace_stop"() : () -> ()
    %cst_7 = arith.constant 2.500000e-01 : f32
    %10 = vector.broadcast %cst_7 : f32 to vector<8x8x8xf32>
    %11 = arith.mulf %9, %10 : vector<8x8x8xf32>
    %cst_8 = arith.constant dense<0xFF800000> : vector<8x8xf32>
    %12 = vector.multi_reduction <maximumf>, %11, %cst_8 [2] : vector<8x8x8xf32> to vector<8x8xf32>
    %13 = vector.shape_cast %12 : vector<8x8xf32> to vector<8x8x1xf32>
    %14 = vector.broadcast %13 : vector<8x8x1xf32> to vector<8x8x8xf32>
    %15 = arith.subf %11, %14 : vector<8x8x8xf32>
    %16 = math.exp %15 : vector<8x8x8xf32>
    %cst_9 = arith.constant dense<0.000000e+00> : vector<8x8xf32>
    %17 = vector.multi_reduction <add>, %16, %cst_9 [2] : vector<8x8x8xf32> to vector<8x8xf32>
    %18 = vector.shape_cast %17 : vector<8x8xf32> to vector<8x8x1xf32>
    "tpu.trace_start"() <{level = 10 : i32, message = "bqk,bkd->bqd"}> : () -> ()
    %cst_10 = arith.constant dense<0.000000e+00> : vector<8x8x16xf32>
    %19 = tpu.matmul %16, %8, %cst_10 {dimension_numbers = #tpu.dot_dimension_numbers<[2], [1], [1], [2], [0, 0, 0, 1, 1, 2], [0], [0]>} : vector<8x8x8xf32>, vector<8x8x16xf32>, vector<8x8x16xf32> -> vector<8x8x16xf32>
    "tpu.trace_stop"() : () -> ()
    %cst_11 = arith.constant 1.000000e+00 : f32
    %20 = vector.broadcast %cst_11 : f32 to vector<8x8x1xf32>
    %21 = arith.divf %20, %18 : vector<8x8x1xf32>
    %22 = vector.broadcast %21 : vector<8x8x1xf32> to vector<8x8x16xf32>
    %23 = arith.mulf %19, %22 : vector<8x8x16xf32>
    %c0_12 = arith.constant 0 : index
    %c0_13 = arith.constant 0 : index
    %c0_14 = arith.constant 0 : index
    %24 = vector.load %arg3[%c0_12, %c0_13, %c0_14] : memref<4x16x32xf32, #tpu.memory_space<vmem>>, vector<1x16x32xf32>
    %25 = vector.shape_cast %24 : vector<1x16x32xf32> to vector<16x32xf32>
    "tpu.trace_start"() <{level = 10 : i32, message = "bnd,de->bne"}> : () -> ()
    %cst_15 = arith.constant dense<0.000000e+00> : vector<8x8x32xf32>
    %26 = tpu.matmul %23, %25, %cst_15 {dimension_numbers = #tpu.dot_dimension_numbers<[2], [0], [0, 1], [1], [0, 0, 0, 1, 1, 1], [], []>} : vector<8x8x16xf32>, vector<16x32xf32>, vector<8x8x32xf32> -> vector<8x8x32xf32>
    "tpu.trace_stop"() : () -> ()
    %27 = arith.addf %5, %26 : vector<8x8x32xf32>
    %28 = vector.extract_strided_slice %2 {offsets = [0, 0, 16], sizes = [8, 8, 16], strides = [1, 1, 1]} : vector<8x8x192xf32> to vector<8x8x16xf32>
    %29 = vector.extract_strided_slice %2 {offsets = [0, 0, 80], sizes = [8, 8, 16], strides = [1, 1, 1]} : vector<8x8x192xf32> to vector<8x8x16xf32>
    %30 = vector.extract_strided_slice %2 {offsets = [0, 0, 144], sizes = [8, 8, 16], strides = [1, 1, 1]} : vector<8x8x192xf32> to vector<8x8x16xf32>
    "tpu.trace_start"() <{level = 10 : i32, message = "bqd,bkd->bqk"}> : () -> ()
    %cst_16 = arith.constant dense<0.000000e+00> : vector<8x8x8xf32>
    %31 = tpu.matmul %28, %29, %cst_16 {dimension_numbers = #tpu.dot_dimension_numbers<[2], [2], [1], [1], [0, 0, 0, 1, 1, 1], [0], [0]>} : vector<8x8x16xf32>, vector<8x8x16xf32>, vector<8x8x8xf32> -> vector<8x8x8xf32>
    "tpu.trace_stop"() : () -> ()
    %cst_17 = arith.constant 2.500000e-01 : f32
    %32 = vector.broadcast %cst_17 : f32 to vector<8x8x8xf32>
    %33 = arith.mulf %31, %32 : vector<8x8x8xf32>
    %cst_18 = arith.constant dense<0xFF800000> : vector<8x8xf32>
    %34 = vector.multi_reduction <maximumf>, %33, %cst_18 [2] : vector<8x8x8xf32> to vector<8x8xf32>
    %35 = vector.shape_cast %34 : vector<8x8xf32> to vector<8x8x1xf32>
    %36 = vector.broadcast %35 : vector<8x8x1xf32> to vector<8x8x8xf32>
    %37 = arith.subf %33, %36 : vector<8x8x8xf32>
    %38 = math.exp %37 : vector<8x8x8xf32>
    %cst_19 = arith.constant dense<0.000000e+00> : vector<8x8xf32>
    %39 = vector.multi_reduction <add>, %38, %cst_19 [2] : vector<8x8x8xf32> to vector<8x8xf32>
    %40 = vector.shape_cast %39 : vector<8x8xf32> to vector<8x8x1xf32>
    "tpu.trace_start"() <{level = 10 : i32, message = "bqk,bkd->bqd"}> : () -> ()
    %cst_20 = arith.constant dense<0.000000e+00> : vector<8x8x16xf32>
    %41 = tpu.matmul %38, %30, %cst_20 {dimension_numbers = #tpu.dot_dimension_numbers<[2], [1], [1], [2], [0, 0, 0, 1, 1, 2], [0], [0]>} : vector<8x8x8xf32>, vector<8x8x16xf32>, vector<8x8x16xf32> -> vector<8x8x16xf32>
    "tpu.trace_stop"() : () -> ()
    %cst_21 = arith.constant 1.000000e+00 : f32
    %42 = vector.broadcast %cst_21 : f32 to vector<8x8x1xf32>
    %43 = arith.divf %42, %40 : vector<8x8x1xf32>
    %44 = vector.broadcast %43 : vector<8x8x1xf32> to vector<8x8x16xf32>
    %45 = arith.mulf %41, %44 : vector<8x8x16xf32>
    %c1 = arith.constant 1 : index
    %c0_22 = arith.constant 0 : index
    %c0_23 = arith.constant 0 : index
    %46 = vector.load %arg3[%c1, %c0_22, %c0_23] : memref<4x16x32xf32, #tpu.memory_space<vmem>>, vector<1x16x32xf32>
    %47 = vector.shape_cast %46 : vector<1x16x32xf32> to vector<16x32xf32>
    "tpu.trace_start"() <{level = 10 : i32, message = "bnd,de->bne"}> : () -> ()
    %cst_24 = arith.constant dense<0.000000e+00> : vector<8x8x32xf32>
    %48 = tpu.matmul %45, %47, %cst_24 {dimension_numbers = #tpu.dot_dimension_numbers<[2], [0], [0, 1], [1], [0, 0, 0, 1, 1, 1], [], []>} : vector<8x8x16xf32>, vector<16x32xf32>, vector<8x8x32xf32> -> vector<8x8x32xf32>
    "tpu.trace_stop"() : () -> ()
    %49 = arith.addf %27, %48 : vector<8x8x32xf32>
    %50 = vector.extract_strided_slice %2 {offsets = [0, 0, 32], sizes = [8, 8, 16], strides = [1, 1, 1]} : vector<8x8x192xf32> to vector<8x8x16xf32>
    %51 = vector.extract_strided_slice %2 {offsets = [0, 0, 96], sizes = [8, 8, 16], strides = [1, 1, 1]} : vector<8x8x192xf32> to vector<8x8x16xf32>
    %52 = vector.extract_strided_slice %2 {offsets = [0, 0, 160], sizes = [8, 8, 16], strides = [1, 1, 1]} : vector<8x8x192xf32> to vector<8x8x16xf32>
    "tpu.trace_start"() <{level = 10 : i32, message = "bqd,bkd->bqk"}> : () -> ()
    %cst_25 = arith.constant dense<0.000000e+00> : vector<8x8x8xf32>
    %53 = tpu.matmul %50, %51, %cst_25 {dimension_numbers = #tpu.dot_dimension_numbers<[2], [2], [1], [1], [0, 0, 0, 1, 1, 1], [0], [0]>} : vector<8x8x16xf32>, vector<8x8x16xf32>, vector<8x8x8xf32> -> vector<8x8x8xf32>
    "tpu.trace_stop"() : () -> ()
    %cst_26 = arith.constant 2.500000e-01 : f32
    %54 = vector.broadcast %cst_26 : f32 to vector<8x8x8xf32>
    %55 = arith.mulf %53, %54 : vector<8x8x8xf32>
    %cst_27 = arith.constant dense<0xFF800000> : vector<8x8xf32>
    %56 = vector.multi_reduction <maximumf>, %55, %cst_27 [2] : vector<8x8x8xf32> to vector<8x8xf32>
    %57 = vector.shape_cast %56 : vector<8x8xf32> to vector<8x8x1xf32>
    %58 = vector.broadcast %57 : vector<8x8x1xf32> to vector<8x8x8xf32>
    %59 = arith.subf %55, %58 : vector<8x8x8xf32>
    %60 = math.exp %59 : vector<8x8x8xf32>
    %cst_28 = arith.constant dense<0.000000e+00> : vector<8x8xf32>
    %61 = vector.multi_reduction <add>, %60, %cst_28 [2] : vector<8x8x8xf32> to vector<8x8xf32>
    %62 = vector.shape_cast %61 : vector<8x8xf32> to vector<8x8x1xf32>
    "tpu.trace_start"() <{level = 10 : i32, message = "bqk,bkd->bqd"}> : () -> ()
    %cst_29 = arith.constant dense<0.000000e+00> : vector<8x8x16xf32>
    %63 = tpu.matmul %60, %52, %cst_29 {dimension_numbers = #tpu.dot_dimension_numbers<[2], [1], [1], [2], [0, 0, 0, 1, 1, 2], [0], [0]>} : vector<8x8x8xf32>, vector<8x8x16xf32>, vector<8x8x16xf32> -> vector<8x8x16xf32>
    "tpu.trace_stop"() : () -> ()
    %cst_30 = arith.constant 1.000000e+00 : f32
    %64 = vector.broadcast %cst_30 : f32 to vector<8x8x1xf32>
    %65 = arith.divf %64, %62 : vector<8x8x1xf32>
    %66 = vector.broadcast %65 : vector<8x8x1xf32> to vector<8x8x16xf32>
    %67 = arith.mulf %63, %66 : vector<8x8x16xf32>
    %c2 = arith.constant 2 : index
    %c0_31 = arith.constant 0 : index
    %c0_32 = arith.constant 0 : index
    %68 = vector.load %arg3[%c2, %c0_31, %c0_32] : memref<4x16x32xf32, #tpu.memory_space<vmem>>, vector<1x16x32xf32>
    %69 = vector.shape_cast %68 : vector<1x16x32xf32> to vector<16x32xf32>
    "tpu.trace_start"() <{level = 10 : i32, message = "bnd,de->bne"}> : () -> ()
    %cst_33 = arith.constant dense<0.000000e+00> : vector<8x8x32xf32>
    %70 = tpu.matmul %67, %69, %cst_33 {dimension_numbers = #tpu.dot_dimension_numbers<[2], [0], [0, 1], [1], [0, 0, 0, 1, 1, 1], [], []>} : vector<8x8x16xf32>, vector<16x32xf32>, vector<8x8x32xf32> -> vector<8x8x32xf32>
    "tpu.trace_stop"() : () -> ()
    %71 = arith.addf %49, %70 : vector<8x8x32xf32>
    %72 = vector.extract_strided_slice %2 {offsets = [0, 0, 48], sizes = [8, 8, 16], strides = [1, 1, 1]} : vector<8x8x192xf32> to vector<8x8x16xf32>
    %73 = vector.extract_strided_slice %2 {offsets = [0, 0, 112], sizes = [8, 8, 16], strides = [1, 1, 1]} : vector<8x8x192xf32> to vector<8x8x16xf32>
    %74 = vector.extract_strided_slice %2 {offsets = [0, 0, 176], sizes = [8, 8, 16], strides = [1, 1, 1]} : vector<8x8x192xf32> to vector<8x8x16xf32>
    "tpu.trace_start"() <{level = 10 : i32, message = "bqd,bkd->bqk"}> : () -> ()
    %cst_34 = arith.constant dense<0.000000e+00> : vector<8x8x8xf32>
    %75 = tpu.matmul %72, %73, %cst_34 {dimension_numbers = #tpu.dot_dimension_numbers<[2], [2], [1], [1], [0, 0, 0, 1, 1, 1], [0], [0]>} : vector<8x8x16xf32>, vector<8x8x16xf32>, vector<8x8x8xf32> -> vector<8x8x8xf32>
    "tpu.trace_stop"() : () -> ()
    %cst_35 = arith.constant 2.500000e-01 : f32
    %76 = vector.broadcast %cst_35 : f32 to vector<8x8x8xf32>
    %77 = arith.mulf %75, %76 : vector<8x8x8xf32>
    %cst_36 = arith.constant dense<0xFF800000> : vector<8x8xf32>
    %78 = vector.multi_reduction <maximumf>, %77, %cst_36 [2] : vector<8x8x8xf32> to vector<8x8xf32>
    %79 = vector.shape_cast %78 : vector<8x8xf32> to vector<8x8x1xf32>
    %80 = vector.broadcast %79 : vector<8x8x1xf32> to vector<8x8x8xf32>
    %81 = arith.subf %77, %80 : vector<8x8x8xf32>
    %82 = math.exp %81 : vector<8x8x8xf32>
    %cst_37 = arith.constant dense<0.000000e+00> : vector<8x8xf32>
    %83 = vector.multi_reduction <add>, %82, %cst_37 [2] : vector<8x8x8xf32> to vector<8x8xf32>
    %84 = vector.shape_cast %83 : vector<8x8xf32> to vector<8x8x1xf32>
    "tpu.trace_start"() <{level = 10 : i32, message = "bqk,bkd->bqd"}> : () -> ()
    %cst_38 = arith.constant dense<0.000000e+00> : vector<8x8x16xf32>
    %85 = tpu.matmul %82, %74, %cst_38 {dimension_numbers = #tpu.dot_dimension_numbers<[2], [1], [1], [2], [0, 0, 0, 1, 1, 2], [0], [0]>} : vector<8x8x8xf32>, vector<8x8x16xf32>, vector<8x8x16xf32> -> vector<8x8x16xf32>
    "tpu.trace_stop"() : () -> ()
    %cst_39 = arith.constant 1.000000e+00 : f32
    %86 = vector.broadcast %cst_39 : f32 to vector<8x8x1xf32>
    %87 = arith.divf %86, %84 : vector<8x8x1xf32>
    %88 = vector.broadcast %87 : vector<8x8x1xf32> to vector<8x8x16xf32>
    %89 = arith.mulf %85, %88 : vector<8x8x16xf32>
    %c3 = arith.constant 3 : index
    %c0_40 = arith.constant 0 : index
    %c0_41 = arith.constant 0 : index
    %90 = vector.load %arg3[%c3, %c0_40, %c0_41] : memref<4x16x32xf32, #tpu.memory_space<vmem>>, vector<1x16x32xf32>
    %91 = vector.shape_cast %90 : vector<1x16x32xf32> to vector<16x32xf32>
    "tpu.trace_start"() <{level = 10 : i32, message = "bnd,de->bne"}> : () -> ()
    %cst_42 = arith.constant dense<0.000000e+00> : vector<8x8x32xf32>
    %92 = tpu.matmul %89, %91, %cst_42 {dimension_numbers = #tpu.dot_dimension_numbers<[2], [0], [0, 1], [1], [0, 0, 0, 1, 1, 1], [], []>} : vector<8x8x16xf32>, vector<16x32xf32>, vector<8x8x32xf32> -> vector<8x8x32xf32>
    "tpu.trace_stop"() : () -> ()
    %93 = arith.addf %71, %92 : vector<8x8x32xf32>
    %c0_43 = arith.constant 0 : index
    %c0_44 = arith.constant 0 : index
    %c0_45 = arith.constant 0 : index
    %94 = vector.load %arg5[%c0_43, %c0_44, %c0_45] : memref<8x8x32xf32, #tpu.memory_space<vmem>>, vector<8x8x32xf32>
    tpu.vector_store %arg5[%c0_43, %c0_44, %c0_45], %93 {strides = array<i32>} : memref<8x8x32xf32, #tpu.memory_space<vmem>>, vector<8x8x32xf32>,
    return
  }
  func.func @transform_0(%arg0: i32) -> (i32, i32, i32) {
    %c0_i32 = arith.constant 0 : i32
    %c0_i32_0 = arith.constant 0 : i32
    %c0_i32_1 = arith.constant 0 : i32
    return %arg0, %c0_i32, %c0_i32_0 : i32, i32, i32
  }
  func.func @transform_1(%arg0: i32) -> (i32, i32) {
    %c0_i32 = arith.constant 0 : i32
    %c0_i32_0 = arith.constant 0 : i32
    %c0_i32_1 = arith.constant 0 : i32
    return %c0_i32, %c0_i32_0 : i32, i32
  }
  func.func @transform_2(%arg0: i32) -> (i32, i32, i32) {
    %c0_i32 = arith.constant 0 : i32
    %c0_i32_0 = arith.constant 0 : i32
    %c0_i32_1 = arith.constant 0 : i32
    %c0_i32_2 = arith.constant 0 : i32
    return %c0_i32, %c0_i32_0, %c0_i32_1 : i32, i32, i32
  }
  func.func @transform_3(%arg0: i32) -> (i32, i32) {
    %c0_i32 = arith.constant 0 : i32
    %c0_i32_0 = arith.constant 0 : i32
    %c0_i32_1 = arith.constant 0 : i32
    return %c0_i32, %c0_i32_0 : i32, i32
  }
  func.func @transform_4(%arg0: i32) -> (i32, i32, i32) {
    %c0_i32 = arith.constant 0 : i32
    %c0_i32_0 = arith.constant 0 : i32
    %c0_i32_1 = arith.constant 0 : i32
    return %arg0, %c0_i32, %c0_i32_0 : i32, i32, i32
  }
}

</mosaic_0001>

<llo_original>
// kernel: attention_forward.1
$region0: #{attention_forward.1}
  #allocation0 [shape = 'u32[]', space=smem, size = 0x4, offset = 0x4, fixed_abs, tag = 'smem constant byte address 0x4 - core index']
  #allocation1 [shape = 'u32[144,128]{1,0:T(1,128)}', space=vmem, size = 0x12000, scoped, tag = 'internal scratch']
  %s0 = inlined_call_operand.vmem [shape: f32[8,8,32], index: 0, kind: input, shape index: {}]
  %s1 = inlined_call_operand.hbm [shape: f32[32,192], index: 1, kind: input, shape index: {}]
  %s2 = inlined_call_operand.vmem [shape: f32[4,16,32], index: 2, kind: input, shape index: {}]
  %s3 = inlined_call_operand.vmem [shape: f32[1,32], index: 3, kind: input, shape index: {}]
  %s4 = inlined_call_operand.hbm [shape: f32[8,8,32], index: 4, kind: output, shape index: {}]
  %s5 = sld [smem:[#allocation0]]
  $region30: #{attention_forward.1} parent=0
    _
  %s7 = ssub.s32 1, %s5
  %s8 = scalar_select 0, %s7, %s5
  $region1: #{attention_forward.1} parent=0
    #allocation2 [shape = 'u8[32768]{0}', space=vmem, size = 0x8000, scoped, tag = 'input window, operand 1, single buffered']
    #allocation3 [shape = 's32[1]{0}', space=sflag, size = 0x4, scoped, tag = 'scoped memory for attention_forward.1']
    #allocation4 [shape = 's32[1]{0}', space=sflag, size = 0x4, scoped, tag = 'scoped memory for attention_forward.1']
    #allocation5 [shape = 'u8[32768]{0}', space=vmem, size = 0x8000, scoped, tag = 'output window, operand 0, single buffered']
    %9 = vsyncpa [#allocation3], 0
    %10 = vsyncpa [#allocation4], 0
    // Predicated region
    $region2: #{attention_forward.1} parent=1 // pred_check
      _
    $region3: #{attention_forward.1} parent=1 // pred_check_branch
      %12 = sbr.rel (0) target = $region5
    $region4: #{attention_forward.1} parent=1 // pred_region
      _
    $region5: #{attention_forward.1} parent=1 // pred_fallthru
      _
    // Predicated region
    $region6: #{attention_forward.1} parent=1 // pred_check
      _
    $region7: #{attention_forward.1} parent=1 // pred_check_branch
      %14 = sbr.rel (0) target = $region9
    $region8: #{attention_forward.1} parent=1 // pred_region
      %s16 = ssub.s32 1024, 1024
      %17 = vsyncadd [#allocation3], %s16
      %s18 = sshll.u32 [#allocation2], 4
      %s19 = int_to_ptr.vmem [resolvable:$true] %s18
      %24 = dma.hbm_to_vmem [thread:$0]  %s1, 1024, %s19, [#allocation3], 256, 256, 16
    $region9: #{attention_forward.1} parent=1 // pred_fallthru
      _
    // Predicated region
    $region10: #{attention_forward.1} parent=1 // pred_check
      _
    $region11: #{attention_forward.1} parent=1 // pred_check_branch
      %26 = sbr.rel (0) target = $region13
    $region12: #{attention_forward.1} parent=1 // pred_region
      _
    $region13: #{attention_forward.1} parent=1 // pred_fallthru
      _
    // Predicated region
    $region14: #{attention_forward.1} parent=1 // pred_check
      _
    $region15: #{attention_forward.1} parent=1 // pred_check_branch
      %28 = sbr.rel (0) target = $region17
    $region16: #{attention_forward.1} parent=1 // pred_region
      _
    $region17: #{attention_forward.1} parent=1 // pred_fallthru
      _
    // Predicated region
    $region18: #{attention_forward.1} parent=1 // pred_check
      _
    $region19: #{attention_forward.1} parent=1 // pred_check_branch
      %30 = sbr.rel (0) target = $region21
    $region20: #{attention_forward.1} parent=1 // pred_region
      %31 = dma.done [#allocation3], 1024
    $region21: #{attention_forward.1} parent=1 // pred_fallthru
      _
    %v32 = vld [vmem:[%s0] sm:$0xff]
    %v33 = vld [vmem:[%s0 + $0x8] sm:$0xff]
    %v34 = vld [vmem:[%s0 + $0x10] sm:$0xff]
    %v35 = vld [vmem:[%s0 + $0x18] sm:$0xff]
    %v36 = vld [vmem:[%s0 + $0x20] sm:$0xff]
    %v37 = vld [vmem:[%s0 + $0x28] sm:$0xff]
    %v38 = vld [vmem:[%s0 + $0x30] sm:$0xff]
    %v39 = vld [vmem:[%s0 + $0x38] sm:$0xff]
    %v40 = vld [vmem:[#allocation2] sm:$0xff]
    %v41 = vld [vmem:[#allocation2 + $0x8] sm:$0xff]
    %v42 = vld [vmem:[#allocation2 + $0x10] sm:$0xff]
    %v43 = vld [vmem:[#allocation2 + $0x18] sm:$0xff]
    %v44 = vld [vmem:[#allocation2 + $0x20] sm:$0xff]
    %v45 = vld [vmem:[#allocation2 + $0x28] sm:$0xff]
    %v46 = vld [vmem:[#allocation2 + $0x30] sm:$0xff]
    %v47 = vld [vmem:[#allocation2 + $0x38] sm:$0xff]
    %vm48 = vcmask 261120
    %v50 = vsel %vm48, %v32, 0
    %v53 = vsel %vm48, %v33, 0
    %v56 = vsel %vm48, %v34, 0
    %v59 = vsel %vm48, %v35, 0
    %v62 = vsel %vm48, %v36, 0
    %v65 = vsel %vm48, %v37, 0
    %v68 = vsel %vm48, %v38, 0
    %v71 = vsel %vm48, %v39, 0
    %73 = vmatprep.subr.mxu0 %v41
    %74 = vmatpush1.msra.mxu0 %v40
    %75 = vmatprep.subr.mxu0 %v43
    %76 = vmatpush1.msra.mxu0 %v42
    %77 = vmatprep.subr.mxu0 %v45
    %78 = vmatpush1.msra.mxu0 %v44
    %79 = vmatprep.subr.mxu0 %v47
    %80 = vmatpush1.msra.mxu0 %v46
    %81 = vmatprep.subr.mxu0 0.0
    %82 = vmatpush1.msra.mxu0 0.0
    %83 = vmatprep.subr.mxu0 0.0
    %84 = vmatpush1.msra.mxu0 0.0
    %85 = vmatprep.subr.mxu0 0.0
    %86 = vmatpush1.msra.mxu0 0.0
    %87 = vmatprep.subr.mxu0 0.0
    %88 = vmatpush1.msra.mxu0 0.0
    %89 = vmatprep.subr.mxu0 0.0
    %90 = vmatpush1.msra.mxu0 0.0
    %91 = vmatprep.subr.mxu0 0.0
    %92 = vmatpush1.msra.mxu0 0.0
    %93 = vmatprep.subr.mxu0 0.0
    %94 = vmatpush1.msra.mxu0 0.0
    %95 = vmatprep.subr.mxu0 0.0
    %96 = vmatpush1.msra.mxu0 0.0
    %97 = vmatprep.subr.mxu0 0.0
    %98 = vmatpush1.msra.mxu0 0.0
    %99 = vmatprep.subr.mxu0 0.0
    %100 = vmatpush1.msra.mxu0 0.0
    %101 = vmatprep.subr.mxu0 0.0
    %102 = vmatpush1.msra.mxu0 0.0
    %103 = vmatprep.subr.mxu0 0.0
    %104 = vmatpush1.msra.mxu0 0.0
    %105 = vmatprep.subr.mxu0 0.0
    %106 = vmatpush1.msra.mxu0 0.0
    %107 = vmatprep.subr.mxu0 0.0
    %108 = vmatpush1.msra.mxu0 0.0
    %109 = vmatprep.subr.mxu0 0.0
    %110 = vmatpush1.msra.mxu0 0.0
    %111 = vmatprep.subr.mxu0 0.0
    %112 = vmatpush1.msra.mxu0 0.0
    %113 = vmatprep.subr.mxu0 0.0
    %114 = vmatpush1.msra.mxu0 0.0
    %115 = vmatprep.subr.mxu0 0.0
    %116 = vmatpush1.msra.mxu0 0.0
    %117 = vmatprep.subr.mxu0 0.0
    %118 = vmatpush1.msra.mxu0 0.0
    %119 = vmatprep.subr.mxu0 0.0
    %120 = vmatpush1.msra.mxu0 0.0
    %121 = vmatprep.subr.mxu0 0.0
    %122 = vmatpush1.msra.mxu0 0.0
    %123 = vmatprep.subr.mxu0 0.0
    %124 = vmatpush1.msra.mxu0 0.0
    %125 = vmatprep.subr.mxu0 0.0
    %126 = vmatpush1.msra.mxu0 0.0
    %127 = vmatprep.subr.mxu0 0.0
    %128 = vmatpush1.msra.mxu0 0.0
    %129 = vmatprep.subr.mxu0 0.0
    %130 = vmatpush1.msra.mxu0 0.0
    %131 = vmatprep.subr.mxu0 0.0
    %132 = vmatpush1.msra.mxu0 0.0
    %133 = vmatprep.subr.mxu0 0.0
    %134 = vmatpush1.msra.mxu0 0.0
    %135 = vmatprep.subr.mxu0 0.0
    %136 = vmatpush1.msra.mxu0 0.0
    %137 = vmatprep.mubr.f32.mxu0 0.0
    %138 = vmatmul.mubr.f32.gmra.mrb[0].mxu0 %v50
    %v139 = vpop.f32.mrb[0].mxu0
    %v140 = vadd.f32 0.0, %v139
    %v141 = vpop.f32.mrb[0].mxu0
    %v142 = vadd.f32 0.0, %v141
    %143 = vmatprep.mubr.f32.mxu0 0.0
    %144 = vmatmul.mubr.f32.gmra.mrb[0].mxu0 %v53
    %v145 = vpop.f32.mrb[0].mxu0
    %v146 = vadd.f32 0.0, %v145
    %v147 = vpop.f32.mrb[0].mxu0
    %v148 = vadd.f32 0.0, %v147
    %149 = vmatprep.mubr.f32.mxu0 0.0
    %150 = vmatmul.mubr.f32.gmra.mrb[0].mxu0 %v56
    %v151 = vpop.f32.mrb[0].mxu0
    %v152 = vadd.f32 0.0, %v151
    %v153 = vpop.f32.mrb[0].mxu0
    %v154 = vadd.f32 0.0, %v153
    %155 = vmatprep.mubr.f32.mxu0 0.0
    %156 = vmatmul.mubr.f32.gmra.mrb[0].mxu0 %v59
    %v157 = vpop.f32.mrb[0].mxu0
    %v158 = vadd.f32 0.0, %v157
    %v159 = vpop.f32.mrb[0].mxu0
    %v160 = vadd.f32 0.0, %v159
    %161 = vmatprep.mubr.f32.mxu0 0.0
    %162 = vmatmul.mubr.f32.gmra.mrb[0].mxu0 %v62
    %v163 = vpop.f32.mrb[0].mxu0
    %v164 = vadd.f32 0.0, %v163
    %v165 = vpop.f32.mrb[0].mxu0
    %v166 = vadd.f32 0.0, %v165
    %167 = vmatprep.mubr.f32.mxu0 0.0
    %168 = vmatmul.mubr.f32.gmra.mrb[0].mxu0 %v65
    %v169 = vpop.f32.mrb[0].mxu0
    %v170 = vadd.f32 0.0, %v169
    %v171 = vpop.f32.mrb[0].mxu0
    %v172 = vadd.f32 0.0, %v171
    %173 = vmatprep.mubr.f32.mxu0 0.0
    %174 = vmatmul.mubr.f32.gmra.mrb[0].mxu0 %v68
    %v175 = vpop.f32.mrb[0].mxu0
    %v176 = vadd.f32 0.0, %v175
    %v177 = vpop.f32.mrb[0].mxu0
    %v178 = vadd.f32 0.0, %v177
    %179 = vmatprep.mubr.f32.mxu0 0.0
    %180 = vmatmul.mubr.f32.gmra.mrb[0].mxu0 %v71
    %v181 = vpop.f32.mrb[0].mxu0
    %v182 = vadd.f32 0.0, %v181
    %v183 = vpop.f32.mrb[0].mxu0
    %v184 = vadd.f32 0.0, %v183
    %185 = vdwg.mxu0
    %v186 = vld [vmem:[%s3] sm:$0x1]
    %v188 = vlaneseq
    %v189 = vshrl.u32 %v188, 7
    %v190 = vsub.s32 0, %v189
    %v191 = vrot.slane %v186, %v190
    %194 = vrot.lane.b32.xlu0 %v140, 64
    %v195 = vpop.permute.xlu0 %194
    %vm196 = vcmask 130048
    %v197 = vsel %vm196, %v140, 0
    %v199 = vsel %vm196, %v195, 0
    %201 = vmatprep.subr.mxu0 0.0
    %202 = vmatpush1.xpose.msra.mxu0 %v199
    %203 = vmatprep.subr.mxu0 0.0
    %204 = vmatpush1.xpose.msra.mxu0 0.0
    %205 = vmatprep.subr.mxu0 0.0
    %206 = vmatpush1.xpose.msra.mxu0 0.0
    %207 = vmatprep.subr.mxu0 0.0
    %208 = vmatpush1.xpose.msra.mxu0 0.0
    %209 = vmatprep.subr.mxu0 0.0
    %210 = vmatpush1.xpose.msra.mxu0 0.0
    %211 = vmatprep.subr.mxu0 0.0
    %212 = vmatpush1.xpose.msra.mxu0 0.0
    %213 = vmatprep.subr.mxu0 0.0
    %214 = vmatpush1.xpose.msra.mxu0 0.0
    %215 = vmatprep.subr.mxu0 0.0
    %216 = vmatpush1.xpose.msra.mxu0 0.0
    %217 = vmatprep.subr.mxu0 0.0
    %218 = vmatpush1.xpose.msra.mxu0 0.0
    %219 = vmatprep.subr.mxu0 0.0
    %220 = vmatpush1.xpose.msra.mxu0 0.0
    %221 = vmatprep.subr.mxu0 0.0
    %222 = vmatpush1.xpose.msra.mxu0 0.0
    %223 = vmatprep.subr.mxu0 0.0
    %224 = vmatpush1.xpose.msra.mxu0 0.0
    %225 = vmatprep.subr.mxu0 0.0
    %226 = vmatpush1.xpose.msra.mxu0 0.0
    %227 = vmatprep.subr.mxu0 0.0
    %228 = vmatpush1.xpose.msra.mxu0 0.0
    %229 = vmatprep.subr.mxu0 0.0
    %230 = vmatpush1.xpose.msra.mxu0 0.0
    %231 = vmatprep.subr.mxu0 0.0
    %232 = vmatpush1.xpose.msra.mxu0 0.0
    %233 = vmatprep.subr.mxu0 0.0
    %234 = vmatpush1.xpose.msra.mxu0 0.0
    %235 = vmatprep.subr.mxu0 0.0
    %236 = vmatpush1.xpose.msra.mxu0 0.0
    %237 = vmatprep.subr.mxu0 0.0
    %238 = vmatpush1.xpose.msra.mxu0 0.0
    %239 = vmatprep.subr.mxu0 0.0
    %240 = vmatpush1.xpose.msra.mxu0 0.0
    %241 = vmatprep.subr.mxu0 0.0
    %242 = vmatpush1.xpose.msra.mxu0 0.0
    %243 = vmatprep.subr.mxu0 0.0
    %244 = vmatpush1.xpose.msra.mxu0 0.0
    %245 = vmatprep.subr.mxu0 0.0
    %246 = vmatpush1.xpose.msra.mxu0 0.0
    %247 = vmatprep.subr.mxu0 0.0
    %248 = vmatpush1.xpose.msra.mxu0 0.0
    %249 = vmatprep.subr.mxu0 0.0
    %250 = vmatpush1.xpose.msra.mxu0 0.0
    %251 = vmatprep.subr.mxu0 0.0
    %252 = vmatpush1.xpose.msra.mxu0 0.0
    %253 = vmatprep.subr.mxu0 0.0
    %254 = vmatpush1.xpose.msra.mxu0 0.0
    %255 = vmatprep.subr.mxu0 0.0
    %256 = vmatpush1.xpose.msra.mxu0 0.0
    %257 = vmatprep.subr.mxu0 0.0
    %258 = vmatpush1.xpose.msra.mxu0 0.0
    %259 = vmatprep.subr.mxu0 0.0
    %260 = vmatpush1.xpose.msra.mxu0 0.0
    %261 = vmatprep.subr.mxu0 0.0
    %262 = vmatpush1.xpose.msra.mxu0 0.0
    %263 = vmatprep.subr.mxu0 0.0
    %264 = vmatpush1.xpose.msra.mxu0 0.0
    %265 = vmatprep.mubr.f32.mxu0 0.0
    %266 = vmatmul.mubr.f32.gmra.mrb[0].mxu0 %v197
    %v267 = vpop.f32.mrb[0].mxu0
    %v268 = vadd.f32 0.0, %v267
    %v269 = vpop.f32.mrb[0].mxu0
    %270 = vdwg.mxu0
    %272 = vrot.lane.b32.xlu0 %v146, 64
    %v273 = vpop.permute.xlu0 %272
    %v274 = vsel %vm196, %v146, 0
    %v276 = vsel %vm196, %v273, 0
    %278 = vmatprep.subr.mxu0 0.0
    %279 = vmatpush1.xpose.msra.mxu0 %v276
    %280 = vmatprep.subr.mxu0 0.0
    %281 = vmatpush1.xpose.msra.mxu0 0.0
    %282 = vmatprep.subr.mxu0 0.0
    %283 = vmatpush1.xpose.msra.mxu0 0.0
    %284 = vmatprep.subr.mxu0 0.0
    %285 = vmatpush1.xpose.msra.mxu0 0.0
    %286 = vmatprep.subr.mxu0 0.0
    %287 = vmatpush1.xpose.msra.mxu0 0.0
    %288 = vmatprep.subr.mxu0 0.0
    %289 = vmatpush1.xpose.msra.mxu0 0.0
    %290 = vmatprep.subr.mxu0 0.0
    %291 = vmatpush1.xpose.msra.mxu0 0.0
    %292 = vmatprep.subr.mxu0 0.0
    %293 = vmatpush1.xpose.msra.mxu0 0.0
    %294 = vmatprep.subr.mxu0 0.0
    %295 = vmatpush1.xpose.msra.mxu0 0.0
    %296 = vmatprep.subr.mxu0 0.0
    %297 = vmatpush1.xpose.msra.mxu0 0.0
    %298 = vmatprep.subr.mxu0 0.0
    %299 = vmatpush1.xpose.msra.mxu0 0.0
    %300 = vmatprep.subr.mxu0 0.0
    %301 = vmatpush1.xpose.msra.mxu0 0.0
    %302 = vmatprep.subr.mxu0 0.0
    %303 = vmatpush1.xpose.msra.mxu0 0.0
    %304 = vmatprep.subr.mxu0 0.0
    %305 = vmatpush1.xpose.msra.mxu0 0.0
    %306 = vmatprep.subr.mxu0 0.0
    %307 = vmatpush1.xpose.msra.mxu0 0.0
    %308 = vmatprep.subr.mxu0 0.0
    %309 = vmatpush1.xpose.msra.mxu0 0.0
    %310 = vmatprep.subr.mxu0 0.0
    %311 = vmatpush1.xpose.msra.mxu0 0.0
    %312 = vmatprep.subr.mxu0 0.0
    %313 = vmatpush1.xpose.msra.mxu0 0.0
    %314 = vmatprep.subr.mxu0 0.0
    %315 = vmatpush1.xpose.msra.mxu0 0.0
    %316 = vmatprep.subr.mxu0 0.0
    %317 = vmatpush1.xpose.msra.mxu0 0.0
    %318 = vmatprep.subr.mxu0 0.0
    %319 = vmatpush1.xpose.msra.mxu0 0.0
    %320 = vmatprep.subr.mxu0 0.0
    %321 = vmatpush1.xpose.msra.mxu0 0.0
    %322 = vmatprep.subr.mxu0 0.0
    %323 = vmatpush1.xpose.msra.mxu0 0.0
    %324 = vmatprep.subr.mxu0 0.0
    %325 = vmatpush1.xpose.msra.mxu0 0.0
    %326 = vmatprep.subr.mxu0 0.0
    %327 = vmatpush1.xpose.msra.mxu0 0.0
    %328 = vmatprep.subr.mxu0 0.0
    %329 = vmatpush1.xpose.msra.mxu0 0.0
    %330 = vmatprep.subr.mxu0 0.0
    %331 = vmatpush1.xpose.msra.mxu0 0.0
    %332 = vmatprep.subr.mxu0 0.0
    %333 = vmatpush1.xpose.msra.mxu0 0.0
    %334 = vmatprep.subr.mxu0 0.0
    %335 = vmatpush1.xpose.msra.mxu0 0.0
    %336 = vmatprep.subr.mxu0 0.0
    %337 = vmatpush1.xpose.msra.mxu0 0.0
    %338 = vmatprep.subr.mxu0 0.0
    %339 = vmatpush1.xpose.msra.mxu0 0.0
    %340 = vmatprep.subr.mxu0 0.0
    %341 = vmatpush1.xpose.msra.mxu0 0.0
    %342 = vmatprep.mubr.f32.mxu0 0.0
    %343 = vmatmul.mubr.f32.gmra.mrb[0].mxu0 %v274
    %v344 = vpop.f32.mrb[0].mxu0
    %v345 = vadd.f32 0.0, %v344
    %v346 = vpop.f32.mrb[0].mxu0
    %347 = vdwg.mxu0
    %349 = vrot.lane.b32.xlu0 %v152, 64
    %v350 = vpop.permute.xlu0 %349
    %v351 = vsel %vm196, %v152, 0
    %v353 = vsel %vm196, %v350, 0
    %355 = vmatprep.subr.mxu0 0.0
    %356 = vmatpush1.xpose.msra.mxu0 %v353
    %357 = vmatprep.subr.mxu0 0.0
    %358 = vmatpush1.xpose.msra.mxu0 0.0
    %359 = vmatprep.subr.mxu0 0.0
    %360 = vmatpush1.xpose.msra.mxu0 0.0
    %361 = vmatprep.subr.mxu0 0.0
    %362 = vmatpush1.xpose.msra.mxu0 0.0
    %363 = vmatprep.subr.mxu0 0.0
    %364 = vmatpush1.xpose.msra.mxu0 0.0
    %365 = vmatprep.subr.mxu0 0.0
    %366 = vmatpush1.xpose.msra.mxu0 0.0
    %367 = vmatprep.subr.mxu0 0.0
    %368 = vmatpush1.xpose.msra.mxu0 0.0
    %369 = vmatprep.subr.mxu0 0.0
    %370 = vmatpush1.xpose.msra.mxu0 0.0
    %371 = vmatprep.subr.mxu0 0.0
    %372 = vmatpush1.xpose.msra.mxu0 0.0
    %373 = vmatprep.subr.mxu0 0.0
    %374 = vmatpush1.xpose.msra.mxu0 0.0
    %375 = vmatprep.subr.mxu0 0.0
    %376 = vmatpush1.xpose.msra.mxu0 0.0
    %377 = vmatprep.subr.mxu0 0.0
    %378 = vmatpush1.xpose.msra.mxu0 0.0
    %379 = vmatprep.subr.mxu0 0.0
    %380 = vmatpush1.xpose.msra.mxu0 0.0
    %381 = vmatprep.subr.mxu0 0.0
    %382 = vmatpush1.xpose.msra.mxu0 0.0
    %383 = vmatprep.subr.mxu0 0.0
    %384 = vmatpush1.xpose.msra.mxu0 0.0
    %385 = vmatprep.subr.mxu0 0.0
    %386 = vmatpush1.xpose.msra.mxu0 0.0
    %387 = vmatprep.subr.mxu0 0.0
    %388 = vmatpush1.xpose.msra.mxu0 0.0
    %389 = vmatprep.subr.mxu0 0.0
    %390 = vmatpush1.xpose.msra.mxu0 0.0
    %391 = vmatprep.subr.mxu0 0.0
    %392 = vmatpush1.xpose.msra.mxu0 0.0
    %393 = vmatprep.subr.mxu0 0.0
    %394 = vmatpush1.xpose.msra.mxu0 0.0
    %395 = vmatprep.subr.mxu0 0.0
    %396 = vmatpush1.xpose.msra.mxu0 0.0
    %397 = vmatprep.subr.mxu0 0.0
    %398 = vmatpush1.xpose.msra.mxu0 0.0
    %399 = vmatprep.subr.mxu0 0.0
    %400 = vmatpush1.xpose.msra.mxu0 0.0
    %401 = vmatprep.subr.mxu0 0.0
    %402 = vmatpush1.xpose.msra.mxu0 0.0
    %403 = vmatprep.subr.mxu0 0.0
    %404 = vmatpush1.xpose.msra.mxu0 0.0
    %405 = vmatprep.subr.mxu0 0.0
    %406 = vmatpush1.xpose.msra.mxu0 0.0
    %407 = vmatprep.subr.mxu0 0.0
    %408 = vmatpush1.xpose.msra.mxu0 0.0
    %409 = vmatprep.subr.mxu0 0.0
    %410 = vmatpush1.xpose.msra.mxu0 0.0
    %411 = vmatprep.subr.mxu0 0.0
    %412 = vmatpush1.xpose.msra.mxu0 0.0
    %413 = vmatprep.subr.mxu0 0.0
    %414 = vmatpush1.xpose.msra.mxu0 0.0
    %415 = vmatprep.subr.mxu0 0.0
    %416 = vmatpush1.xpose.msra.mxu0 0.0
    %417 = vmatprep.subr.mxu0 0.0
    %418 = vmatpush1.xpose.msra.mxu0 0.0
    %419 = vmatprep.mubr.f32.mxu0 0.0
    %420 = vmatmul.mubr.f32.gmra.mrb[0].mxu0 %v351
    %v421 = vpop.f32.mrb[0].mxu0
    %v422 = vadd.f32 0.0, %v421
    %v423 = vpop.f32.mrb[0].mxu0
    %424 = vdwg.mxu0
    %426 = vrot.lane.b32.xlu0 %v158, 64
    %v427 = vpop.permute.xlu0 %426
    %v428 = vsel %vm196, %v158, 0
    %v430 = vsel %vm196, %v427, 0
    %432 = vmatprep.subr.mxu0 0.0
    %433 = vmatpush1.xpose.msra.mxu0 %v430
    %434 = vmatprep.subr.mxu0 0.0
    %435 = vmatpush1.xpose.msra.mxu0 0.0
    %436 = vmatprep.subr.mxu0 0.0
    %437 = vmatpush1.xpose.msra.mxu0 0.0
    %438 = vmatprep.subr.mxu0 0.0
    %439 = vmatpush1.xpose.msra.mxu0 0.0
    %440 = vmatprep.subr.mxu0 0.0
    %441 = vmatpush1.xpose.msra.mxu0 0.0
    %442 = vmatprep.subr.mxu0 0.0
    %443 = vmatpush1.xpose.msra.mxu0 0.0
    %444 = vmatprep.subr.mxu0 0.0
    %445 = vmatpush1.xpose.msra.mxu0 0.0
    %446 = vmatprep.subr.mxu0 0.0
    %447 = vmatpush1.xpose.msra.mxu0 0.0
    %448 = vmatprep.subr.mxu0 0.0
    %449 = vmatpush1.xpose.msra.mxu0 0.0
    %450 = vmatprep.subr.mxu0 0.0
    %451 = vmatpush1.xpose.msra.mxu0 0.0
    %452 = vmatprep.subr.mxu0 0.0
    %453 = vmatpush1.xpose.msra.mxu0 0.0
    %454 = vmatprep.subr.mxu0 0.0
    %455 = vmatpush1.xpose.msra.mxu0 0.0
    %456 = vmatprep.subr.mxu0 0.0
    %457 = vmatpush1.xpose.msra.mxu0 0.0
    %458 = vmatprep.subr.mxu0 0.0
    %459 = vmatpush1.xpose.msra.mxu0 0.0
    %460 = vmatprep.subr.mxu0 0.0
    %461 = vmatpush1.xpose.msra.mxu0 0.0
    %462 = vmatprep.subr.mxu0 0.0
    %463 = vmatpush1.xpose.msra.mxu0 0.0
    %464 = vmatprep.subr.mxu0 0.0
    %465 = vmatpush1.xpose.msra.mxu0 0.0
    %466 = vmatprep.subr.mxu0 0.0
    %467 = vmatpush1.xpose.msra.mxu0 0.0
    %468 = vmatprep.subr.mxu0 0.0
    %469 = vmatpush1.xpose.msra.mxu0 0.0
    %470 = vmatprep.subr.mxu0 0.0
    %471 = vmatpush1.xpose.msra.mxu0 0.0
    %472 = vmatprep.subr.mxu0 0.0
    %473 = vmatpush1.xpose.msra.mxu0 0.0
    %474 = vmatprep.subr.mxu0 0.0
    %475 = vmatpush1.xpose.msra.mxu0 0.0
    %476 = vmatprep.subr.mxu0 0.0
    %477 = vmatpush1.xpose.msra.mxu0 0.0
    %478 = vmatprep.subr.mxu0 0.0
    %479 = vmatpush1.xpose.msra.mxu0 0.0
    %480 = vmatprep.subr.mxu0 0.0
    %481 = vmatpush1.xpose.msra.mxu0 0.0
    %482 = vmatprep.subr.mxu0 0.0
    %483 = vmatpush1.xpose.msra.mxu0 0.0
    %484 = vmatprep.subr.mxu0 0.0
    %485 = vmatpush1.xpose.msra.mxu0 0.0
    %486 = vmatprep.subr.mxu0 0.0
    %487 = vmatpush1.xpose.msra.mxu0 0.0
    %488 = vmatprep.subr.mxu0 0.0
    %489 = vmatpush1.xpose.msra.mxu0 0.0
    %490 = vmatprep.subr.mxu0 0.0
    %491 = vmatpush1.xpose.msra.mxu0 0.0
    %492 = vmatprep.subr.mxu0 0.0
    %493 = vmatpush1.xpose.msra.mxu0 0.0
    %494 = vmatprep.subr.mxu0 0.0
    %495 = vmatpush1.xpose.msra.mxu0 0.0
    %496 = vmatprep.mubr.f32.mxu0 0.0
    %497 = vmatmul.mubr.f32.gmra.mrb[0].mxu0 %v428
    %v498 = vpop.f32.mrb[0].mxu0
    %v499 = vadd.f32 0.0, %v498
    %v500 = vpop.f32.mrb[0].mxu0
    %501 = vdwg.mxu0
    %503 = vrot.lane.b32.xlu0 %v164, 64
    %v504 = vpop.permute.xlu0 %503
    %v505 = vsel %vm196, %v164, 0
    %v507 = vsel %vm196, %v504, 0
    %509 = vmatprep.subr.mxu0 0.0
    %510 = vmatpush1.xpose.msra.mxu0 %v507
    %511 = vmatprep.subr.mxu0 0.0
    %512 = vmatpush1.xpose.msra.mxu0 0.0
    %513 = vmatprep.subr.mxu0 0.0
    %514 = vmatpush1.xpose.msra.mxu0 0.0
    %515 = vmatprep.subr.mxu0 0.0
    %516 = vmatpush1.xpose.msra.mxu0 0.0
    %517 = vmatprep.subr.mxu0 0.0
    %518 = vmatpush1.xpose.msra.mxu0 0.0
    %519 = vmatprep.subr.mxu0 0.0
    %520 = vmatpush1.xpose.msra.mxu0 0.0
    %521 = vmatprep.subr.mxu0 0.0
    %522 = vmatpush1.xpose.msra.mxu0 0.0
    %523 = vmatprep.subr.mxu0 0.0
    %524 = vmatpush1.xpose.msra.mxu0 0.0
    %525 = vmatprep.subr.mxu0 0.0
    %526 = vmatpush1.xpose.msra.mxu0 0.0
    %527 = vmatprep.subr.mxu0 0.0
    %528 = vmatpush1.xpose.msra.mxu0 0.0
    %529 = vmatprep.subr.mxu0 0.0
    %530 = vmatpush1.xpose.msra.mxu0 0.0
    %531 = vmatprep.subr.mxu0 0.0
    %532 = vmatpush1.xpose.msra.mxu0 0.0
    %533 = vmatprep.subr.mxu0 0.0
    %534 = vmatpush1.xpose.msra.mxu0 0.0
    %535 = vmatprep.subr.mxu0 0.0
    %536 = vmatpush1.xpose.msra.mxu0 0.0
    %537 = vmatprep.subr.mxu0 0.0
    %538 = vmatpush1.xpose.msra.mxu0 0.0
    %539 = vmatprep.subr.mxu0 0.0
    %540 = vmatpush1.xpose.msra.mxu0 0.0
    %541 = vmatprep.subr.mxu0 0.0
    %542 = vmatpush1.xpose.msra.mxu0 0.0
    %543 = vmatprep.subr.mxu0 0.0
    %544 = vmatpush1.xpose.msra.mxu0 0.0
    %545 = vmatprep.subr.mxu0 0.0
    %546 = vmatpush1.xpose.msra.mxu0 0.0
    %547 = vmatprep.subr.mxu0 0.0
    %548 = vmatpush1.xpose.msra.mxu0 0.0
    %549 = vmatprep.subr.mxu0 0.0
    %550 = vmatpush1.xpose.msra.mxu0 0.0
    %551 = vmatprep.subr.mxu0 0.0
    %552 = vmatpush1.xpose.msra.mxu0 0.0
    %553 = vmatprep.subr.mxu0 0.0
    %554 = vmatpush1.xpose.msra.mxu0 0.0
    %555 = vmatprep.subr.mxu0 0.0
    %556 = vmatpush1.xpose.msra.mxu0 0.0
    %557 = vmatprep.subr.mxu0 0.0
    %558 = vmatpush1.xpose.msra.mxu0 0.0
    %559 = vmatprep.subr.mxu0 0.0
    %560 = vmatpush1.xpose.msra.mxu0 0.0
    %561 = vmatprep.subr.mxu0 0.0
    %562 = vmatpush1.xpose.msra.mxu0 0.0
    %563 = vmatprep.subr.mxu0 0.0
    %564 = vmatpush1.xpose.msra.mxu0 0.0
    %565 = vmatprep.subr.mxu0 0.0
    %566 = vmatpush1.xpose.msra.mxu0 0.0
    %567 = vmatprep.subr.mxu0 0.0
    %568 = vmatpush1.xpose.msra.mxu0 0.0
    %569 = vmatprep.subr.mxu0 0.0
    %570 = vmatpush1.xpose.msra.mxu0 0.0
    %571 = vmatprep.subr.mxu0 0.0
    %572 = vmatpush1.xpose.msra.mxu0 0.0
    %573 = vmatprep.mubr.f32.mxu0 0.0
    %574 = vmatmul.mubr.f32.gmra.mrb[0].mxu0 %v505
    %v575 = vpop.f32.mrb[0].mxu0
    %v576 = vadd.f32 0.0, %v575
    %v577 = vpop.f32.mrb[0].mxu0
    %578 = vdwg.mxu0
    %580 = vrot.lane.b32.xlu0 %v170, 64
    %v581 = vpop.permute.xlu0 %580
    %v582 = vsel %vm196, %v170, 0
    %v584 = vsel %vm196, %v581, 0
    %586 = vmatprep.subr.mxu0 0.0
    %587 = vmatpush1.xpose.msra.mxu0 %v584
    %588 = vmatprep.subr.mxu0 0.0
    %589 = vmatpush1.xpose.msra.mxu0 0.0
    %590 = vmatprep.subr.mxu0 0.0
    %591 = vmatpush1.xpose.msra.mxu0 0.0
    %592 = vmatprep.subr.mxu0 0.0
    %593 = vmatpush1.xpose.msra.mxu0 0.0
    %594 = vmatprep.subr.mxu0 0.0
    %595 = vmatpush1.xpose.msra.mxu0 0.0
    %596 = vmatprep.subr.mxu0 0.0
    %597 = vmatpush1.xpose.msra.mxu0 0.0
    %598 = vmatprep.subr.mxu0 0.0
    %599 = vmatpush1.xpose.msra.mxu0 0.0
    %600 = vmatprep.subr.mxu0 0.0
    %601 = vmatpush1.xpose.msra.mxu0 0.0
    %602 = vmatprep.subr.mxu0 0.0
    %603 = vmatpush1.xpose.msra.mxu0 0.0
    %604 = vmatprep.subr.mxu0 0.0
    %605 = vmatpush1.xpose.msra.mxu0 0.0
    %606 = vmatprep.subr.mxu0 0.0
    %607 = vmatpush1.xpose.msra.mxu0 0.0
    %608 = vmatprep.subr.mxu0 0.0
    %609 = vmatpush1.xpose.msra.mxu0 0.0
    %610 = vmatprep.subr.mxu0 0.0
    %611 = vmatpush1.xpose.msra.mxu0 0.0
    %612 = vmatprep.subr.mxu0 0.0
    %613 = vmatpush1.xpose.msra.mxu0 0.0
    %614 = vmatprep.subr.mxu0 0.0
    %615 = vmatpush1.xpose.msra.mxu0 0.0
    %616 = vmatprep.subr.mxu0 0.0
    %617 = vmatpush1.xpose.msra.mxu0 0.0
    %618 = vmatprep.subr.mxu0 0.0
    %619 = vmatpush1.xpose.msra.mxu0 0.0
    %620 = vmatprep.subr.mxu0 0.0
    %621 = vmatpush1.xpose.msra.mxu0 0.0
    %622 = vmatprep.subr.mxu0 0.0
    %623 = vmatpush1.xpose.msra.mxu0 0.0
    %624 = vmatprep.subr.mxu0 0.0
    %625 = vmatpush1.xpose.msra.mxu0 0.0
    %626 = vmatprep.subr.mxu0 0.0
    %627 = vmatpush1.xpose.msra.mxu0 0.0
    %628 = vmatprep.subr.mxu0 0.0
    %629 = vmatpush1.xpose.msra.mxu0 0.0
    %630 = vmatprep.subr.mxu0 0.0
    %631 = vmatpush1.xpose.msra.mxu0 0.0
    %632 = vmatprep.subr.mxu0 0.0
    %633 = vmatpush1.xpose.msra.mxu0 0.0
    %634 = vmatprep.subr.mxu0 0.0
    %635 = vmatpush1.xpose.msra.mxu0 0.0
    %636 = vmatprep.subr.mxu0 0.0
    %637 = vmatpush1.xpose.msra.mxu0 0.0
    %638 = vmatprep.subr.mxu0 0.0
    %639 = vmatpush1.xpose.msra.mxu0 0.0
    %640 = vmatprep.subr.mxu0 0.0
    %641 = vmatpush1.xpose.msra.mxu0 0.0
    %642 = vmatprep.subr.mxu0 0.0
    %643 = vmatpush1.xpose.msra.mxu0 0.0
    %644 = vmatprep.subr.mxu0 0.0
    %645 = vmatpush1.xpose.msra.mxu0 0.0
    %646 = vmatprep.subr.mxu0 0.0
    %647 = vmatpush1.xpose.msra.mxu0 0.0
    %648 = vmatprep.subr.mxu0 0.0
    %649 = vmatpush1.xpose.msra.mxu0 0.0
    %650 = vmatprep.mubr.f32.mxu0 0.0
    %651 = vmatmul.mubr.f32.gmra.mrb[0].mxu0 %v582
    %v652 = vpop.f32.mrb[0].mxu0
    %v653 = vadd.f32 0.0, %v652
    %v654 = vpop.f32.mrb[0].mxu0
    %655 = vdwg.mxu0
    %657 = vrot.lane.b32.xlu0 %v176, 64
    %v658 = vpop.permute.xlu0 %657
    %v659 = vsel %vm196, %v176, 0
    %v661 = vsel %vm196, %v658, 0
    %663 = vmatprep.subr.mxu0 0.0
    %664 = vmatpush1.xpose.msra.mxu0 %v661
    %665 = vmatprep.subr.mxu0 0.0
    %666 = vmatpush1.xpose.msra.mxu0 0.0
    %667 = vmatprep.subr.mxu0 0.0
    %668 = vmatpush1.xpose.msra.mxu0 0.0
    %669 = vmatprep.subr.mxu0 0.0
    %670 = vmatpush1.xpose.msra.mxu0 0.0
    %671 = vmatprep.subr.mxu0 0.0
    %672 = vmatpush1.xpose.msra.mxu0 0.0
    %673 = vmatprep.subr.mxu0 0.0
    %674 = vmatpush1.xpose.msra.mxu0 0.0
    %675 = vmatprep.subr.mxu0 0.0
    %676 = vmatpush1.xpose.msra.mxu0 0.0
    %677 = vmatprep.subr.mxu0 0.0
    %678 = vmatpush1.xpose.msra.mxu0 0.0
    %679 = vmatprep.subr.mxu0 0.0
    %680 = vmatpush1.xpose.msra.mxu0 0.0
    %681 = vmatprep.subr.mxu0 0.0
    %682 = vmatpush1.xpose.msra.mxu0 0.0
    %683 = vmatprep.subr.mxu0 0.0
    %684 = vmatpush1.xpose.msra.mxu0 0.0
    %685 = vmatprep.subr.mxu0 0.0
    %686 = vmatpush1.xpose.msra.mxu0 0.0
    %687 = vmatprep.subr.mxu0 0.0
    %688 = vmatpush1.xpose.msra.mxu0 0.0
    %689 = vmatprep.subr.mxu0 0.0
    %690 = vmatpush1.xpose.msra.mxu0 0.0
    %691 = vmatprep.subr.mxu0 0.0
    %692 = vmatpush1.xpose.msra.mxu0 0.0
    %693 = vmatprep.subr.mxu0 0.0
    %694 = vmatpush1.xpose.msra.mxu0 0.0
    %695 = vmatprep.subr.mxu0 0.0
    %696 = vmatpush1.xpose.msra.mxu0 0.0
    %697 = vmatprep.subr.mxu0 0.0
    %698 = vmatpush1.xpose.msra.mxu0 0.0
    %699 = vmatprep.subr.mxu0 0.0
    %700 = vmatpush1.xpose.msra.mxu0 0.0
    %701 = vmatprep.subr.mxu0 0.0
    %702 = vmatpush1.xpose.msra.mxu0 0.0
    %703 = vmatprep.subr.mxu0 0.0
    %704 = vmatpush1.xpose.msra.mxu0 0.0
    %705 = vmatprep.subr.mxu0 0.0
    %706 = vmatpush1.xpose.msra.mxu0 0.0
    %707 = vmatprep.subr.mxu0 0.0
    %708 = vmatpush1.xpose.msra.mxu0 0.0
    %709 = vmatprep.subr.mxu0 0.0
    %710 = vmatpush1.xpose.msra.mxu0 0.0
    %711 = vmatprep.subr.mxu0 0.0
    %712 = vmatpush1.xpose.msra.mxu0 0.0
    %713 = vmatprep.subr.mxu0 0.0
    %714 = vmatpush1.xpose.msra.mxu0 0.0
    %715 = vmatprep.subr.mxu0 0.0
    %716 = vmatpush1.xpose.msra.mxu0 0.0
    %717 = vmatprep.subr.mxu0 0.0
    %718 = vmatpush1.xpose.msra.mxu0 0.0
    %719 = vmatprep.subr.mxu0 0.0
    %720 = vmatpush1.xpose.msra.mxu0 0.0
    %721 = vmatprep.subr.mxu0 0.0
    %722 = vmatpush1.xpose.msra.mxu0 0.0
    %723 = vmatprep.subr.mxu0 0.0
    %724 = vmatpush1.xpose.msra.mxu0 0.0
    %725 = vmatprep.subr.mxu0 0.0
    %726 = vmatpush1.xpose.msra.mxu0 0.0
    %727 = vmatprep.mubr.f32.mxu0 0.0
    %728 = vmatmul.mubr.f32.gmra.mrb[0].mxu0 %v659
    %v729 = vpop.f32.mrb[0].mxu0
    %v730 = vadd.f32 0.0, %v729
    %v731 = vpop.f32.mrb[0].mxu0
    %732 = vdwg.mxu0
    %734 = vrot.lane.b32.xlu0 %v182, 64
    %v735 = vpop.permute.xlu0 %734
    %v736 = vsel %vm196, %v182, 0
    %v738 = vsel %vm196, %v735, 0
    %740 = vmatprep.subr.mxu0 0.0
    %741 = vmatpush1.xpose.msra.mxu0 %v738
    %742 = vmatprep.subr.mxu0 0.0
    %743 = vmatpush1.xpose.msra.mxu0 0.0
    %744 = vmatprep.subr.mxu0 0.0
    %745 = vmatpush1.xpose.msra.mxu0 0.0
    %746 = vmatprep.subr.mxu0 0.0
    %747 = vmatpush1.xpose.msra.mxu0 0.0
    %748 = vmatprep.subr.mxu0 0.0
    %749 = vmatpush1.xpose.msra.mxu0 0.0
    %750 = vmatprep.subr.mxu0 0.0
    %751 = vmatpush1.xpose.msra.mxu0 0.0
    %752 = vmatprep.subr.mxu0 0.0
    %753 = vmatpush1.xpose.msra.mxu0 0.0
    %754 = vmatprep.subr.mxu0 0.0
    %755 = vmatpush1.xpose.msra.mxu0 0.0
    %756 = vmatprep.subr.mxu0 0.0
    %757 = vmatpush1.xpose.msra.mxu0 0.0
    %758 = vmatprep.subr.mxu0 0.0
    %759 = vmatpush1.xpose.msra.mxu0 0.0
    %760 = vmatprep.subr.mxu0 0.0
    %761 = vmatpush1.xpose.msra.mxu0 0.0
    %762 = vmatprep.subr.mxu0 0.0
    %763 = vmatpush1.xpose.msra.mxu0 0.0
    %764 = vmatprep.subr.mxu0 0.0
    %765 = vmatpush1.xpose.msra.mxu0 0.0
    %766 = vmatprep.subr.mxu0 0.0
    %767 = vmatpush1.xpose.msra.mxu0 0.0
    %768 = vmatprep.subr.mxu0 0.0
    %769 = vmatpush1.xpose.msra.mxu0 0.0
    %770 = vmatprep.subr.mxu0 0.0
    %771 = vmatpush1.xpose.msra.mxu0 0.0
    %772 = vmatprep.subr.mxu0 0.0
    %773 = vmatpush1.xpose.msra.mxu0 0.0
    %774 = vmatprep.subr.mxu0 0.0
    %775 = vmatpush1.xpose.msra.mxu0 0.0
    %776 = vmatprep.subr.mxu0 0.0
    %777 = vmatpush1.xpose.msra.mxu0 0.0
    %778 = vmatprep.subr.mxu0 0.0
    %779 = vmatpush1.xpose.msra.mxu0 0.0
    %780 = vmatprep.subr.mxu0 0.0
    %781 = vmatpush1.xpose.msra.mxu0 0.0
    %782 = vmatprep.subr.mxu0 0.0
    %783 = vmatpush1.xpose.msra.mxu0 0.0
    %784 = vmatprep.subr.mxu0 0.0
    %785 = vmatpush1.xpose.msra.mxu0 0.0
    %786 = vmatprep.subr.mxu0 0.0
    %787 = vmatpush1.xpose.msra.mxu0 0.0
    %788 = vmatprep.subr.mxu0 0.0
    %789 = vmatpush1.xpose.msra.mxu0 0.0
    %790 = vmatprep.subr.mxu0 0.0
    %791 = vmatpush1.xpose.msra.mxu0 0.0
    %792 = vmatprep.subr.mxu0 0.0
    %793 = vmatpush1.xpose.msra.mxu0 0.0
    %794 = vmatprep.subr.mxu0 0.0
    %795 = vmatpush1.xpose.msra.mxu0 0.0
    %796 = vmatprep.subr.mxu0 0.0
    %797 = vmatpush1.xpose.msra.mxu0 0.0
    %798 = vmatprep.subr.mxu0 0.0
    %799 = vmatpush1.xpose.msra.mxu0 0.0
    %800 = vmatprep.subr.mxu0 0.0
    %801 = vmatpush1.xpose.msra.mxu0 0.0
    %802 = vmatprep.subr.mxu0 0.0
    %803 = vmatpush1.xpose.msra.mxu0 0.0
    %804 = vmatprep.mubr.f32.mxu0 0.0
    %805 = vmatmul.mubr.f32.gmra.mrb[0].mxu0 %v736
    %v806 = vpop.f32.mrb[0].mxu0
    %v807 = vadd.f32 0.0, %v806
    %v808 = vpop.f32.mrb[0].mxu0
    %809 = vdwg.mxu0
    %v810 = vmul.f32 %v268, 0.25
    %v811 = vmul.f32 %v345, 0.25
    %v812 = vmul.f32 %v422, 0.25
    %v813 = vmul.f32 %v499, 0.25
    %v814 = vmul.f32 %v576, 0.25
    %v815 = vmul.f32 %v653, 0.25
    %v816 = vmul.f32 %v730, 0.25
    %v817 = vmul.f32 %v807, 0.25
    %vm818 = vcmask 64512
    %v819 = vsel %vm818, %v810, -inf
    %820 = vmax.xlane.f32.xlu0 %v819
    %v821 = vpop.xlane.xlu0 %820
    %v822 = vsel %vm818, %v811, -inf
    %823 = vmax.xlane.f32.xlu0 %v822
    %v824 = vpop.xlane.xlu0 %823
    %v825 = vsel %vm818, %v812, -inf
    %826 = vmax.xlane.f32.xlu0 %v825
    %v827 = vpop.xlane.xlu0 %826
    %v828 = vsel %vm818, %v813, -inf
    %829 = vmax.xlane.f32.xlu0 %v828
    %v830 = vpop.xlane.xlu0 %829
    %v831 = vsel %vm818, %v814, -inf
    %832 = vmax.xlane.f32.xlu0 %v831
    %v833 = vpop.xlane.xlu0 %832
    %v834 = vsel %vm818, %v815, -inf
    %835 = vmax.xlane.f32.xlu0 %v834
    %v836 = vpop.xlane.xlu0 %835
    %v837 = vsel %vm818, %v816, -inf
    %838 = vmax.xlane.f32.xlu0 %v837
    %v839 = vpop.xlane.xlu0 %838
    %v840 = vsel %vm818, %v817, -inf
    %841 = vmax.xlane.f32.xlu0 %v840
    %v842 = vpop.xlane.xlu0 %841
    %v843 = vsub.f32 %v810, %v821
    %v844 = vsub.f32 %v811, %v824
    %v845 = vsub.f32 %v812, %v827
    %v846 = vsub.f32 %v813, %v830
    %v847 = vsub.f32 %v814, %v833
    %v848 = vsub.f32 %v815, %v836
    %v849 = vsub.f32 %v816, %v839
    %v850 = vsub.f32 %v817, %v842
    %v851 = vmul.f32 %v843, 1.442695
    %v852 = vpow.pop %v851
    %v853 = vmul.f32 %v844, 1.442695
    %v854 = vpow.pop %v853
    %v855 = vmul.f32 %v845, 1.442695
    %v856 = vpow.pop %v855
    %v857 = vmul.f32 %v846, 1.442695
    %v858 = vpow.pop %v857
    %v859 = vmul.f32 %v847, 1.442695
    %v860 = vpow.pop %v859
    %v861 = vmul.f32 %v848, 1.442695
    %v862 = vpow.pop %v861
    %v863 = vmul.f32 %v849, 1.442695
    %v864 = vpow.pop %v863
    %v865 = vmul.f32 %v850, 1.442695
    %v866 = vpow.pop %v865
    %v867 = vsel %vm818, %v852, 0.0
    %868 = vadd.xlane.f32.xlu0 %v867
    %v869 = vpop.xlane.xlu0 %868
    %v870 = vsel %vm818, %v854, 0.0
    %871 = vadd.xlane.f32.xlu0 %v870
    %v872 = vpop.xlane.xlu0 %871
    %v873 = vsel %vm818, %v856, 0.0
    %874 = vadd.xlane.f32.xlu0 %v873
    %v875 = vpop.xlane.xlu0 %874
    %v876 = vsel %vm818, %v858, 0.0
    %877 = vadd.xlane.f32.xlu0 %v876
    %v878 = vpop.xlane.xlu0 %877
    %v879 = vsel %vm818, %v860, 0.0
    %880 = vadd.xlane.f32.xlu0 %v879
    %v881 = vpop.xlane.xlu0 %880
    %v882 = vsel %vm818, %v862, 0.0
    %883 = vadd.xlane.f32.xlu0 %v882
    %v884 = vpop.xlane.xlu0 %883
    %v885 = vsel %vm818, %v864, 0.0
    %886 = vadd.xlane.f32.xlu0 %v885
    %v887 = vpop.xlane.xlu0 %886
    %v888 = vsel %vm818, %v866, 0.0
    %889 = vadd.xlane.f32.xlu0 %v888
    %v890 = vpop.xlane.xlu0 %889
    %v892 = vsel %vm818, %v852, 0
    %894 = vmatprep.subr.mxu0 0.0
    %895 = vmatpush1.msra.mxu0 %v142
    %896 = vmatprep.subr.mxu0 0.0
    %897 = vmatpush1.msra.mxu0 0.0
    %898 = vmatprep.subr.mxu0 0.0
    %899 = vmatpush1.msra.mxu0 0.0
    %900 = vmatprep.subr.mxu0 0.0
    %901 = vmatpush1.msra.mxu0 0.0
    %902 = vmatprep.subr.mxu0 0.0
    %903 = vmatpush1.msra.mxu0 0.0
    %904 = vmatprep.subr.mxu0 0.0
    %905 = vmatpush1.msra.mxu0 0.0
    %906 = vmatprep.subr.mxu0 0.0
    %907 = vmatpush1.msra.mxu0 0.0
    %908 = vmatprep.subr.mxu0 0.0
    %909 = vmatpush1.msra.mxu0 0.0
    %910 = vmatprep.subr.mxu0 0.0
    %911 = vmatpush1.msra.mxu0 0.0
    %912 = vmatprep.subr.mxu0 0.0
    %913 = vmatpush1.msra.mxu0 0.0
    %914 = vmatprep.subr.mxu0 0.0
    %915 = vmatpush1.msra.mxu0 0.0
    %916 = vmatprep.subr.mxu0 0.0
    %917 = vmatpush1.msra.mxu0 0.0
    %918 = vmatprep.subr.mxu0 0.0
    %919 = vmatpush1.msra.mxu0 0.0
    %920 = vmatprep.subr.mxu0 0.0
    %921 = vmatpush1.msra.mxu0 0.0
    %922 = vmatprep.subr.mxu0 0.0
    %923 = vmatpush1.msra.mxu0 0.0
    %924 = vmatprep.subr.mxu0 0.0
    %925 = vmatpush1.msra.mxu0 0.0
    %926 = vmatprep.subr.mxu0 0.0
    %927 = vmatpush1.msra.mxu0 0.0
    %928 = vmatprep.subr.mxu0 0.0
    %929 = vmatpush1.msra.mxu0 0.0
    %930 = vmatprep.subr.mxu0 0.0
    %931 = vmatpush1.msra.mxu0 0.0
    %932 = vmatprep.subr.mxu0 0.0
    %933 = vmatpush1.msra.mxu0 0.0
    %934 = vmatprep.subr.mxu0 0.0
    %935 = vmatpush1.msra.mxu0 0.0
    %936 = vmatprep.subr.mxu0 0.0
    %937 = vmatpush1.msra.mxu0 0.0
    %938 = vmatprep.subr.mxu0 0.0
    %939 = vmatpush1.msra.mxu0 0.0
    %940 = vmatprep.subr.mxu0 0.0
    %941 = vmatpush1.msra.mxu0 0.0
    %942 = vmatprep.subr.mxu0 0.0
    %943 = vmatpush1.msra.mxu0 0.0
    %944 = vmatprep.subr.mxu0 0.0
    %945 = vmatpush1.msra.mxu0 0.0
    %946 = vmatprep.subr.mxu0 0.0
    %947 = vmatpush1.msra.mxu0 0.0
    %948 = vmatprep.subr.mxu0 0.0
    %949 = vmatpush1.msra.mxu0 0.0
    %950 = vmatprep.subr.mxu0 0.0
    %951 = vmatpush1.msra.mxu0 0.0
    %952 = vmatprep.subr.mxu0 0.0
    %953 = vmatpush1.msra.mxu0 0.0
    %954 = vmatprep.subr.mxu0 0.0
    %955 = vmatpush1.msra.mxu0 0.0
    %956 = vmatprep.subr.mxu0 0.0
    %957 = vmatpush1.msra.mxu0 0.0
    %958 = vmatprep.mubr.f32.mxu0 0.0
    %959 = vmatmul.mubr.f32.gmra.mrb[0].mxu0 %v892
    %v960 = vpop.f32.mrb[0].mxu0
    %v961 = vadd.f32 0.0, %v960
    %v962 = vpop.f32.mrb[0].mxu0
    %963 = vdwg.mxu0
    %v965 = vsel %vm818, %v854, 0
    %967 = vmatprep.subr.mxu0 0.0
    %968 = vmatpush1.msra.mxu0 %v148
    %969 = vmatprep.subr.mxu0 0.0
    %970 = vmatpush1.msra.mxu0 0.0
    %971 = vmatprep.subr.mxu0 0.0
    %972 = vmatpush1.msra.mxu0 0.0
    %973 = vmatprep.subr.mxu0 0.0
    %974 = vmatpush1.msra.mxu0 0.0
    %975 = vmatprep.subr.mxu0 0.0
    %976 = vmatpush1.msra.mxu0 0.0
    %977 = vmatprep.subr.mxu0 0.0
    %978 = vmatpush1.msra.mxu0 0.0
    %979 = vmatprep.subr.mxu0 0.0
    %980 = vmatpush1.msra.mxu0 0.0
    %981 = vmatprep.subr.mxu0 0.0
    %982 = vmatpush1.msra.mxu0 0.0
    %983 = vmatprep.subr.mxu0 0.0
    %984 = vmatpush1.msra.mxu0 0.0
    %985 = vmatprep.subr.mxu0 0.0
    %986 = vmatpush1.msra.mxu0 0.0
    %987 = vmatprep.subr.mxu0 0.0
    %988 = vmatpush1.msra.mxu0 0.0
    %989 = vmatprep.subr.mxu0 0.0
    %990 = vmatpush1.msra.mxu0 0.0
    %991 = vmatprep.subr.mxu0 0.0
    %992 = vmatpush1.msra.mxu0 0.0
    %993 = vmatprep.subr.mxu0 0.0
    %994 = vmatpush1.msra.mxu0 0.0
    %995 = vmatprep.subr.mxu0 0.0
    %996 = vmatpush1.msra.mxu0 0.0
    %997 = vmatprep.subr.mxu0 0.0
    %998 = vmatpush1.msra.mxu0 0.0
    %999 = vmatprep.subr.mxu0 0.0
    %1000 = vmatpush1.msra.mxu0 0.0
    %1001 = vmatprep.subr.mxu0 0.0
    %1002 = vmatpush1.msra.mxu0 0.0
    %1003 = vmatprep.subr.mxu0 0.0
    %1004 = vmatpush1.msra.mxu0 0.0
    %1005 = vmatprep.subr.mxu0 0.0
    %1006 = vmatpush1.msra.mxu0 0.0
    %1007 = vmatprep.subr.mxu0 0.0
    %1008 = vmatpush1.msra.mxu0 0.0
    %1009 = vmatprep.subr.mxu0 0.0
    %1010 = vmatpush1.msra.mxu0 0.0
    %1011 = vmatprep.subr.mxu0 0.0
    %1012 = vmatpush1.msra.mxu0 0.0
    %1013 = vmatprep.subr.mxu0 0.0
    %1014 = vmatpush1.msra.mxu0 0.0
    %1015 = vmatprep.subr.mxu0 0.0
    %1016 = vmatpush1.msra.mxu0 0.0
    %1017 = vmatprep.subr.mxu0 0.0
    %1018 = vmatpush1.msra.mxu0 0.0
    %1019 = vmatprep.subr.mxu0 0.0
    %1020 = vmatpush1.msra.mxu0 0.0
    %1021 = vmatprep.subr.mxu0 0.0
    %1022 = vmatpush1.msra.mxu0 0.0
    %1023 = vmatprep.subr.mxu0 0.0
    %1024 = vmatpush1.msra.mxu0 0.0
    %1025 = vmatprep.subr.mxu0 0.0
    %1026 = vmatpush1.msra.mxu0 0.0
    %1027 = vmatprep.subr.mxu0 0.0
    %1028 = vmatpush1.msra.mxu0 0.0
    %1029 = vmatprep.subr.mxu0 0.0
    %1030 = vmatpush1.msra.mxu0 0.0
    %1031 = vmatprep.mubr.f32.mxu0 0.0
    %1032 = vmatmul.mubr.f32.gmra.mrb[0].mxu0 %v965
    %v1033 = vpop.f32.mrb[0].mxu0
    %v1034 = vadd.f32 0.0, %v1033
    %v1035 = vpop.f32.mrb[0].mxu0
    %1036 = vdwg.mxu0
    %v1038 = vsel %vm818, %v856, 0
    %1040 = vmatprep.subr.mxu0 0.0
    %1041 = vmatpush1.msra.mxu0 %v154
    %1042 = vmatprep.subr.mxu0 0.0
    %1043 = vmatpush1.msra.mxu0 0.0
    %1044 = vmatprep.subr.mxu0 0.0
    %1045 = vmatpush1.msra.mxu0 0.0
    %1046 = vmatprep.subr.mxu0 0.0
    %1047 = vmatpush1.msra.mxu0 0.0
    %1048 = vmatprep.subr.mxu0 0.0
    %1049 = vmatpush1.msra.mxu0 0.0
    %1050 = vmatprep.subr.mxu0 0.0
    %1051 = vmatpush1.msra.mxu0 0.0
    %1052 = vmatprep.subr.mxu0 0.0
    %1053 = vmatpush1.msra.mxu0 0.0
    %1054 = vmatprep.subr.mxu0 0.0
    %1055 = vmatpush1.msra.mxu0 0.0
    %1056 = vmatprep.subr.mxu0 0.0
    %1057 = vmatpush1.msra.mxu0 0.0
    %1058 = vmatprep.subr.mxu0 0.0
    %1059 = vmatpush1.msra.mxu0 0.0
    %1060 = vmatprep.subr.mxu0 0.0
    %1061 = vmatpush1.msra.mxu0 0.0
    %1062 = vmatprep.subr.mxu0 0.0
    %1063 = vmatpush1.msra.mxu0 0.0
    %1064 = vmatprep.subr.mxu0 0.0
    %1065 = vmatpush1.msra.mxu0 0.0
    %1066 = vmatprep.subr.mxu0 0.0
    %1067 = vmatpush1.msra.mxu0 0.0
    %1068 = vmatprep.subr.mxu0 0.0
    %1069 = vmatpush1.msra.mxu0 0.0
    %1070 = vmatprep.subr.mxu0 0.0
    %1071 = vmatpush1.msra.mxu0 0.0
    %1072 = vmatprep.subr.mxu0 0.0
    %1073 = vmatpush1.msra.mxu0 0.0
    %1074 = vmatprep.subr.mxu0 0.0
    %1075 = vmatpush1.msra.mxu0 0.0
    %1076 = vmatprep.subr.mxu0 0.0
    %1077 = vmatpush1.msra.mxu0 0.0
    %1078 = vmatprep.subr.mxu0 0.0
    %1079 = vmatpush1.msra.mxu0 0.0
    %1080 = vmatprep.subr.mxu0 0.0
    %1081 = vmatpush1.msra.mxu0 0.0
    %1082 = vmatprep.subr.mxu0 0.0
    %1083 = vmatpush1.msra.mxu0 0.0
    %1084 = vmatprep.subr.mxu0 0.0
    %1085 = vmatpush1.msra.mxu0 0.0
    %1086 = vmatprep.subr.mxu0 0.0
    %1087 = vmatpush1.msra.mxu0 0.0
    %1088 = vmatprep.subr.mxu0 0.0
    %1089 = vmatpush1.msra.mxu0 0.0
    %1090 = vmatprep.subr.mxu0 0.0
    %1091 = vmatpush1.msra.mxu0 0.0
    %1092 = vmatprep.subr.mxu0 0.0
    %1093 = vmatpush1.msra.mxu0 0.0
    %1094 = vmatprep.subr.mxu0 0.0
    %1095 = vmatpush1.msra.mxu0 0.0
    %1096 = vmatprep.subr.mxu0 0.0
    %1097 = vmatpush1.msra.mxu0 0.0
    %1098 = vmatprep.subr.mxu0 0.0
    %1099 = vmatpush1.msra.mxu0 0.0
    %1100 = vmatprep.subr.mxu0 0.0
    %1101 = vmatpush1.msra.mxu0 0.0
    %1102 = vmatprep.subr.mxu0 0.0
    %1103 = vmatpush1.msra.mxu0 0.0
    %1104 = vmatprep.mubr.f32.mxu0 0.0
    %1105 = vmatmul.mubr.f32.gmra.mrb[0].mxu0 %v1038
    %v1106 = vpop.f32.mrb[0].mxu0
    %v1107 = vadd.f32 0.0, %v1106
    %v1108 = vpop.f32.mrb[0].mxu0
    %1109 = vdwg.mxu0
    %v1111 = vsel %vm818, %v858, 0
    %1113 = vmatprep.subr.mxu0 0.0
    %1114 = vmatpush1.msra.mxu0 %v160
    %1115 = vmatprep.subr.mxu0 0.0
    %1116 = vmatpush1.msra.mxu0 0.0
    %1117 = vmatprep.subr.mxu0 0.0
    %1118 = vmatpush1.msra.mxu0 0.0
    %1119 = vmatprep.subr.mxu0 0.0
    %1120 = vmatpush1.msra.mxu0 0.0
    %1121 = vmatprep.subr.mxu0 0.0
    %1122 = vmatpush1.msra.mxu0 0.0
    %1123 = vmatprep.subr.mxu0 0.0
    %1124 = vmatpush1.msra.mxu0 0.0
    %1125 = vmatprep.subr.mxu0 0.0
    %1126 = vmatpush1.msra.mxu0 0.0
    %1127 = vmatprep.subr.mxu0 0.0
    %1128 = vmatpush1.msra.mxu0 0.0
    %1129 = vmatprep.subr.mxu0 0.0
    %1130 = vmatpush1.msra.mxu0 0.0
    %1131 = vmatprep.subr.mxu0 0.0
    %1132 = vmatpush1.msra.mxu0 0.0
    %1133 = vmatprep.subr.mxu0 0.0
    %1134 = vmatpush1.msra.mxu0 0.0
    %1135 = vmatprep.subr.mxu0 0.0
    %1136 = vmatpush1.msra.mxu0 0.0
    %1137 = vmatprep.subr.mxu0 0.0
    %1138 = vmatpush1.msra.mxu0 0.0
    %1139 = vmatprep.subr.mxu0 0.0
    %1140 = vmatpush1.msra.mxu0 0.0
    %1141 = vmatprep.subr.mxu0 0.0
    %1142 = vmatpush1.msra.mxu0 0.0
    %1143 = vmatprep.subr.mxu0 0.0
    %1144 = vmatpush1.msra.mxu0 0.0
    %1145 = vmatprep.subr.mxu0 0.0
    %1146 = vmatpush1.msra.mxu0 0.0
    %1147 = vmatprep.subr.mxu0 0.0
    %1148 = vmatpush1.msra.mxu0 0.0
    %1149 = vmatprep.subr.mxu0 0.0
    %1150 = vmatpush1.msra.mxu0 0.0
    %1151 = vmatprep.subr.mxu0 0.0
    %1152 = vmatpush1.msra.mxu0 0.0
    %1153 = vmatprep.subr.mxu0 0.0
    %1154 = vmatpush1.msra.mxu0 0.0
    %1155 = vmatprep.subr.mxu0 0.0
    %1156 = vmatpush1.msra.mxu0 0.0
    %1157 = vmatprep.subr.mxu0 0.0
    %1158 = vmatpush1.msra.mxu0 0.0
    %1159 = vmatprep.subr.mxu0 0.0
    %1160 = vmatpush1.msra.mxu0 0.0
    %1161 = vmatprep.subr.mxu0 0.0
    %1162 = vmatpush1.msra.mxu0 0.0
    %1163 = vmatprep.subr.mxu0 0.0
    %1164 = vmatpush1.msra.mxu0 0.0
    %1165 = vmatprep.subr.mxu0 0.0
    %1166 = vmatpush1.msra.mxu0 0.0
    %1167 = vmatprep.subr.mxu0 0.0
    %1168 = vmatpush1.msra.mxu0 0.0
    %1169 = vmatprep.subr.mxu0 0.0
    %1170 = vmatpush1.msra.mxu0 0.0
    %1171 = vmatprep.subr.mxu0 0.0
    %1172 = vmatpush1.msra.mxu0 0.0
    %1173 = vmatprep.subr.mxu0 0.0
    %1174 = vmatpush1.msra.mxu0 0.0
    %1175 = vmatprep.subr.mxu0 0.0
    %1176 = vmatpush1.msra.mxu0 0.0
    %1177 = vmatprep.mubr.f32.mxu0 0.0
    %1178 = vmatmul.mubr.f32.gmra.mrb[0].mxu0 %v1111
    %v1179 = vpop.f32.mrb[0].mxu0
    %v1180 = vadd.f32 0.0, %v1179
    %v1181 = vpop.f32.mrb[0].mxu0
    %1182 = vdwg.mxu0
    %v1184 = vsel %vm818, %v860, 0
    %1186 = vmatprep.subr.mxu0 0.0
    %1187 = vmatpush1.msra.mxu0 %v166
    %1188 = vmatprep.subr.mxu0 0.0
    %1189 = vmatpush1.msra.mxu0 0.0
    %1190 = vmatprep.subr.mxu0 0.0
    %1191 = vmatpush1.msra.mxu0 0.0
    %1192 = vmatprep.subr.mxu0 0.0
    %1193 = vmatpush1.msra.mxu0 0.0
    %1194 = vmatprep.subr.mxu0 0.0
    %1195 = vmatpush1.msra.mxu0 0.0
    %1196 = vmatprep.subr.mxu0 0.0
    %1197 = vmatpush1.msra.mxu0 0.0
    %1198 = vmatprep.subr.mxu0 0.0
    %1199 = vmatpush1.msra.mxu0 0.0
    %1200 = vmatprep.subr.mxu0 0.0
    %1201 = vmatpush1.msra.mxu0 0.0
    %1202 = vmatprep.subr.mxu0 0.0
    %1203 = vmatpush1.msra.mxu0 0.0
    %1204 = vmatprep.subr.mxu0 0.0
    %1205 = vmatpush1.msra.mxu0 0.0
    %1206 = vmatprep.subr.mxu0 0.0
    %1207 = vmatpush1.msra.mxu0 0.0
    %1208 = vmatprep.subr.mxu0 0.0
    %1209 = vmatpush1.msra.mxu0 0.0
    %1210 = vmatprep.subr.mxu0 0.0
    %1211 = vmatpush1.msra.mxu0 0.0
    %1212 = vmatprep.subr.mxu0 0.0
    %1213 = vmatpush1.msra.mxu0 0.0
    %1214 = vmatprep.subr.mxu0 0.0
    %1215 = vmatpush1.msra.mxu0 0.0
    %1216 = vmatprep.subr.mxu0 0.0
    %1217 = vmatpush1.msra.mxu0 0.0
    %1218 = vmatprep.subr.mxu0 0.0
    %1219 = vmatpush1.msra.mxu0 0.0
    %1220 = vmatprep.subr.mxu0 0.0
    %1221 = vmatpush1.msra.mxu0 0.0
    %1222 = vmatprep.subr.mxu0 0.0
    %1223 = vmatpush1.msra.mxu0 0.0
    %1224 = vmatprep.subr.mxu0 0.0
    %1225 = vmatpush1.msra.mxu0 0.0
    %1226 = vmatprep.subr.mxu0 0.0
    %1227 = vmatpush1.msra.mxu0 0.0
    %1228 = vmatprep.subr.mxu0 0.0
    %1229 = vmatpush1.msra.mxu0 0.0
    %1230 = vmatprep.subr.mxu0 0.0
    %1231 = vmatpush1.msra.mxu0 0.0
    %1232 = vmatprep.subr.mxu0 0.0
    %1233 = vmatpush1.msra.mxu0 0.0
    %1234 = vmatprep.subr.mxu0 0.0
    %1235 = vmatpush1.msra.mxu0 0.0
    %1236 = vmatprep.subr.mxu0 0.0
    %1237 = vmatpush1.msra.mxu0 0.0
    %1238 = vmatprep.subr.mxu0 0.0
    %1239 = vmatpush1.msra.mxu0 0.0
    %1240 = vmatprep.subr.mxu0 0.0
    %1241 = vmatpush1.msra.mxu0 0.0
    %1242 = vmatprep.subr.mxu0 0.0
    %1243 = vmatpush1.msra.mxu0 0.0
    %1244 = vmatprep.subr.mxu0 0.0
    %1245 = vmatpush1.msra.mxu0 0.0
    %1246 = vmatprep.subr.mxu0 0.0
    %1247 = vmatpush1.msra.mxu0 0.0
    %1248 = vmatprep.subr.mxu0 0.0
    %1249 = vmatpush1.msra.mxu0 0.0
    %1250 = vmatprep.mubr.f32.mxu0 0.0
    %1251 = vmatmul.mubr.f32.gmra.mrb[0].mxu0 %v1184
    %v1252 = vpop.f32.mrb[0].mxu0
    %v1253 = vadd.f32 0.0, %v1252
    %v1254 = vpop.f32.mrb[0].mxu0
    %1255 = vdwg.mxu0
    %v1257 = vsel %vm818, %v862, 0
    %1259 = vmatprep.subr.mxu0 0.0
    %1260 = vmatpush1.msra.mxu0 %v172
    %1261 = vmatprep.subr.mxu0 0.0
    %1262 = vmatpush1.msra.mxu0 0.0
    %1263 = vmatprep.subr.mxu0 0.0
    %1264 = vmatpush1.msra.mxu0 0.0
    %1265 = vmatprep.subr.mxu0 0.0
    %1266 = vmatpush1.msra.mxu0 0.0
    %1267 = vmatprep.subr.mxu0 0.0
    %1268 = vmatpush1.msra.mxu0 0.0
    %1269 = vmatprep.subr.mxu0 0.0
    %1270 = vmatpush1.msra.mxu0 0.0
    %1271 = vmatprep.subr.mxu0 0.0
    %1272 = vmatpush1.msra.mxu0 0.0
    %1273 = vmatprep.subr.mxu0 0.0
    %1274 = vmatpush1.msra.mxu0 0.0
    %1275 = vmatprep.subr.mxu0 0.0
    %1276 = vmatpush1.msra.mxu0 0.0
    %1277 = vmatprep.subr.mxu0 0.0
    %1278 = vmatpush1.msra.mxu0 0.0
    %1279 = vmatprep.subr.mxu0 0.0
    %1280 = vmatpush1.msra.mxu0 0.0
    %1281 = vmatprep.subr.mxu0 0.0
    %1282 = vmatpush1.msra.mxu0 0.0
    %1283 = vmatprep.subr.mxu0 0.0
    %1284 = vmatpush1.msra.mxu0 0.0
    %1285 = vmatprep.subr.mxu0 0.0
    %1286 = vmatpush1.msra.mxu0 0.0
    %1287 = vmatprep.subr.mxu0 0.0
    %1288 = vmatpush1.msra.mxu0 0.0
    %1289 = vmatprep.subr.mxu0 0.0
    %1290 = vmatpush1.msra.mxu0 0.0
    %1291 = vmatprep.subr.mxu0 0.0
    %1292 = vmatpush1.msra.mxu0 0.0
    %1293 = vmatprep.subr.mxu0 0.0
    %1294 = vmatpush1.msra.mxu0 0.0
    %1295 = vmatprep.subr.mxu0 0.0
    %1296 = vmatpush1.msra.mxu0 0.0
    %1297 = vmatprep.subr.mxu0 0.0
    %1298 = vmatpush1.msra.mxu0 0.0
    %1299 = vmatprep.subr.mxu0 0.0
    %1300 = vmatpush1.msra.mxu0 0.0
    %1301 = vmatprep.subr.mxu0 0.0
    %1302 = vmatpush1.msra.mxu0 0.0
    %1303 = vmatprep.subr.mxu0 0.0
    %1304 = vmatpush1.msra.mxu0 0.0
    %1305 = vmatprep.subr.mxu0 0.0
    %1306 = vmatpush1.msra.mxu0 0.0
    %1307 = vmatprep.subr.mxu0 0.0
    %1308 = vmatpush1.msra.mxu0 0.0
    %1309 = vmatprep.subr.mxu0 0.0
    %1310 = vmatpush1.msra.mxu0 0.0
    %1311 = vmatprep.subr.mxu0 0.0
    %1312 = vmatpush1.msra.mxu0 0.0
    %1313 = vmatprep.subr.mxu0 0.0
    %1314 = vmatpush1.msra.mxu0 0.0
    %1315 = vmatprep.subr.mxu0 0.0
    %1316 = vmatpush1.msra.mxu0 0.0
    %1317 = vmatprep.subr.mxu0 0.0
    %1318 = vmatpush1.msra.mxu0 0.0
    %1319 = vmatprep.subr.mxu0 0.0
    %1320 = vmatpush1.msra.mxu0 0.0
    %1321 = vmatprep.subr.mxu0 0.0
    %1322 = vmatpush1.msra.mxu0 0.0
    %1323 = vmatprep.mubr.f32.mxu0 0.0
    %1324 = vmatmul.mubr.f32.gmra.mrb[0].mxu0 %v1257
    %v1325 = vpop.f32.mrb[0].mxu0
    %v1326 = vadd.f32 0.0, %v1325
    %v1327 = vpop.f32.mrb[0].mxu0
    %1328 = vdwg.mxu0
    %v1330 = vsel %vm818, %v864, 0
    %1332 = vmatprep.subr.mxu0 0.0
    %1333 = vmatpush1.msra.mxu0 %v178
    %1334 = vmatprep.subr.mxu0 0.0
    %1335 = vmatpush1.msra.mxu0 0.0
    %1336 = vmatprep.subr.mxu0 0.0
    %1337 = vmatpush1.msra.mxu0 0.0
    %1338 = vmatprep.subr.mxu0 0.0
    %1339 = vmatpush1.msra.mxu0 0.0
    %1340 = vmatprep.subr.mxu0 0.0
    %1341 = vmatpush1.msra.mxu0 0.0
    %1342 = vmatprep.subr.mxu0 0.0
    %1343 = vmatpush1.msra.mxu0 0.0
    %1344 = vmatprep.subr.mxu0 0.0
    %1345 = vmatpush1.msra.mxu0 0.0
    %1346 = vmatprep.subr.mxu0 0.0
    %1347 = vmatpush1.msra.mxu0 0.0
    %1348 = vmatprep.subr.mxu0 0.0
    %1349 = vmatpush1.msra.mxu0 0.0
    %1350 = vmatprep.subr.mxu0 0.0
    %1351 = vmatpush1.msra.mxu0 0.0
    %1352 = vmatprep.subr.mxu0 0.0
    %1353 = vmatpush1.msra.mxu0 0.0
    %1354 = vmatprep.subr.mxu0 0.0
    %1355 = vmatpush1.msra.mxu0 0.0
    %1356 = vmatprep.subr.mxu0 0.0
    %1357 = vmatpush1.msra.mxu0 0.0
    %1358 = vmatprep.subr.mxu0 0.0
    %1359 = vmatpush1.msra.mxu0 0.0
    %1360 = vmatprep.subr.mxu0 0.0
    %1361 = vmatpush1.msra.mxu0 0.0
    %1362 = vmatprep.subr.mxu0 0.0
    %1363 = vmatpush1.msra.mxu0 0.0
    %1364 = vmatprep.subr.mxu0 0.0
    %1365 = vmatpush1.msra.mxu0 0.0
    %1366 = vmatprep.subr.mxu0 0.0
    %1367 = vmatpush1.msra.mxu0 0.0
    %1368 = vmatprep.subr.mxu0 0.0
    %1369 = vmatpush1.msra.mxu0 0.0
    %1370 = vmatprep.subr.mxu0 0.0
    %1371 = vmatpush1.msra.mxu0 0.0
    %1372 = vmatprep.subr.mxu0 0.0
    %1373 = vmatpush1.msra.mxu0 0.0
    %1374 = vmatprep.subr.mxu0 0.0
    %1375 = vmatpush1.msra.mxu0 0.0
    %1376 = vmatprep.subr.mxu0 0.0
    %1377 = vmatpush1.msra.mxu0 0.0
    %1378 = vmatprep.subr.mxu0 0.0
    %1379 = vmatpush1.msra.mxu0 0.0
    %1380 = vmatprep.subr.mxu0 0.0
    %1381 = vmatpush1.msra.mxu0 0.0
    %1382 = vmatprep.subr.mxu0 0.0
    %1383 = vmatpush1.msra.mxu0 0.0
    %1384 = vmatprep.subr.mxu0 0.0
    %1385 = vmatpush1.msra.mxu0 0.0
    %1386 = vmatprep.subr.mxu0 0.0
    %1387 = vmatpush1.msra.mxu0 0.0
    %1388 = vmatprep.subr.mxu0 0.0
    %1389 = vmatpush1.msra.mxu0 0.0
    %1390 = vmatprep.subr.mxu0 0.0
    %1391 = vmatpush1.msra.mxu0 0.0
    %1392 = vmatprep.subr.mxu0 0.0
    %1393 = vmatpush1.msra.mxu0 0.0
    %1394 = vmatprep.subr.mxu0 0.0
    %1395 = vmatpush1.msra.mxu0 0.0
    %1396 = vmatprep.mubr.f32.mxu0 0.0
    %1397 = vmatmul.mubr.f32.gmra.mrb[0].mxu0 %v1330
    %v1398 = vpop.f32.mrb[0].mxu0
    %v1399 = vadd.f32 0.0, %v1398
    %v1400 = vpop.f32.mrb[0].mxu0
    %1401 = vdwg.mxu0
    %v1403 = vsel %vm818, %v866, 0
    %1405 = vmatprep.subr.mxu0 0.0
    %1406 = vmatpush1.msra.mxu0 %v184
    %1407 = vmatprep.subr.mxu0 0.0
    %1408 = vmatpush1.msra.mxu0 0.0
    %1409 = vmatprep.subr.mxu0 0.0
    %1410 = vmatpush1.msra.mxu0 0.0
    %1411 = vmatprep.subr.mxu0 0.0
    %1412 = vmatpush1.msra.mxu0 0.0
    %1413 = vmatprep.subr.mxu0 0.0
    %1414 = vmatpush1.msra.mxu0 0.0
    %1415 = vmatprep.subr.mxu0 0.0
    %1416 = vmatpush1.msra.mxu0 0.0
    %1417 = vmatprep.subr.mxu0 0.0
    %1418 = vmatpush1.msra.mxu0 0.0
    %1419 = vmatprep.subr.mxu0 0.0
    %1420 = vmatpush1.msra.mxu0 0.0
    %1421 = vmatprep.subr.mxu0 0.0
    %1422 = vmatpush1.msra.mxu0 0.0
    %1423 = vmatprep.subr.mxu0 0.0
    %1424 = vmatpush1.msra.mxu0 0.0
    %1425 = vmatprep.subr.mxu0 0.0
    %1426 = vmatpush1.msra.mxu0 0.0
    %1427 = vmatprep.subr.mxu0 0.0
    %1428 = vmatpush1.msra.mxu0 0.0
    %1429 = vmatprep.subr.mxu0 0.0
    %1430 = vmatpush1.msra.mxu0 0.0
    %1431 = vmatprep.subr.mxu0 0.0
    %1432 = vmatpush1.msra.mxu0 0.0
    %1433 = vmatprep.subr.mxu0 0.0
    %1434 = vmatpush1.msra.mxu0 0.0
    %1435 = vmatprep.subr.mxu0 0.0
    %1436 = vmatpush1.msra.mxu0 0.0
    %1437 = vmatprep.subr.mxu0 0.0
    %1438 = vmatpush1.msra.mxu0 0.0
    %1439 = vmatprep.subr.mxu0 0.0
    %1440 = vmatpush1.msra.mxu0 0.0
    %1441 = vmatprep.subr.mxu0 0.0
    %1442 = vmatpush1.msra.mxu0 0.0
    %1443 = vmatprep.subr.mxu0 0.0
    %1444 = vmatpush1.msra.mxu0 0.0
    %1445 = vmatprep.subr.mxu0 0.0
    %1446 = vmatpush1.msra.mxu0 0.0
    %1447 = vmatprep.subr.mxu0 0.0
    %1448 = vmatpush1.msra.mxu0 0.0
    %1449 = vmatprep.subr.mxu0 0.0
    %1450 = vmatpush1.msra.mxu0 0.0
    %1451 = vmatprep.subr.mxu0 0.0
    %1452 = vmatpush1.msra.mxu0 0.0
    %1453 = vmatprep.subr.mxu0 0.0
    %1454 = vmatpush1.msra.mxu0 0.0
    %1455 = vmatprep.subr.mxu0 0.0
    %1456 = vmatpush1.msra.mxu0 0.0
    %1457 = vmatprep.subr.mxu0 0.0
    %1458 = vmatpush1.msra.mxu0 0.0
    %1459 = vmatprep.subr.mxu0 0.0
    %1460 = vmatpush1.msra.mxu0 0.0
    %1461 = vmatprep.subr.mxu0 0.0
    %1462 = vmatpush1.msra.mxu0 0.0
    %1463 = vmatprep.subr.mxu0 0.0
    %1464 = vmatpush1.msra.mxu0 0.0
    %1465 = vmatprep.subr.mxu0 0.0
    %1466 = vmatpush1.msra.mxu0 0.0
    %1467 = vmatprep.subr.mxu0 0.0
    %1468 = vmatpush1.msra.mxu0 0.0
    %1469 = vmatprep.mubr.f32.mxu0 0.0
    %1470 = vmatmul.mubr.f32.gmra.mrb[0].mxu0 %v1403
    %v1471 = vpop.f32.mrb[0].mxu0
    %v1472 = vadd.f32 0.0, %v1471
    %v1473 = vpop.f32.mrb[0].mxu0
    %1474 = vdwg.mxu0
    %v1475 = vrcp.pop %v869
    %v1476 = vmul.f32 1.0, %v1475
    %v1477 = vrcp.pop %v872
    %v1478 = vmul.f32 1.0, %v1477
    %v1479 = vrcp.pop %v875
    %v1480 = vmul.f32 1.0, %v1479
    %v1481 = vrcp.pop %v878
    %v1482 = vmul.f32 1.0, %v1481
    %v1483 = vrcp.pop %v881
    %v1484 = vmul.f32 1.0, %v1483
    %v1485 = vrcp.pop %v884
    %v1486 = vmul.f32 1.0, %v1485
    %v1487 = vrcp.pop %v887
    %v1488 = vmul.f32 1.0, %v1487
    %v1489 = vrcp.pop %v890
    %v1490 = vmul.f32 1.0, %v1489
    %v1491 = vmul.f32 %v961, %v1476
    %v1492 = vmul.f32 %v1034, %v1478
    %v1493 = vmul.f32 %v1107, %v1480
    %v1494 = vmul.f32 %v1180, %v1482
    %v1495 = vmul.f32 %v1253, %v1484
    %v1496 = vmul.f32 %v1326, %v1486
    %v1497 = vmul.f32 %v1399, %v1488
    %v1498 = vmul.f32 %v1472, %v1490
    %v1499 = vld [vmem:[%s2] sm:$0xff]
    %v1500 = vld [vmem:[%s2 + $0x8] sm:$0xff]
    %v1502 = vsel %vm196, %v1491, 0
    %v1505 = vsel %vm196, %v1492, 0
    %v1508 = vsel %vm196, %v1493, 0
    %v1511 = vsel %vm196, %v1494, 0
    %v1514 = vsel %vm196, %v1495, 0
    %v1517 = vsel %vm196, %v1496, 0
    %v1520 = vsel %vm196, %v1497, 0
    %v1523 = vsel %vm196, %v1498, 0
    %1525 = vmatprep.subr.mxu0 0.0
    %1526 = vmatpush1.msra.mxu0 %v1499
    %1527 = vmatprep.subr.mxu0 0.0
    %1528 = vmatpush1.msra.mxu0 %v1500
    %1529 = vmatprep.subr.mxu0 0.0
    %1530 = vmatpush1.msra.mxu0 0.0
    %1531 = vmatprep.subr.mxu0 0.0
    %1532 = vmatpush1.msra.mxu0 0.0
    %1533 = vmatprep.subr.mxu0 0.0
    %1534 = vmatpush1.msra.mxu0 0.0
    %1535 = vmatprep.subr.mxu0 0.0
    %1536 = vmatpush1.msra.mxu0 0.0
    %1537 = vmatprep.subr.mxu0 0.0
    %1538 = vmatpush1.msra.mxu0 0.0
    %1539 = vmatprep.subr.mxu0 0.0
    %1540 = vmatpush1.msra.mxu0 0.0
    %1541 = vmatprep.subr.mxu0 0.0
    %1542 = vmatpush1.msra.mxu0 0.0
    %1543 = vmatprep.subr.mxu0 0.0
    %1544 = vmatpush1.msra.mxu0 0.0
    %1545 = vmatprep.subr.mxu0 0.0
    %1546 = vmatpush1.msra.mxu0 0.0
    %1547 = vmatprep.subr.mxu0 0.0
    %1548 = vmatpush1.msra.mxu0 0.0
    %1549 = vmatprep.subr.mxu0 0.0
    %1550 = vmatpush1.msra.mxu0 0.0
    %1551 = vmatprep.subr.mxu0 0.0
    %1552 = vmatpush1.msra.mxu0 0.0
    %1553 = vmatprep.subr.mxu0 0.0
    %1554 = vmatpush1.msra.mxu0 0.0
    %1555 = vmatprep.subr.mxu0 0.0
    %1556 = vmatpush1.msra.mxu0 0.0
    %1557 = vmatprep.subr.mxu0 0.0
    %1558 = vmatpush1.msra.mxu0 0.0
    %1559 = vmatprep.subr.mxu0 0.0
    %1560 = vmatpush1.msra.mxu0 0.0
    %1561 = vmatprep.subr.mxu0 0.0
    %1562 = vmatpush1.msra.mxu0 0.0
    %1563 = vmatprep.subr.mxu0 0.0
    %1564 = vmatpush1.msra.mxu0 0.0
    %1565 = vmatprep.subr.mxu0 0.0
    %1566 = vmatpush1.msra.mxu0 0.0
    %1567 = vmatprep.subr.mxu0 0.0
    %1568 = vmatpush1.msra.mxu0 0.0
    %1569 = vmatprep.subr.mxu0 0.0
    %1570 = vmatpush1.msra.mxu0 0.0
    %1571 = vmatprep.subr.mxu0 0.0
    %1572 = vmatpush1.msra.mxu0 0.0
    %1573 = vmatprep.subr.mxu0 0.0
    %1574 = vmatpush1.msra.mxu0 0.0
    %1575 = vmatprep.subr.mxu0 0.0
    %1576 = vmatpush1.msra.mxu0 0.0
    %1577 = vmatprep.subr.mxu0 0.0
    %1578 = vmatpush1.msra.mxu0 0.0
    %1579 = vmatprep.subr.mxu0 0.0
    %1580 = vmatpush1.msra.mxu0 0.0
    %1581 = vmatprep.subr.mxu0 0.0
    %1582 = vmatpush1.msra.mxu0 0.0
    %1583 = vmatprep.subr.mxu0 0.0
    %1584 = vmatpush1.msra.mxu0 0.0
    %1585 = vmatprep.subr.mxu0 0.0
    %1586 = vmatpush1.msra.mxu0 0.0
    %1587 = vmatprep.subr.mxu0 0.0
    %1588 = vmatpush1.msra.mxu0 0.0
    %1589 = vmatprep.mubr.f32.mxu0 0.0
    %1590 = vmatmul.mubr.f32.gmra.mrb[0].mxu0 %v1502
    %v1591 = vpop.f32.mrb[0].mxu0
    %v1592 = vadd.f32 0.0, %v1591
    %v1593 = vpop.f32.mrb[0].mxu0
    %1594 = vmatprep.mubr.f32.mxu0 0.0
    %1595 = vmatmul.mubr.f32.gmra.mrb[0].mxu0 %v1505
    %v1596 = vpop.f32.mrb[0].mxu0
    %v1597 = vadd.f32 0.0, %v1596
    %v1598 = vpop.f32.mrb[0].mxu0
    %1599 = vmatprep.mubr.f32.mxu0 0.0
    %1600 = vmatmul.mubr.f32.gmra.mrb[0].mxu0 %v1508
    %v1601 = vpop.f32.mrb[0].mxu0
    %v1602 = vadd.f32 0.0, %v1601
    %v1603 = vpop.f32.mrb[0].mxu0
    %1604 = vmatprep.mubr.f32.mxu0 0.0
    %1605 = vmatmul.mubr.f32.gmra.mrb[0].mxu0 %v1511
    %v1606 = vpop.f32.mrb[0].mxu0
    %v1607 = vadd.f32 0.0, %v1606
    %v1608 = vpop.f32.mrb[0].mxu0
    %1609 = vmatprep.mubr.f32.mxu0 0.0
    %1610 = vmatmul.mubr.f32.gmra.mrb[0].mxu0 %v1514
    %v1611 = vpop.f32.mrb[0].mxu0
    %v1612 = vadd.f32 0.0, %v1611
    %v1613 = vpop.f32.mrb[0].mxu0
    %1614 = vmatprep.mubr.f32.mxu0 0.0
    %1615 = vmatmul.mubr.f32.gmra.mrb[0].mxu0 %v1517
    %v1616 = vpop.f32.mrb[0].mxu0
    %v1617 = vadd.f32 0.0, %v1616
    %v1618 = vpop.f32.mrb[0].mxu0
    %1619 = vmatprep.mubr.f32.mxu0 0.0
    %1620 = vmatmul.mubr.f32.gmra.mrb[0].mxu0 %v1520
    %v1621 = vpop.f32.mrb[0].mxu0
    %v1622 = vadd.f32 0.0, %v1621
    %v1623 = vpop.f32.mrb[0].mxu0
    %1624 = vmatprep.mubr.f32.mxu0 0.0
    %1625 = vmatmul.mubr.f32.gmra.mrb[0].mxu0 %v1523
    %v1626 = vpop.f32.mrb[0].mxu0
    %v1627 = vadd.f32 0.0, %v1626
    %v1628 = vpop.f32.mrb[0].mxu0
    %1629 = vdwg.mxu0
    %v1630 = vadd.f32 %v191, %v1592
    %v1631 = vadd.f32 %v191, %v1597
    %v1632 = vadd.f32 %v191, %v1602
    %v1633 = vadd.f32 %v191, %v1607
    %v1634 = vadd.f32 %v191, %v1612
    %v1635 = vadd.f32 %v191, %v1617
    %v1636 = vadd.f32 %v191, %v1622
    %v1637 = vadd.f32 %v191, %v1627
    %1638 = vrot.lane.b32.xlu0 %v140, 112
    %v1639 = vpop.permute.xlu0 %1638
    %1640 = vrot.lane.b32.xlu0 %v140, 48
    %v1641 = vpop.permute.xlu0 %1640
    %v1642 = vsel %vm196, %v1639, 0
    %v1644 = vsel %vm196, %v1641, 0
    %1646 = vmatprep.subr.mxu0 0.0
    %1647 = vmatpush1.xpose.msra.mxu0 %v1644
    %1648 = vmatprep.subr.mxu0 0.0
    %1649 = vmatpush1.xpose.msra.mxu0 0.0
    %1650 = vmatprep.subr.mxu0 0.0
    %1651 = vmatpush1.xpose.msra.mxu0 0.0
    %1652 = vmatprep.subr.mxu0 0.0
    %1653 = vmatpush1.xpose.msra.mxu0 0.0
    %1654 = vmatprep.subr.mxu0 0.0
    %1655 = vmatpush1.xpose.msra.mxu0 0.0
    %1656 = vmatprep.subr.mxu0 0.0
    %1657 = vmatpush1.xpose.msra.mxu0 0.0
    %1658 = vmatprep.subr.mxu0 0.0
    %1659 = vmatpush1.xpose.msra.mxu0 0.0
    %1660 = vmatprep.subr.mxu0 0.0
    %1661 = vmatpush1.xpose.msra.mxu0 0.0
    %1662 = vmatprep.subr.mxu0 0.0
    %1663 = vmatpush1.xpose.msra.mxu0 0.0
    %1664 = vmatprep.subr.mxu0 0.0
    %1665 = vmatpush1.xpose.msra.mxu0 0.0
    %1666 = vmatprep.subr.mxu0 0.0
    %1667 = vmatpush1.xpose.msra.mxu0 0.0
    %1668 = vmatprep.subr.mxu0 0.0
    %1669 = vmatpush1.xpose.msra.mxu0 0.0
    %1670 = vmatprep.subr.mxu0 0.0
    %1671 = vmatpush1.xpose.msra.mxu0 0.0
    %1672 = vmatprep.subr.mxu0 0.0
    %1673 = vmatpush1.xpose.msra.mxu0 0.0
    %1674 = vmatprep.subr.mxu0 0.0
    %1675 = vmatpush1.xpose.msra.mxu0 0.0
    %1676 = vmatprep.subr.mxu0 0.0
    %1677 = vmatpush1.xpose.msra.mxu0 0.0
    %1678 = vmatprep.subr.mxu0 0.0
    %1679 = vmatpush1.xpose.msra.mxu0 0.0
    %1680 = vmatprep.subr.mxu0 0.0
    %1681 = vmatpush1.xpose.msra.mxu0 0.0
    %1682 = vmatprep.subr.mxu0 0.0
    %1683 = vmatpush1.xpose.msra.mxu0 0.0
    %1684 = vmatprep.subr.mxu0 0.0
    %1685 = vmatpush1.xpose.msra.mxu0 0.0
    %1686 = vmatprep.subr.mxu0 0.0
    %1687 = vmatpush1.xpose.msra.mxu0 0.0
    %1688 = vmatprep.subr.mxu0 0.0
    %1689 = vmatpush1.xpose.msra.mxu0 0.0
    %1690 = vmatprep.subr.mxu0 0.0
    %1691 = vmatpush1.xpose.msra.mxu0 0.0
    %1692 = vmatprep.subr.mxu0 0.0
    %1693 = vmatpush1.xpose.msra.mxu0 0.0
    %1694 = vmatprep.subr.mxu0 0.0
    %1695 = vmatpush1.xpose.msra.mxu0 0.0
    %1696 = vmatprep.subr.mxu0 0.0
    %1697 = vmatpush1.xpose.msra.mxu0 0.0
    %1698 = vmatprep.subr.mxu0 0.0
    %1699 = vmatpush1.xpose.msra.mxu0 0.0
    %1700 = vmatprep.subr.mxu0 0.0
    %1701 = vmatpush1.xpose.msra.mxu0 0.0
    %1702 = vmatprep.subr.mxu0 0.0
    %1703 = vmatpush1.xpose.msra.mxu0 0.0
    %1704 = vmatprep.subr.mxu0 0.0
    %1705 = vmatpush1.xpose.msra.mxu0 0.0
    %1706 = vmatprep.subr.mxu0 0.0
    %1707 = vmatpush1.xpose.msra.mxu0 0.0
    %1708 = vmatprep.subr.mxu0 0.0
    %1709 = vmatpush1.xpose.msra.mxu0 0.0
    %1710 = vmatprep.mubr.f32.mxu0 0.0
    %1711 = vmatmul.mubr.f32.gmra.mrb[0].mxu0 %v1642
    %v1712 = vpop.f32.mrb[0].mxu0
    %v1713 = vadd.f32 0.0, %v1712
    %v1714 = vpop.f32.mrb[0].mxu0
    %1715 = vdwg.mxu0
    %1716 = vrot.lane.b32.xlu0 %v146, 112
    %v1717 = vpop.permute.xlu0 %1716
    %1718 = vrot.lane.b32.xlu0 %v146, 48
    %v1719 = vpop.permute.xlu0 %1718
    %v1720 = vsel %vm196, %v1717, 0
    %v1722 = vsel %vm196, %v1719, 0
    %1724 = vmatprep.subr.mxu0 0.0
    %1725 = vmatpush1.xpose.msra.mxu0 %v1722
    %1726 = vmatprep.subr.mxu0 0.0
    %1727 = vmatpush1.xpose.msra.mxu0 0.0
    %1728 = vmatprep.subr.mxu0 0.0
    %1729 = vmatpush1.xpose.msra.mxu0 0.0
    %1730 = vmatprep.subr.mxu0 0.0
    %1731 = vmatpush1.xpose.msra.mxu0 0.0
    %1732 = vmatprep.subr.mxu0 0.0
    %1733 = vmatpush1.xpose.msra.mxu0 0.0
    %1734 = vmatprep.subr.mxu0 0.0
    %1735 = vmatpush1.xpose.msra.mxu0 0.0
    %1736 = vmatprep.subr.mxu0 0.0
    %1737 = vmatpush1.xpose.msra.mxu0 0.0
    %1738 = vmatprep.subr.mxu0 0.0
    %1739 = vmatpush1.xpose.msra.mxu0 0.0
    %1740 = vmatprep.subr.mxu0 0.0
    %1741 = vmatpush1.xpose.msra.mxu0 0.0
    %1742 = vmatprep.subr.mxu0 0.0
    %1743 = vmatpush1.xpose.msra.mxu0 0.0
    %1744 = vmatprep.subr.mxu0 0.0
    %1745 = vmatpush1.xpose.msra.mxu0 0.0
    %1746 = vmatprep.subr.mxu0 0.0
    %1747 = vmatpush1.xpose.msra.mxu0 0.0
    %1748 = vmatprep.subr.mxu0 0.0
    %1749 = vmatpush1.xpose.msra.mxu0 0.0
    %1750 = vmatprep.subr.mxu0 0.0
    %1751 = vmatpush1.xpose.msra.mxu0 0.0
    %1752 = vmatprep.subr.mxu0 0.0
    %1753 = vmatpush1.xpose.msra.mxu0 0.0
    %1754 = vmatprep.subr.mxu0 0.0
    %1755 = vmatpush1.xpose.msra.mxu0 0.0
    %1756 = vmatprep.subr.mxu0 0.0
    %1757 = vmatpush1.xpose.msra.mxu0 0.0
    %1758 = vmatprep.subr.mxu0 0.0
    %1759 = vmatpush1.xpose.msra.mxu0 0.0
    %1760 = vmatprep.subr.mxu0 0.0
    %1761 = vmatpush1.xpose.msra.mxu0 0.0
    %1762 = vmatprep.subr.mxu0 0.0
    %1763 = vmatpush1.xpose.msra.mxu0 0.0
    %1764 = vmatprep.subr.mxu0 0.0
    %1765 = vmatpush1.xpose.msra.mxu0 0.0
    %1766 = vmatprep.subr.mxu0 0.0
    %1767 = vmatpush1.xpose.msra.mxu0 0.0
    %1768 = vmatprep.subr.mxu0 0.0
    %1769 = vmatpush1.xpose.msra.mxu0 0.0
    %1770 = vmatprep.subr.mxu0 0.0
    %1771 = vmatpush1.xpose.msra.mxu0 0.0
    %1772 = vmatprep.subr.mxu0 0.0
    %1773 = vmatpush1.xpose.msra.mxu0 0.0
    %1774 = vmatprep.subr.mxu0 0.0
    %1775 = vmatpush1.xpose.msra.mxu0 0.0
    %1776 = vmatprep.subr.mxu0 0.0
    %1777 = vmatpush1.xpose.msra.mxu0 0.0
    %1778 = vmatprep.subr.mxu0 0.0
    %1779 = vmatpush1.xpose.msra.mxu0 0.0
    %1780 = vmatprep.subr.mxu0 0.0
    %1781 = vmatpush1.xpose.msra.mxu0 0.0
    %1782 = vmatprep.subr.mxu0 0.0
    %1783 = vmatpush1.xpose.msra.mxu0 0.0
    %1784 = vmatprep.subr.mxu0 0.0
    %1785 = vmatpush1.xpose.msra.mxu0 0.0
    %1786 = vmatprep.subr.mxu0 0.0
    %1787 = vmatpush1.xpose.msra.mxu0 0.0
    %1788 = vmatprep.mubr.f32.mxu0 0.0
    %1789 = vmatmul.mubr.f32.gmra.mrb[0].mxu0 %v1720
    %v1790 = vpop.f32.mrb[0].mxu0
    %v1791 = vadd.f32 0.0, %v1790
    %v1792 = vpop.f32.mrb[0].mxu0
    %1793 = vdwg.mxu0
    %1794 = vrot.lane.b32.xlu0 %v152, 112
    %v1795 = vpop.permute.xlu0 %1794
    %1796 = vrot.lane.b32.xlu0 %v152, 48
    %v1797 = vpop.permute.xlu0 %1796
    %v1798 = vsel %vm196, %v1795, 0
    %v1800 = vsel %vm196, %v1797, 0
    %1802 = vmatprep.subr.mxu0 0.0
    %1803 = vmatpush1.xpose.msra.mxu0 %v1800
    %1804 = vmatprep.subr.mxu0 0.0
    %1805 = vmatpush1.xpose.msra.mxu0 0.0
    %1806 = vmatprep.subr.mxu0 0.0
    %1807 = vmatpush1.xpose.msra.mxu0 0.0
    %1808 = vmatprep.subr.mxu0 0.0
    %1809 = vmatpush1.xpose.msra.mxu0 0.0
    %1810 = vmatprep.subr.mxu0 0.0
    %1811 = vmatpush1.xpose.msra.mxu0 0.0
    %1812 = vmatprep.subr.mxu0 0.0
    %1813 = vmatpush1.xpose.msra.mxu0 0.0
    %1814 = vmatprep.subr.mxu0 0.0
    %1815 = vmatpush1.xpose.msra.mxu0 0.0
    %1816 = vmatprep.subr.mxu0 0.0
    %1817 = vmatpush1.xpose.msra.mxu0 0.0
    %1818 = vmatprep.subr.mxu0 0.0
    %1819 = vmatpush1.xpose.msra.mxu0 0.0
    %1820 = vmatprep.subr.mxu0 0.0
    %1821 = vmatpush1.xpose.msra.mxu0 0.0
    %1822 = vmatprep.subr.mxu0 0.0
    %1823 = vmatpush1.xpose.msra.mxu0 0.0
    %1824 = vmatprep.subr.mxu0 0.0
    %1825 = vmatpush1.xpose.msra.mxu0 0.0
    %1826 = vmatprep.subr.mxu0 0.0
    %1827 = vmatpush1.xpose.msra.mxu0 0.0
    %1828 = vmatprep.subr.mxu0 0.0
    %1829 = vmatpush1.xpose.msra.mxu0 0.0
    %1830 = vmatprep.subr.mxu0 0.0
    %1831 = vmatpush1.xpose.msra.mxu0 0.0
    %1832 = vmatprep.subr.mxu0 0.0
    %1833 = vmatpush1.xpose.msra.mxu0 0.0
    %1834 = vmatprep.subr.mxu0 0.0
    %1835 = vmatpush1.xpose.msra.mxu0 0.0
    %1836 = vmatprep.subr.mxu0 0.0
    %1837 = vmatpush1.xpose.msra.mxu0 0.0
    %1838 = vmatprep.subr.mxu0 0.0
    %1839 = vmatpush1.xpose.msra.mxu0 0.0
    %1840 = vmatprep.subr.mxu0 0.0
    %1841 = vmatpush1.xpose.msra.mxu0 0.0
    %1842 = vmatprep.subr.mxu0 0.0
    %1843 = vmatpush1.xpose.msra.mxu0 0.0
    %1844 = vmatprep.subr.mxu0 0.0
    %1845 = vmatpush1.xpose.msra.mxu0 0.0
    %1846 = vmatprep.subr.mxu0 0.0
    %1847 = vmatpush1.xpose.msra.mxu0 0.0
    %1848 = vmatprep.subr.mxu0 0.0
    %1849 = vmatpush1.xpose.msra.mxu0 0.0
    %1850 = vmatprep.subr.mxu0 0.0
    %1851 = vmatpush1.xpose.msra.mxu0 0.0
    %1852 = vmatprep.subr.mxu0 0.0
    %1853 = vmatpush1.xpose.msra.mxu0 0.0
    %1854 = vmatprep.subr.mxu0 0.0
    %1855 = vmatpush1.xpose.msra.mxu0 0.0
    %1856 = vmatprep.subr.mxu0 0.0
    %1857 = vmatpush1.xpose.msra.mxu0 0.0
    %1858 = vmatprep.subr.mxu0 0.0
    %1859 = vmatpush1.xpose.msra.mxu0 0.0
    %1860 = vmatprep.subr.mxu0 0.0
    %1861 = vmatpush1.xpose.msra.mxu0 0.0
    %1862 = vmatprep.subr.mxu0 0.0
    %1863 = vmatpush1.xpose.msra.mxu0 0.0
    %1864 = vmatprep.subr.mxu0 0.0
    %1865 = vmatpush1.xpose.msra.mxu0 0.0
    %1866 = vmatprep.mubr.f32.mxu0 0.0
    %1867 = vmatmul.mubr.f32.gmra.mrb[0].mxu0 %v1798
    %v1868 = vpop.f32.mrb[0].mxu0
    %v1869 = vadd.f32 0.0, %v1868
    %v1870 = vpop.f32.mrb[0].mxu0
    %1871 = vdwg.mxu0
    %1872 = vrot.lane.b32.xlu0 %v158, 112
    %v1873 = vpop.permute.xlu0 %1872
    %1874 = vrot.lane.b32.xlu0 %v158, 48
    %v1875 = vpop.permute.xlu0 %1874
    %v1876 = vsel %vm196, %v1873, 0
    %v1878 = vsel %vm196, %v1875, 0
    %1880 = vmatprep.subr.mxu0 0.0
    %1881 = vmatpush1.xpose.msra.mxu0 %v1878
    %1882 = vmatprep.subr.mxu0 0.0
    %1883 = vmatpush1.xpose.msra.mxu0 0.0
    %1884 = vmatprep.subr.mxu0 0.0
    %1885 = vmatpush1.xpose.msra.mxu0 0.0
    %1886 = vmatprep.subr.mxu0 0.0
    %1887 = vmatpush1.xpose.msra.mxu0 0.0
    %1888 = vmatprep.subr.mxu0 0.0
    %1889 = vmatpush1.xpose.msra.mxu0 0.0
    %1890 = vmatprep.subr.mxu0 0.0
    %1891 = vmatpush1.xpose.msra.mxu0 0.0
    %1892 = vmatprep.subr.mxu0 0.0
    %1893 = vmatpush1.xpose.msra.mxu0 0.0
    %1894 = vmatprep.subr.mxu0 0.0
    %1895 = vmatpush1.xpose.msra.mxu0 0.0
    %1896 = vmatprep.subr.mxu0 0.0
    %1897 = vmatpush1.xpose.msra.mxu0 0.0
    %1898 = vmatprep.subr.mxu0 0.0
    %1899 = vmatpush1.xpose.msra.mxu0 0.0
    %1900 = vmatprep.subr.mxu0 0.0
    %1901 = vmatpush1.xpose.msra.mxu0 0.0
    %1902 = vmatprep.subr.mxu0 0.0
    %1903 = vmatpush1.xpose.msra.mxu0 0.0
    %1904 = vmatprep.subr.mxu0 0.0
    %1905 = vmatpush1.xpose.msra.mxu0 0.0
    %1906 = vmatprep.subr.mxu0 0.0
    %1907 = vmatpush1.xpose.msra.mxu0 0.0
    %1908 = vmatprep.subr.mxu0 0.0
    %1909 = vmatpush1.xpose.msra.mxu0 0.0
    %1910 = vmatprep.subr.mxu0 0.0
    %1911 = vmatpush1.xpose.msra.mxu0 0.0
    %1912 = vmatprep.subr.mxu0 0.0
    %1913 = vmatpush1.xpose.msra.mxu0 0.0
    %1914 = vmatprep.subr.mxu0 0.0
    %1915 = vmatpush1.xpose.msra.mxu0 0.0
    %1916 = vmatprep.subr.mxu0 0.0
    %1917 = vmatpush1.xpose.msra.mxu0 0.0
    %1918 = vmatprep.subr.mxu0 0.0
    %1919 = vmatpush1.xpose.msra.mxu0 0.0
    %1920 = vmatprep.subr.mxu0 0.0
    %1921 = vmatpush1.xpose.msra.mxu0 0.0
    %1922 = vmatprep.subr.mxu0 0.0
    %1923 = vmatpush1.xpose.msra.mxu0 0.0
    %1924 = vmatprep.subr.mxu0 0.0
    %1925 = vmatpush1.xpose.msra.mxu0 0.0
    %1926 = vmatprep.subr.mxu0 0.0
    %1927 = vmatpush1.xpose.msra.mxu0 0.0
    %1928 = vmatprep.subr.mxu0 0.0
    %1929 = vmatpush1.xpose.msra.mxu0 0.0
    %1930 = vmatprep.subr.mxu0 0.0
    %1931 = vmatpush1.xpose.msra.mxu0 0.0
    %1932 = vmatprep.subr.mxu0 0.0
    %1933 = vmatpush1.xpose.msra.mxu0 0.0
    %1934 = vmatprep.subr.mxu0 0.0
    %1935 = vmatpush1.xpose.msra.mxu0 0.0
    %1936 = vmatprep.subr.mxu0 0.0
    %1937 = vmatpush1.xpose.msra.mxu0 0.0
    %1938 = vmatprep.subr.mxu0 0.0
    %1939 = vmatpush1.xpose.msra.mxu0 0.0
    %1940 = vmatprep.subr.mxu0 0.0
    %1941 = vmatpush1.xpose.msra.mxu0 0.0
    %1942 = vmatprep.subr.mxu0 0.0
    %1943 = vmatpush1.xpose.msra.mxu0 0.0
    %1944 = vmatprep.mubr.f32.mxu0 0.0
    %1945 = vmatmul.mubr.f32.gmra.mrb[0].mxu0 %v1876
    %v1946 = vpop.f32.mrb[0].mxu0
    %v1947 = vadd.f32 0.0, %v1946
    %v1948 = vpop.f32.mrb[0].mxu0
    %1949 = vdwg.mxu0
    %1950 = vrot.lane.b32.xlu0 %v164, 112
    %v1951 = vpop.permute.xlu0 %1950
    %1952 = vrot.lane.b32.xlu0 %v164, 48
    %v1953 = vpop.permute.xlu0 %1952
    %v1954 = vsel %vm196, %v1951, 0
    %v1956 = vsel %vm196, %v1953, 0
    %1958 = vmatprep.subr.mxu0 0.0
    %1959 = vmatpush1.xpose.msra.mxu0 %v1956
    %1960 = vmatprep.subr.mxu0 0.0
    %1961 = vmatpush1.xpose.msra.mxu0 0.0
    %1962 = vmatprep.subr.mxu0 0.0
    %1963 = vmatpush1.xpose.msra.mxu0 0.0
    %1964 = vmatprep.subr.mxu0 0.0
    %1965 = vmatpush1.xpose.msra.mxu0 0.0
    %1966 = vmatprep.subr.mxu0 0.0
    %1967 = vmatpush1.xpose.msra.mxu0 0.0
    %1968 = vmatprep.subr.mxu0 0.0
    %1969 = vmatpush1.xpose.msra.mxu0 0.0
    %1970 = vmatprep.subr.mxu0 0.0
    %1971 = vmatpush1.xpose.msra.mxu0 0.0
    %1972 = vmatprep.subr.mxu0 0.0
    %1973 = vmatpush1.xpose.msra.mxu0 0.0
    %1974 = vmatprep.subr.mxu0 0.0
    %1975 = vmatpush1.xpose.msra.mxu0 0.0
    %1976 = vmatprep.subr.mxu0 0.0
    %1977 = vmatpush1.xpose.msra.mxu0 0.0
    %1978 = vmatprep.subr.mxu0 0.0
    %1979 = vmatpush1.xpose.msra.mxu0 0.0
    %1980 = vmatprep.subr.mxu0 0.0
    %1981 = vmatpush1.xpose.msra.mxu0 0.0
    %1982 = vmatprep.subr.mxu0 0.0
    %1983 = vmatpush1.xpose.msra.mxu0 0.0
    %1984 = vmatprep.subr.mxu0 0.0
    %1985 = vmatpush1.xpose.msra.mxu0 0.0
    %1986 = vmatprep.subr.mxu0 0.0
    %1987 = vmatpush1.xpose.msra.mxu0 0.0
    %1988 = vmatprep.subr.mxu0 0.0
    %1989 = vmatpush1.xpose.msra.mxu0 0.0
    %1990 = vmatprep.subr.mxu0 0.0
    %1991 = vmatpush1.xpose.msra.mxu0 0.0
    %1992 = vmatprep.subr.mxu0 0.0
    %1993 = vmatpush1.xpose.msra.mxu0 0.0
    %1994 = vmatprep.subr.mxu0 0.0
    %1995 = vmatpush1.xpose.msra.mxu0 0.0
    %1996 = vmatprep.subr.mxu0 0.0
    %1997 = vmatpush1.xpose.msra.mxu0 0.0
    %1998 = vmatprep.subr.mxu0 0.0
    %1999 = vmatpush1.xpose.msra.mxu0 0.0
    %2000 = vmatprep.subr.mxu0 0.0
    %2001 = vmatpush1.xpose.msra.mxu0 0.0
    %2002 = vmatprep.subr.mxu0 0.0
    %2003 = vmatpush1.xpose.msra.mxu0 0.0
    %2004 = vmatprep.subr.mxu0 0.0
    %2005 = vmatpush1.xpose.msra.mxu0 0.0
    %2006 = vmatprep.subr.mxu0 0.0
    %2007 = vmatpush1.xpose.msra.mxu0 0.0
    %2008 = vmatprep.subr.mxu0 0.0
    %2009 = vmatpush1.xpose.msra.mxu0 0.0
    %2010 = vmatprep.subr.mxu0 0.0
    %2011 = vmatpush1.xpose.msra.mxu0 0.0
    %2012 = vmatprep.subr.mxu0 0.0
    %2013 = vmatpush1.xpose.msra.mxu0 0.0
    %2014 = vmatprep.subr.mxu0 0.0
    %2015 = vmatpush1.xpose.msra.mxu0 0.0
    %2016 = vmatprep.subr.mxu0 0.0
    %2017 = vmatpush1.xpose.msra.mxu0 0.0
    %2018 = vmatprep.subr.mxu0 0.0
    %2019 = vmatpush1.xpose.msra.mxu0 0.0
    %2020 = vmatprep.subr.mxu0 0.0
    %2021 = vmatpush1.xpose.msra.mxu0 0.0
    %2022 = vmatprep.mubr.f32.mxu0 0.0
    %2023 = vmatmul.mubr.f32.gmra.mrb[0].mxu0 %v1954
    %v2024 = vpop.f32.mrb[0].mxu0
    %v2025 = vadd.f32 0.0, %v2024
    %v2026 = vpop.f32.mrb[0].mxu0
    %2027 = vdwg.mxu0
    %2028 = vrot.lane.b32.xlu0 %v170, 112
    %v2029 = vpop.permute.xlu0 %2028
    %2030 = vrot.lane.b32.xlu0 %v170, 48
    %v2031 = vpop.permute.xlu0 %2030
    %v2032 = vsel %vm196, %v2029, 0
    %v2034 = vsel %vm196, %v2031, 0
    %2036 = vmatprep.subr.mxu0 0.0
    %2037 = vmatpush1.xpose.msra.mxu0 %v2034
    %2038 = vmatprep.subr.mxu0 0.0
    %2039 = vmatpush1.xpose.msra.mxu0 0.0
    %2040 = vmatprep.subr.mxu0 0.0
    %2041 = vmatpush1.xpose.msra.mxu0 0.0
    %2042 = vmatprep.subr.mxu0 0.0
    %2043 = vmatpush1.xpose.msra.mxu0 0.0
    %2044 = vmatprep.subr.mxu0 0.0
    %2045 = vmatpush1.xpose.msra.mxu0 0.0
    %2046 = vmatprep.subr.mxu0 0.0
    %2047 = vmatpush1.xpose.msra.mxu0 0.0
    %2048 = vmatprep.subr.mxu0 0.0
    %2049 = vmatpush1.xpose.msra.mxu0 0.0
    %2050 = vmatprep.subr.mxu0 0.0
    %2051 = vmatpush1.xpose.msra.mxu0 0.0
    %2052 = vmatprep.subr.mxu0 0.0
    %2053 = vmatpush1.xpose.msra.mxu0 0.0
    %2054 = vmatprep.subr.mxu0 0.0
    %2055 = vmatpush1.xpose.msra.mxu0 0.0
    %2056 = vmatprep.subr.mxu0 0.0
    %2057 = vmatpush1.xpose.msra.mxu0 0.0
    %2058 = vmatprep.subr.mxu0 0.0
    %2059 = vmatpush1.xpose.msra.mxu0 0.0
    %2060 = vmatprep.subr.mxu0 0.0
    %2061 = vmatpush1.xpose.msra.mxu0 0.0
    %2062 = vmatprep.subr.mxu0 0.0
    %2063 = vmatpush1.xpose.msra.mxu0 0.0
    %2064 = vmatprep.subr.mxu0 0.0
    %2065 = vmatpush1.xpose.msra.mxu0 0.0
    %2066 = vmatprep.subr.mxu0 0.0
    %2067 = vmatpush1.xpose.msra.mxu0 0.0
    %2068 = vmatprep.subr.mxu0 0.0
    %2069 = vmatpush1.xpose.msra.mxu0 0.0
    %2070 = vmatprep.subr.mxu0 0.0
    %2071 = vmatpush1.xpose.msra.mxu0 0.0
    %2072 = vmatprep.subr.mxu0 0.0
    %2073 = vmatpush1.xpose.msra.mxu0 0.0
    %2074 = vmatprep.subr.mxu0 0.0
    %2075 = vmatpush1.xpose.msra.mxu0 0.0
    %2076 = vmatprep.subr.mxu0 0.0
    %2077 = vmatpush1.xpose.msra.mxu0 0.0
    %2078 = vmatprep.subr.mxu0 0.0
    %2079 = vmatpush1.xpose.msra.mxu0 0.0
    %2080 = vmatprep.subr.mxu0 0.0
    %2081 = vmatpush1.xpose.msra.mxu0 0.0
    %2082 = vmatprep.subr.mxu0 0.0
    %2083 = vmatpush1.xpose.msra.mxu0 0.0
    %2084 = vmatprep.subr.mxu0 0.0
    %2085 = vmatpush1.xpose.msra.mxu0 0.0
    %2086 = vmatprep.subr.mxu0 0.0
    %2087 = vmatpush1.xpose.msra.mxu0 0.0
    %2088 = vmatprep.subr.mxu0 0.0
    %2089 = vmatpush1.xpose.msra.mxu0 0.0
    %2090 = vmatprep.subr.mxu0 0.0
    %2091 = vmatpush1.xpose.msra.mxu0 0.0
    %2092 = vmatprep.subr.mxu0 0.0
    %2093 = vmatpush1.xpose.msra.mxu0 0.0
    %2094 = vmatprep.subr.mxu0 0.0
    %2095 = vmatpush1.xpose.msra.mxu0 0.0
    %2096 = vmatprep.subr.mxu0 0.0
    %2097 = vmatpush1.xpose.msra.mxu0 0.0
    %2098 = vmatprep.subr.mxu0 0.0
    %2099 = vmatpush1.xpose.msra.mxu0 0.0
    %2100 = vmatprep.mubr.f32.mxu0 0.0
    %2101 = vmatmul.mubr.f32.gmra.mrb[0].mxu0 %v2032
    %v2102 = vpop.f32.mrb[0].mxu0
    %v2103 = vadd.f32 0.0, %v2102
    %v2104 = vpop.f32.mrb[0].mxu0
    %2105 = vdwg.mxu0
    %2106 = vrot.lane.b32.xlu0 %v176, 112
    %v2107 = vpop.permute.xlu0 %2106
    %2108 = vrot.lane.b32.xlu0 %v176, 48
    %v2109 = vpop.permute.xlu0 %2108
    %v2110 = vsel %vm196, %v2107, 0
    %v2112 = vsel %vm196, %v2109, 0
    %2114 = vmatprep.subr.mxu0 0.0
    %2115 = vmatpush1.xpose.msra.mxu0 %v2112
    %2116 = vmatprep.subr.mxu0 0.0
    %2117 = vmatpush1.xpose.msra.mxu0 0.0
    %2118 = vmatprep.subr.mxu0 0.0
    %2119 = vmatpush1.xpose.msra.mxu0 0.0
    %2120 = vmatprep.subr.mxu0 0.0
    %2121 = vmatpush1.xpose.msra.mxu0 0.0
    %2122 = vmatprep.subr.mxu0 0.0
    %2123 = vmatpush1.xpose.msra.mxu0 0.0
    %2124 = vmatprep.subr.mxu0 0.0
    %2125 = vmatpush1.xpose.msra.mxu0 0.0
    %2126 = vmatprep.subr.mxu0 0.0
    %2127 = vmatpush1.xpose.msra.mxu0 0.0
    %2128 = vmatprep.subr.mxu0 0.0
    %2129 = vmatpush1.xpose.msra.mxu0 0.0
    %2130 = vmatprep.subr.mxu0 0.0
    %2131 = vmatpush1.xpose.msra.mxu0 0.0
    %2132 = vmatprep.subr.mxu0 0.0
    %2133 = vmatpush1.xpose.msra.mxu0 0.0
    %2134 = vmatprep.subr.mxu0 0.0
    %2135 = vmatpush1.xpose.msra.mxu0 0.0
    %2136 = vmatprep.subr.mxu0 0.0
    %2137 = vmatpush1.xpose.msra.mxu0 0.0
    %2138 = vmatprep.subr.mxu0 0.0
    %2139 = vmatpush1.xpose.msra.mxu0 0.0
    %2140 = vmatprep.subr.mxu0 0.0
    %2141 = vmatpush1.xpose.msra.mxu0 0.0
    %2142 = vmatprep.subr.mxu0 0.0
    %2143 = vmatpush1.xpose.msra.mxu0 0.0
    %2144 = vmatprep.subr.mxu0 0.0
    %2145 = vmatpush1.xpose.msra.mxu0 0.0
    %2146 = vmatprep.subr.mxu0 0.0
    %2147 = vmatpush1.xpose.msra.mxu0 0.0
    %2148 = vmatprep.subr.mxu0 0.0
    %2149 = vmatpush1.xpose.msra.mxu0 0.0
    %2150 = vmatprep.subr.mxu0 0.0
    %2151 = vmatpush1.xpose.msra.mxu0 0.0
    %2152 = vmatprep.subr.mxu0 0.0
    %2153 = vmatpush1.xpose.msra.mxu0 0.0
    %2154 = vmatprep.subr.mxu0 0.0
    %2155 = vmatpush1.xpose.msra.mxu0 0.0
    %2156 = vmatprep.subr.mxu0 0.0
    %2157 = vmatpush1.xpose.msra.mxu0 0.0
    %2158 = vmatprep.subr.mxu0 0.0
    %2159 = vmatpush1.xpose.msra.mxu0 0.0
    %2160 = vmatprep.subr.mxu0 0.0
    %2161 = vmatpush1.xpose.msra.mxu0 0.0
    %2162 = vmatprep.subr.mxu0 0.0
    %2163 = vmatpush1.xpose.msra.mxu0 0.0
    %2164 = vmatprep.subr.mxu0 0.0
    %2165 = vmatpush1.xpose.msra.mxu0 0.0
    %2166 = vmatprep.subr.mxu0 0.0
    %2167 = vmatpush1.xpose.msra.mxu0 0.0
    %2168 = vmatprep.subr.mxu0 0.0
    %2169 = vmatpush1.xpose.msra.mxu0 0.0
    %2170 = vmatprep.subr.mxu0 0.0
    %2171 = vmatpush1.xpose.msra.mxu0 0.0
    %2172 = vmatprep.subr.mxu0 0.0
    %2173 = vmatpush1.xpose.msra.mxu0 0.0
    %2174 = vmatprep.subr.mxu0 0.0
    %2175 = vmatpush1.xpose.msra.mxu0 0.0
    %2176 = vmatprep.subr.mxu0 0.0
    %2177 = vmatpush1.xpose.msra.mxu0 0.0
    %2178 = vmatprep.mubr.f32.mxu0 0.0
    %2179 = vmatmul.mubr.f32.gmra.mrb[0].mxu0 %v2110
    %v2180 = vpop.f32.mrb[0].mxu0
    %v2181 = vadd.f32 0.0, %v2180
    %v2182 = vpop.f32.mrb[0].mxu0
    %2183 = vdwg.mxu0
    %2184 = vrot.lane.b32.xlu0 %v182, 112
    %v2185 = vpop.permute.xlu0 %2184
    %2186 = vrot.lane.b32.xlu0 %v182, 48
    %v2187 = vpop.permute.xlu0 %2186
    %v2188 = vsel %vm196, %v2185, 0
    %v2190 = vsel %vm196, %v2187, 0
    %2192 = vmatprep.subr.mxu0 0.0
    %2193 = vmatpush1.xpose.msra.mxu0 %v2190
    %2194 = vmatprep.subr.mxu0 0.0
    %2195 = vmatpush1.xpose.msra.mxu0 0.0
    %2196 = vmatprep.subr.mxu0 0.0
    %2197 = vmatpush1.xpose.msra.mxu0 0.0
    %2198 = vmatprep.subr.mxu0 0.0
    %2199 = vmatpush1.xpose.msra.mxu0 0.0
    %2200 = vmatprep.subr.mxu0 0.0
    %2201 = vmatpush1.xpose.msra.mxu0 0.0
    %2202 = vmatprep.subr.mxu0 0.0
    %2203 = vmatpush1.xpose.msra.mxu0 0.0
    %2204 = vmatprep.subr.mxu0 0.0
    %2205 = vmatpush1.xpose.msra.mxu0 0.0
    %2206 = vmatprep.subr.mxu0 0.0
    %2207 = vmatpush1.xpose.msra.mxu0 0.0
    %2208 = vmatprep.subr.mxu0 0.0
    %2209 = vmatpush1.xpose.msra.mxu0 0.0
    %2210 = vmatprep.subr.mxu0 0.0
    %2211 = vmatpush1.xpose.msra.mxu0 0.0
    %2212 = vmatprep.subr.mxu0 0.0
    %2213 = vmatpush1.xpose.msra.mxu0 0.0
    %2214 = vmatprep.subr.mxu0 0.0
    %2215 = vmatpush1.xpose.msra.mxu0 0.0
    %2216 = vmatprep.subr.mxu0 0.0
    %2217 = vmatpush1.xpose.msra.mxu0 0.0
    %2218 = vmatprep.subr.mxu0 0.0
    %2219 = vmatpush1.xpose.msra.mxu0 0.0
    %2220 = vmatprep.subr.mxu0 0.0
    %2221 = vmatpush1.xpose.msra.mxu0 0.0
    %2222 = vmatprep.subr.mxu0 0.0
    %2223 = vmatpush1.xpose.msra.mxu0 0.0
    %2224 = vmatprep.subr.mxu0 0.0
    %2225 = vmatpush1.xpose.msra.mxu0 0.0
    %2226 = vmatprep.subr.mxu0 0.0
    %2227 = vmatpush1.xpose.msra.mxu0 0.0
    %2228 = vmatprep.subr.mxu0 0.0
    %2229 = vmatpush1.xpose.msra.mxu0 0.0
    %2230 = vmatprep.subr.mxu0 0.0
    %2231 = vmatpush1.xpose.msra.mxu0 0.0
    %2232 = vmatprep.subr.mxu0 0.0
    %2233 = vmatpush1.xpose.msra.mxu0 0.0
    %2234 = vmatprep.subr.mxu0 0.0
    %2235 = vmatpush1.xpose.msra.mxu0 0.0
    %2236 = vmatprep.subr.mxu0 0.0
    %2237 = vmatpush1.xpose.msra.mxu0 0.0
    %2238 = vmatprep.subr.mxu0 0.0
    %2239 = vmatpush1.xpose.msra.mxu0 0.0
    %2240 = vmatprep.subr.mxu0 0.0
    %2241 = vmatpush1.xpose.msra.mxu0 0.0
    %2242 = vmatprep.subr.mxu0 0.0
    %2243 = vmatpush1.xpose.msra.mxu0 0.0
    %2244 = vmatprep.subr.mxu0 0.0
    %2245 = vmatpush1.xpose.msra.mxu0 0.0
    %2246 = vmatprep.subr.mxu0 0.0
    %2247 = vmatpush1.xpose.msra.mxu0 0.0
    %2248 = vmatprep.subr.mxu0 0.0
    %2249 = vmatpush1.xpose.msra.mxu0 0.0
    %2250 = vmatprep.subr.mxu0 0.0
    %2251 = vmatpush1.xpose.msra.mxu0 0.0
    %2252 = vmatprep.subr.mxu0 0.0
    %2253 = vmatpush1.xpose.msra.mxu0 0.0
    %2254 = vmatprep.subr.mxu0 0.0
    %2255 = vmatpush1.xpose.msra.mxu0 0.0
    %2256 = vmatprep.mubr.f32.mxu0 0.0
    %2257 = vmatmul.mubr.f32.gmra.mrb[0].mxu0 %v2188
    %v2258 = vpop.f32.mrb[0].mxu0
    %v2259 = vadd.f32 0.0, %v2258
    %v2260 = vpop.f32.mrb[0].mxu0
    %2261 = vdwg.mxu0
    %v2262 = vmul.f32 %v1713, 0.25
    %v2263 = vmul.f32 %v1791, 0.25
    %v2264 = vmul.f32 %v1869, 0.25
    %v2265 = vmul.f32 %v1947, 0.25
    %v2266 = vmul.f32 %v2025, 0.25
    %v2267 = vmul.f32 %v2103, 0.25
    %v2268 = vmul.f32 %v2181, 0.25
    %v2269 = vmul.f32 %v2259, 0.25
    %v2270 = vsel %vm818, %v2262, -inf
    %2271 = vmax.xlane.f32.xlu0 %v2270
    %v2272 = vpop.xlane.xlu0 %2271
    %v2273 = vsel %vm818, %v2263, -inf
    %2274 = vmax.xlane.f32.xlu0 %v2273
    %v2275 = vpop.xlane.xlu0 %2274
    %v2276 = vsel %vm818, %v2264, -inf
    %2277 = vmax.xlane.f32.xlu0 %v2276
    %v2278 = vpop.xlane.xlu0 %2277
    %v2279 = vsel %vm818, %v2265, -inf
    %2280 = vmax.xlane.f32.xlu0 %v2279
    %v2281 = vpop.xlane.xlu0 %2280
    %v2282 = vsel %vm818, %v2266, -inf
    %2283 = vmax.xlane.f32.xlu0 %v2282
    %v2284 = vpop.xlane.xlu0 %2283
    %v2285 = vsel %vm818, %v2267, -inf
    %2286 = vmax.xlane.f32.xlu0 %v2285
    %v2287 = vpop.xlane.xlu0 %2286
    %v2288 = vsel %vm818, %v2268, -inf
    %2289 = vmax.xlane.f32.xlu0 %v2288
    %v2290 = vpop.xlane.xlu0 %2289
    %v2291 = vsel %vm818, %v2269, -inf
    %2292 = vmax.xlane.f32.xlu0 %v2291
    %v2293 = vpop.xlane.xlu0 %2292
    %v2294 = vsub.f32 %v2262, %v2272
    %v2295 = vsub.f32 %v2263, %v2275
    %v2296 = vsub.f32 %v2264, %v2278
    %v2297 = vsub.f32 %v2265, %v2281
    %v2298 = vsub.f32 %v2266, %v2284
    %v2299 = vsub.f32 %v2267, %v2287
    %v2300 = vsub.f32 %v2268, %v2290
    %v2301 = vsub.f32 %v2269, %v2293
    %v2302 = vmul.f32 %v2294, 1.442695
    %v2303 = vpow.pop %v2302
    %v2304 = vmul.f32 %v2295, 1.442695
    %v2305 = vpow.pop %v2304
    %v2306 = vmul.f32 %v2296, 1.442695
    %v2307 = vpow.pop %v2306
    %v2308 = vmul.f32 %v2297, 1.442695
    %v2309 = vpow.pop %v2308
    %v2310 = vmul.f32 %v2298, 1.442695
    %v2311 = vpow.pop %v2310
    %v2312 = vmul.f32 %v2299, 1.442695
    %v2313 = vpow.pop %v2312
    %v2314 = vmul.f32 %v2300, 1.442695
    %v2315 = vpow.pop %v2314
    %v2316 = vmul.f32 %v2301, 1.442695
    %v2317 = vpow.pop %v2316
    %v2318 = vsel %vm818, %v2303, 0.0
    %2319 = vadd.xlane.f32.xlu0 %v2318
    %v2320 = vpop.xlane.xlu0 %2319
    %v2321 = vsel %vm818, %v2305, 0.0
    %2322 = vadd.xlane.f32.xlu0 %v2321
    %v2323 = vpop.xlane.xlu0 %2322
    %v2324 = vsel %vm818, %v2307, 0.0
    %2325 = vadd.xlane.f32.xlu0 %v2324
    %v2326 = vpop.xlane.xlu0 %2325
    %v2327 = vsel %vm818, %v2309, 0.0
    %2328 = vadd.xlane.f32.xlu0 %v2327
    %v2329 = vpop.xlane.xlu0 %2328
    %v2330 = vsel %vm818, %v2311, 0.0
    %2331 = vadd.xlane.f32.xlu0 %v2330
    %v2332 = vpop.xlane.xlu0 %2331
    %v2333 = vsel %vm818, %v2313, 0.0
    %2334 = vadd.xlane.f32.xlu0 %v2333
    %v2335 = vpop.xlane.xlu0 %2334
    %v2336 = vsel %vm818, %v2315, 0.0
    %2337 = vadd.xlane.f32.xlu0 %v2336
    %v2338 = vpop.xlane.xlu0 %2337
    %v2339 = vsel %vm818, %v2317, 0.0
    %2340 = vadd.xlane.f32.xlu0 %v2339
    %v2341 = vpop.xlane.xlu0 %2340
    %2343 = vrot.lane.b32.xlu0 %v142, 112
    %v2344 = vpop.permute.xlu0 %2343
    %v2347 = vsel %vm818, %v2303, 0
    %2349 = vmatprep.subr.mxu0 0.0
    %2350 = vmatpush1.msra.mxu0 %v2344
    %2351 = vmatprep.subr.mxu0 0.0
    %2352 = vmatpush1.msra.mxu0 0.0
    %2353 = vmatprep.subr.mxu0 0.0
    %2354 = vmatpush1.msra.mxu0 0.0
    %2355 = vmatprep.subr.mxu0 0.0
    %2356 = vmatpush1.msra.mxu0 0.0
    %2357 = vmatprep.subr.mxu0 0.0
    %2358 = vmatpush1.msra.mxu0 0.0
    %2359 = vmatprep.subr.mxu0 0.0
    %2360 = vmatpush1.msra.mxu0 0.0
    %2361 = vmatprep.subr.mxu0 0.0
    %2362 = vmatpush1.msra.mxu0 0.0
    %2363 = vmatprep.subr.mxu0 0.0
    %2364 = vmatpush1.msra.mxu0 0.0
    %2365 = vmatprep.subr.mxu0 0.0
    %2366 = vmatpush1.msra.mxu0 0.0
    %2367 = vmatprep.subr.mxu0 0.0
    %2368 = vmatpush1.msra.mxu0 0.0
    %2369 = vmatprep.subr.mxu0 0.0
    %2370 = vmatpush1.msra.mxu0 0.0
    %2371 = vmatprep.subr.mxu0 0.0
    %2372 = vmatpush1.msra.mxu0 0.0
    %2373 = vmatprep.subr.mxu0 0.0
    %2374 = vmatpush1.msra.mxu0 0.0
    %2375 = vmatprep.subr.mxu0 0.0
    %2376 = vmatpush1.msra.mxu0 0.0
    %2377 = vmatprep.subr.mxu0 0.0
    %2378 = vmatpush1.msra.mxu0 0.0
    %2379 = vmatprep.subr.mxu0 0.0
    %2380 = vmatpush1.msra.mxu0 0.0
    %2381 = vmatprep.subr.mxu0 0.0
    %2382 = vmatpush1.msra.mxu0 0.0
    %2383 = vmatprep.subr.mxu0 0.0
    %2384 = vmatpush1.msra.mxu0 0.0
    %2385 = vmatprep.subr.mxu0 0.0
    %2386 = vmatpush1.msra.mxu0 0.0
    %2387 = vmatprep.subr.mxu0 0.0
    %2388 = vmatpush1.msra.mxu0 0.0
    %2389 = vmatprep.subr.mxu0 0.0
    %2390 = vmatpush1.msra.mxu0 0.0
    %2391 = vmatprep.subr.mxu0 0.0
    %2392 = vmatpush1.msra.mxu0 0.0
    %2393 = vmatprep.subr.mxu0 0.0
    %2394 = vmatpush1.msra.mxu0 0.0
    %2395 = vmatprep.subr.mxu0 0.0
    %2396 = vmatpush1.msra.mxu0 0.0
    %2397 = vmatprep.subr.mxu0 0.0
    %2398 = vmatpush1.msra.mxu0 0.0
    %2399 = vmatprep.subr.mxu0 0.0
    %2400 = vmatpush1.msra.mxu0 0.0
    %2401 = vmatprep.subr.mxu0 0.0
    %2402 = vmatpush1.msra.mxu0 0.0
    %2403 = vmatprep.subr.mxu0 0.0
    %2404 = vmatpush1.msra.mxu0 0.0
    %2405 = vmatprep.subr.mxu0 0.0
    %2406 = vmatpush1.msra.mxu0 0.0
    %2407 = vmatprep.subr.mxu0 0.0
    %2408 = vmatpush1.msra.mxu0 0.0
    %2409 = vmatprep.subr.mxu0 0.0
    %2410 = vmatpush1.msra.mxu0 0.0
    %2411 = vmatprep.subr.mxu0 0.0
    %2412 = vmatpush1.msra.mxu0 0.0
    %2413 = vmatprep.mubr.f32.mxu0 0.0
    %2414 = vmatmul.mubr.f32.gmra.mrb[0].mxu0 %v2347
    %v2415 = vpop.f32.mrb[0].mxu0
    %v2416 = vadd.f32 0.0, %v2415
    %v2417 = vpop.f32.mrb[0].mxu0
    %2418 = vdwg.mxu0
    %2420 = vrot.lane.b32.xlu0 %v148, 112
    %v2421 = vpop.permute.xlu0 %2420
    %v2424 = vsel %vm818, %v2305, 0
    %2426 = vmatprep.subr.mxu0 0.0
    %2427 = vmatpush1.msra.mxu0 %v2421
    %2428 = vmatprep.subr.mxu0 0.0
    %2429 = vmatpush1.msra.mxu0 0.0
    %2430 = vmatprep.subr.mxu0 0.0
    %2431 = vmatpush1.msra.mxu0 0.0
    %2432 = vmatprep.subr.mxu0 0.0
    %2433 = vmatpush1.msra.mxu0 0.0
    %2434 = vmatprep.subr.mxu0 0.0
    %2435 = vmatpush1.msra.mxu0 0.0
    %2436 = vmatprep.subr.mxu0 0.0
    %2437 = vmatpush1.msra.mxu0 0.0
    %2438 = vmatprep.subr.mxu0 0.0
    %2439 = vmatpush1.msra.mxu0 0.0
    %2440 = vmatprep.subr.mxu0 0.0
    %2441 = vmatpush1.msra.mxu0 0.0
    %2442 = vmatprep.subr.mxu0 0.0
    %2443 = vmatpush1.msra.mxu0 0.0
    %2444 = vmatprep.subr.mxu0 0.0
    %2445 = vmatpush1.msra.mxu0 0.0
    %2446 = vmatprep.subr.mxu0 0.0
    %2447 = vmatpush1.msra.mxu0 0.0
    %2448 = vmatprep.subr.mxu0 0.0
    %2449 = vmatpush1.msra.mxu0 0.0
    %2450 = vmatprep.subr.mxu0 0.0
    %2451 = vmatpush1.msra.mxu0 0.0
    %2452 = vmatprep.subr.mxu0 0.0
    %2453 = vmatpush1.msra.mxu0 0.0
    %2454 = vmatprep.subr.mxu0 0.0
    %2455 = vmatpush1.msra.mxu0 0.0
    %2456 = vmatprep.subr.mxu0 0.0
    %2457 = vmatpush1.msra.mxu0 0.0
    %2458 = vmatprep.subr.mxu0 0.0
    %2459 = vmatpush1.msra.mxu0 0.0
    %2460 = vmatprep.subr.mxu0 0.0
    %2461 = vmatpush1.msra.mxu0 0.0
    %2462 = vmatprep.subr.mxu0 0.0
    %2463 = vmatpush1.msra.mxu0 0.0
    %2464 = vmatprep.subr.mxu0 0.0
    %2465 = vmatpush1.msra.mxu0 0.0
    %2466 = vmatprep.subr.mxu0 0.0
    %2467 = vmatpush1.msra.mxu0 0.0
    %2468 = vmatprep.subr.mxu0 0.0
    %2469 = vmatpush1.msra.mxu0 0.0
    %2470 = vmatprep.subr.mxu0 0.0
    %2471 = vmatpush1.msra.mxu0 0.0
    %2472 = vmatprep.subr.mxu0 0.0
    %2473 = vmatpush1.msra.mxu0 0.0
    %2474 = vmatprep.subr.mxu0 0.0
    %2475 = vmatpush1.msra.mxu0 0.0
    %2476 = vmatprep.subr.mxu0 0.0
    %2477 = vmatpush1.msra.mxu0 0.0
    %2478 = vmatprep.subr.mxu0 0.0
    %2479 = vmatpush1.msra.mxu0 0.0
    %2480 = vmatprep.subr.mxu0 0.0
    %2481 = vmatpush1.msra.mxu0 0.0
    %2482 = vmatprep.subr.mxu0 0.0
    %2483 = vmatpush1.msra.mxu0 0.0
    %2484 = vmatprep.subr.mxu0 0.0
    %2485 = vmatpush1.msra.mxu0 0.0
    %2486 = vmatprep.subr.mxu0 0.0
    %2487 = vmatpush1.msra.mxu0 0.0
    %2488 = vmatprep.subr.mxu0 0.0
    %2489 = vmatpush1.msra.mxu0 0.0
    %2490 = vmatprep.mubr.f32.mxu0 0.0
    %2491 = vmatmul.mubr.f32.gmra.mrb[0].mxu0 %v2424
    %v2492 = vpop.f32.mrb[0].mxu0
    %v2493 = vadd.f32 0.0, %v2492
    %v2494 = vpop.f32.mrb[0].mxu0
    %2495 = vdwg.mxu0
    %2497 = vrot.lane.b32.xlu0 %v154, 112
    %v2498 = vpop.permute.xlu0 %2497
    %v2501 = vsel %vm818, %v2307, 0
    %2503 = vmatprep.subr.mxu0 0.0
    %2504 = vmatpush1.msra.mxu0 %v2498
    %2505 = vmatprep.subr.mxu0 0.0
    %2506 = vmatpush1.msra.mxu0 0.0
    %2507 = vmatprep.subr.mxu0 0.0
    %2508 = vmatpush1.msra.mxu0 0.0
    %2509 = vmatprep.subr.mxu0 0.0
    %2510 = vmatpush1.msra.mxu0 0.0
    %2511 = vmatprep.subr.mxu0 0.0
    %2512 = vmatpush1.msra.mxu0 0.0
    %2513 = vmatprep.subr.mxu0 0.0
    %2514 = vmatpush1.msra.mxu0 0.0
    %2515 = vmatprep.subr.mxu0 0.0
    %2516 = vmatpush1.msra.mxu0 0.0
    %2517 = vmatprep.subr.mxu0 0.0
    %2518 = vmatpush1.msra.mxu0 0.0
    %2519 = vmatprep.subr.mxu0 0.0
    %2520 = vmatpush1.msra.mxu0 0.0
    %2521 = vmatprep.subr.mxu0 0.0
    %2522 = vmatpush1.msra.mxu0 0.0
    %2523 = vmatprep.subr.mxu0 0.0
    %2524 = vmatpush1.msra.mxu0 0.0
    %2525 = vmatprep.subr.mxu0 0.0
    %2526 = vmatpush1.msra.mxu0 0.0
    %2527 = vmatprep.subr.mxu0 0.0
    %2528 = vmatpush1.msra.mxu0 0.0
    %2529 = vmatprep.subr.mxu0 0.0
    %2530 = vmatpush1.msra.mxu0 0.0
    %2531 = vmatprep.subr.mxu0 0.0
    %2532 = vmatpush1.msra.mxu0 0.0
    %2533 = vmatprep.subr.mxu0 0.0
    %2534 = vmatpush1.msra.mxu0 0.0
    %2535 = vmatprep.subr.mxu0 0.0
    %2536 = vmatpush1.msra.mxu0 0.0
    %2537 = vmatprep.subr.mxu0 0.0
    %2538 = vmatpush1.msra.mxu0 0.0
    %2539 = vmatprep.subr.mxu0 0.0
    %2540 = vmatpush1.msra.mxu0 0.0
    %2541 = vmatprep.subr.mxu0 0.0
    %2542 = vmatpush1.msra.mxu0 0.0
    %2543 = vmatprep.subr.mxu0 0.0
    %2544 = vmatpush1.msra.mxu0 0.0
    %2545 = vmatprep.subr.mxu0 0.0
    %2546 = vmatpush1.msra.mxu0 0.0
    %2547 = vmatprep.subr.mxu0 0.0
    %2548 = vmatpush1.msra.mxu0 0.0
    %2549 = vmatprep.subr.mxu0 0.0
    %2550 = vmatpush1.msra.mxu0 0.0
    %2551 = vmatprep.subr.mxu0 0.0
    %2552 = vmatpush1.msra.mxu0 0.0
    %2553 = vmatprep.subr.mxu0 0.0
    %2554 = vmatpush1.msra.mxu0 0.0
    %2555 = vmatprep.subr.mxu0 0.0
    %2556 = vmatpush1.msra.mxu0 0.0
    %2557 = vmatprep.subr.mxu0 0.0
    %2558 = vmatpush1.msra.mxu0 0.0
    %2559 = vmatprep.subr.mxu0 0.0
    %2560 = vmatpush1.msra.mxu0 0.0
    %2561 = vmatprep.subr.mxu0 0.0
    %2562 = vmatpush1.msra.mxu0 0.0
    %2563 = vmatprep.subr.mxu0 0.0
    %2564 = vmatpush1.msra.mxu0 0.0
    %2565 = vmatprep.subr.mxu0 0.0
    %2566 = vmatpush1.msra.mxu0 0.0
    %2567 = vmatprep.mubr.f32.mxu0 0.0
    %2568 = vmatmul.mubr.f32.gmra.mrb[0].mxu0 %v2501
    %v2569 = vpop.f32.mrb[0].mxu0
    %v2570 = vadd.f32 0.0, %v2569
    %v2571 = vpop.f32.mrb[0].mxu0
    %2572 = vdwg.mxu0
    %2574 = vrot.lane.b32.xlu0 %v160, 112
    %v2575 = vpop.permute.xlu0 %2574
    %v2578 = vsel %vm818, %v2309, 0
    %2580 = vmatprep.subr.mxu0 0.0
    %2581 = vmatpush1.msra.mxu0 %v2575
    %2582 = vmatprep.subr.mxu0 0.0
    %2583 = vmatpush1.msra.mxu0 0.0
    %2584 = vmatprep.subr.mxu0 0.0
    %2585 = vmatpush1.msra.mxu0 0.0
    %2586 = vmatprep.subr.mxu0 0.0
    %2587 = vmatpush1.msra.mxu0 0.0
    %2588 = vmatprep.subr.mxu0 0.0
    %2589 = vmatpush1.msra.mxu0 0.0
    %2590 = vmatprep.subr.mxu0 0.0
    %2591 = vmatpush1.msra.mxu0 0.0
    %2592 = vmatprep.subr.mxu0 0.0
    %2593 = vmatpush1.msra.mxu0 0.0
    %2594 = vmatprep.subr.mxu0 0.0
    %2595 = vmatpush1.msra.mxu0 0.0
    %2596 = vmatprep.subr.mxu0 0.0
    %2597 = vmatpush1.msra.mxu0 0.0
    %2598 = vmatprep.subr.mxu0 0.0
    %2599 = vmatpush1.msra.mxu0 0.0
    %2600 = vmatprep.subr.mxu0 0.0
    %2601 = vmatpush1.msra.mxu0 0.0
    %2602 = vmatprep.subr.mxu0 0.0
    %2603 = vmatpush1.msra.mxu0 0.0
    %2604 = vmatprep.subr.mxu0 0.0
    %2605 = vmatpush1.msra.mxu0 0.0
    %2606 = vmatprep.subr.mxu0 0.0
    %2607 = vmatpush1.msra.mxu0 0.0
    %2608 = vmatprep.subr.mxu0 0.0
    %2609 = vmatpush1.msra.mxu0 0.0
    %2610 = vmatprep.subr.mxu0 0.0
    %2611 = vmatpush1.msra.mxu0 0.0
    %2612 = vmatprep.subr.mxu0 0.0
    %2613 = vmatpush1.msra.mxu0 0.0
    %2614 = vmatprep.subr.mxu0 0.0
    %2615 = vmatpush1.msra.mxu0 0.0
    %2616 = vmatprep.subr.mxu0 0.0
    %2617 = vmatpush1.msra.mxu0 0.0
    %2618 = vmatprep.subr.mxu0 0.0
    %2619 = vmatpush1.msra.mxu0 0.0
    %2620 = vmatprep.subr.mxu0 0.0
    %2621 = vmatpush1.msra.mxu0 0.0
    %2622 = vmatprep.subr.mxu0 0.0
    %2623 = vmatpush1.msra.mxu0 0.0
    %2624 = vmatprep.subr.mxu0 0.0
    %2625 = vmatpush1.msra.mxu0 0.0
    %2626 = vmatprep.subr.mxu0 0.0
    %2627 = vmatpush1.msra.mxu0 0.0
    %2628 = vmatprep.subr.mxu0 0.0
    %2629 = vmatpush1.msra.mxu0 0.0
    %2630 = vmatprep.subr.mxu0 0.0
    %2631 = vmatpush1.msra.mxu0 0.0
    %2632 = vmatprep.subr.mxu0 0.0
    %2633 = vmatpush1.msra.mxu0 0.0
    %2634 = vmatprep.subr.mxu0 0.0
    %2635 = vmatpush1.msra.mxu0 0.0
    %2636 = vmatprep.subr.mxu0 0.0
    %2637 = vmatpush1.msra.mxu0 0.0
    %2638 = vmatprep.subr.mxu0 0.0
    %2639 = vmatpush1.msra.mxu0 0.0
    %2640 = vmatprep.subr.mxu0 0.0
    %2641 = vmatpush1.msra.mxu0 0.0
    %2642 = vmatprep.subr.mxu0 0.0
    %2643 = vmatpush1.msra.mxu0 0.0
    %2644 = vmatprep.mubr.f32.mxu0 0.0
    %2645 = vmatmul.mubr.f32.gmra.mrb[0].mxu0 %v2578
    %v2646 = vpop.f32.mrb[0].mxu0
    %v2647 = vadd.f32 0.0, %v2646
    %v2648 = vpop.f32.mrb[0].mxu0
    %2649 = vdwg.mxu0
    %2651 = vrot.lane.b32.xlu0 %v166, 112
    %v2652 = vpop.permute.xlu0 %2651
    %v2655 = vsel %vm818, %v2311, 0
    %2657 = vmatprep.subr.mxu0 0.0
    %2658 = vmatpush1.msra.mxu0 %v2652
    %2659 = vmatprep.subr.mxu0 0.0
    %2660 = vmatpush1.msra.mxu0 0.0
    %2661 = vmatprep.subr.mxu0 0.0
    %2662 = vmatpush1.msra.mxu0 0.0
    %2663 = vmatprep.subr.mxu0 0.0
    %2664 = vmatpush1.msra.mxu0 0.0
    %2665 = vmatprep.subr.mxu0 0.0
    %2666 = vmatpush1.msra.mxu0 0.0
    %2667 = vmatprep.subr.mxu0 0.0
    %2668 = vmatpush1.msra.mxu0 0.0
    %2669 = vmatprep.subr.mxu0 0.0
    %2670 = vmatpush1.msra.mxu0 0.0
    %2671 = vmatprep.subr.mxu0 0.0
    %2672 = vmatpush1.msra.mxu0 0.0
    %2673 = vmatprep.subr.mxu0 0.0
    %2674 = vmatpush1.msra.mxu0 0.0
    %2675 = vmatprep.subr.mxu0 0.0
    %2676 = vmatpush1.msra.mxu0 0.0
    %2677 = vmatprep.subr.mxu0 0.0
    %2678 = vmatpush1.msra.mxu0 0.0
    %2679 = vmatprep.subr.mxu0 0.0
    %2680 = vmatpush1.msra.mxu0 0.0
    %2681 = vmatprep.subr.mxu0 0.0
    %2682 = vmatpush1.msra.mxu0 0.0
    %2683 = vmatprep.subr.mxu0 0.0
    %2684 = vmatpush1.msra.mxu0 0.0
    %2685 = vmatprep.subr.mxu0 0.0
    %2686 = vmatpush1.msra.mxu0 0.0
    %2687 = vmatprep.subr.mxu0 0.0
    %2688 = vmatpush1.msra.mxu0 0.0
    %2689 = vmatprep.subr.mxu0 0.0
    %2690 = vmatpush1.msra.mxu0 0.0
    %2691 = vmatprep.subr.mxu0 0.0
    %2692 = vmatpush1.msra.mxu0 0.0
    %2693 = vmatprep.subr.mxu0 0.0
    %2694 = vmatpush1.msra.mxu0 0.0
    %2695 = vmatprep.subr.mxu0 0.0
    %2696 = vmatpush1.msra.mxu0 0.0
    %2697 = vmatprep.subr.mxu0 0.0
    %2698 = vmatpush1.msra.mxu0 0.0
    %2699 = vmatprep.subr.mxu0 0.0
    %2700 = vmatpush1.msra.mxu0 0.0
    %2701 = vmatprep.subr.mxu0 0.0
    %2702 = vmatpush1.msra.mxu0 0.0
    %2703 = vmatprep.subr.mxu0 0.0
    %2704 = vmatpush1.msra.mxu0 0.0
    %2705 = vmatprep.subr.mxu0 0.0
    %2706 = vmatpush1.msra.mxu0 0.0
    %2707 = vmatprep.subr.mxu0 0.0
    %2708 = vmatpush1.msra.mxu0 0.0
    %2709 = vmatprep.subr.mxu0 0.0
    %2710 = vmatpush1.msra.mxu0 0.0
    %2711 = vmatprep.subr.mxu0 0.0
    %2712 = vmatpush1.msra.mxu0 0.0
    %2713 = vmatprep.subr.mxu0 0.0
    %2714 = vmatpush1.msra.mxu0 0.0
    %2715 = vmatprep.subr.mxu0 0.0
    %2716 = vmatpush1.msra.mxu0 0.0
    %2717 = vmatprep.subr.mxu0 0.0
    %2718 = vmatpush1.msra.mxu0 0.0
    %2719 = vmatprep.subr.mxu0 0.0
    %2720 = vmatpush1.msra.mxu0 0.0
    %2721 = vmatprep.mubr.f32.mxu0 0.0
    %2722 = vmatmul.mubr.f32.gmra.mrb[0].mxu0 %v2655
    %v2723 = vpop.f32.mrb[0].mxu0
    %v2724 = vadd.f32 0.0, %v2723
    %v2725 = vpop.f32.mrb[0].mxu0
    %2726 = vdwg.mxu0
    %2728 = vrot.lane.b32.xlu0 %v172, 112
    %v2729 = vpop.permute.xlu0 %2728
    %v2732 = vsel %vm818, %v2313, 0
    %2734 = vmatprep.subr.mxu0 0.0
    %2735 = vmatpush1.msra.mxu0 %v2729
    %2736 = vmatprep.subr.mxu0 0.0
    %2737 = vmatpush1.msra.mxu0 0.0
    %2738 = vmatprep.subr.mxu0 0.0
    %2739 = vmatpush1.msra.mxu0 0.0
    %2740 = vmatprep.subr.mxu0 0.0
    %2741 = vmatpush1.msra.mxu0 0.0
    %2742 = vmatprep.subr.mxu0 0.0
    %2743 = vmatpush1.msra.mxu0 0.0
    %2744 = vmatprep.subr.mxu0 0.0
    %2745 = vmatpush1.msra.mxu0 0.0
    %2746 = vmatprep.subr.mxu0 0.0
    %2747 = vmatpush1.msra.mxu0 0.0
    %2748 = vmatprep.subr.mxu0 0.0
    %2749 = vmatpush1.msra.mxu0 0.0
    %2750 = vmatprep.subr.mxu0 0.0
    %2751 = vmatpush1.msra.mxu0 0.0
    %2752 = vmatprep.subr.mxu0 0.0
    %2753 = vmatpush1.msra.mxu0 0.0
    %2754 = vmatprep.subr.mxu0 0.0
    %2755 = vmatpush1.msra.mxu0 0.0
    %2756 = vmatprep.subr.mxu0 0.0
    %2757 = vmatpush1.msra.mxu0 0.0
    %2758 = vmatprep.subr.mxu0 0.0
    %2759 = vmatpush1.msra.mxu0 0.0
    %2760 = vmatprep.subr.mxu0 0.0
    %2761 = vmatpush1.msra.mxu0 0.0
    %2762 = vmatprep.subr.mxu0 0.0
    %2763 = vmatpush1.msra.mxu0 0.0
    %2764 = vmatprep.subr.mxu0 0.0
    %2765 = vmatpush1.msra.mxu0 0.0
    %2766 = vmatprep.subr.mxu0 0.0
    %2767 = vmatpush1.msra.mxu0 0.0
    %2768 = vmatprep.subr.mxu0 0.0
    %2769 = vmatpush1.msra.mxu0 0.0
    %2770 = vmatprep.subr.mxu0 0.0
    %2771 = vmatpush1.msra.mxu0 0.0
    %2772 = vmatprep.subr.mxu0 0.0
    %2773 = vmatpush1.msra.mxu0 0.0
    %2774 = vmatprep.subr.mxu0 0.0
    %2775 = vmatpush1.msra.mxu0 0.0
    %2776 = vmatprep.subr.mxu0 0.0
    %2777 = vmatpush1.msra.mxu0 0.0
    %2778 = vmatprep.subr.mxu0 0.0
    %2779 = vmatpush1.msra.mxu0 0.0
    %2780 = vmatprep.subr.mxu0 0.0
    %2781 = vmatpush1.msra.mxu0 0.0
    %2782 = vmatprep.subr.mxu0 0.0
    %2783 = vmatpush1.msra.mxu0 0.0
    %2784 = vmatprep.subr.mxu0 0.0
    %2785 = vmatpush1.msra.mxu0 0.0
    %2786 = vmatprep.subr.mxu0 0.0
    %2787 = vmatpush1.msra.mxu0 0.0
    %2788 = vmatprep.subr.mxu0 0.0
    %2789 = vmatpush1.msra.mxu0 0.0
    %2790 = vmatprep.subr.mxu0 0.0
    %2791 = vmatpush1.msra.mxu0 0.0
    %2792 = vmatprep.subr.mxu0 0.0
    %2793 = vmatpush1.msra.mxu0 0.0
    %2794 = vmatprep.subr.mxu0 0.0
    %2795 = vmatpush1.msra.mxu0 0.0
    %2796 = vmatprep.subr.mxu0 0.0
    %2797 = vmatpush1.msra.mxu0 0.0
    %2798 = vmatprep.mubr.f32.mxu0 0.0
    %2799 = vmatmul.mubr.f32.gmra.mrb[0].mxu0 %v2732
    %v2800 = vpop.f32.mrb[0].mxu0
    %v2801 = vadd.f32 0.0, %v2800
    %v2802 = vpop.f32.mrb[0].mxu0
    %2803 = vdwg.mxu0
    %2805 = vrot.lane.b32.xlu0 %v178, 112
    %v2806 = vpop.permute.xlu0 %2805
    %v2809 = vsel %vm818, %v2315, 0
    %2811 = vmatprep.subr.mxu0 0.0
    %2812 = vmatpush1.msra.mxu0 %v2806
    %2813 = vmatprep.subr.mxu0 0.0
    %2814 = vmatpush1.msra.mxu0 0.0
    %2815 = vmatprep.subr.mxu0 0.0
    %2816 = vmatpush1.msra.mxu0 0.0
    %2817 = vmatprep.subr.mxu0 0.0
    %2818 = vmatpush1.msra.mxu0 0.0
    %2819 = vmatprep.subr.mxu0 0.0
    %2820 = vmatpush1.msra.mxu0 0.0
    %2821 = vmatprep.subr.mxu0 0.0
    %2822 = vmatpush1.msra.mxu0 0.0
    %2823 = vmatprep.subr.mxu0 0.0
    %2824 = vmatpush1.msra.mxu0 0.0
    %2825 = vmatprep.subr.mxu0 0.0
    %2826 = vmatpush1.msra.mxu0 0.0
    %2827 = vmatprep.subr.mxu0 0.0
    %2828 = vmatpush1.msra.mxu0 0.0
    %2829 = vmatprep.subr.mxu0 0.0
    %2830 = vmatpush1.msra.mxu0 0.0
    %2831 = vmatprep.subr.mxu0 0.0
    %2832 = vmatpush1.msra.mxu0 0.0
    %2833 = vmatprep.subr.mxu0 0.0
    %2834 = vmatpush1.msra.mxu0 0.0
    %2835 = vmatprep.subr.mxu0 0.0
    %2836 = vmatpush1.msra.mxu0 0.0
    %2837 = vmatprep.subr.mxu0 0.0
    %2838 = vmatpush1.msra.mxu0 0.0
    %2839 = vmatprep.subr.mxu0 0.0
    %2840 = vmatpush1.msra.mxu0 0.0
    %2841 = vmatprep.subr.mxu0 0.0
    %2842 = vmatpush1.msra.mxu0 0.0
    %2843 = vmatprep.subr.mxu0 0.0
    %2844 = vmatpush1.msra.mxu0 0.0
    %2845 = vmatprep.subr.mxu0 0.0
    %2846 = vmatpush1.msra.mxu0 0.0
    %2847 = vmatprep.subr.mxu0 0.0
    %2848 = vmatpush1.msra.mxu0 0.0
    %2849 = vmatprep.subr.mxu0 0.0
    %2850 = vmatpush1.msra.mxu0 0.0
    %2851 = vmatprep.subr.mxu0 0.0
    %2852 = vmatpush1.msra.mxu0 0.0
    %2853 = vmatprep.subr.mxu0 0.0
    %2854 = vmatpush1.msra.mxu0 0.0
    %2855 = vmatprep.subr.mxu0 0.0
    %2856 = vmatpush1.msra.mxu0 0.0
    %2857 = vmatprep.subr.mxu0 0.0
    %2858 = vmatpush1.msra.mxu0 0.0
    %2859 = vmatprep.subr.mxu0 0.0
    %2860 = vmatpush1.msra.mxu0 0.0
    %2861 = vmatprep.subr.mxu0 0.0
    %2862 = vmatpush1.msra.mxu0 0.0
    %2863 = vmatprep.subr.mxu0 0.0
    %2864 = vmatpush1.msra.mxu0 0.0
    %2865 = vmatprep.subr.mxu0 0.0
    %2866 = vmatpush1.msra.mxu0 0.0
    %2867 = vmatprep.subr.mxu0 0.0
    %2868 = vmatpush1.msra.mxu0 0.0
    %2869 = vmatprep.subr.mxu0 0.0
    %2870 = vmatpush1.msra.mxu0 0.0
    %2871 = vmatprep.subr.mxu0 0.0
    %2872 = vmatpush1.msra.mxu0 0.0
    %2873 = vmatprep.subr.mxu0 0.0
    %2874 = vmatpush1.msra.mxu0 0.0
    %2875 = vmatprep.mubr.f32.mxu0 0.0
    %2876 = vmatmul.mubr.f32.gmra.mrb[0].mxu0 %v2809
    %v2877 = vpop.f32.mrb[0].mxu0
    %v2878 = vadd.f32 0.0, %v2877
    %v2879 = vpop.f32.mrb[0].mxu0
    %2880 = vdwg.mxu0
    %2882 = vrot.lane.b32.xlu0 %v184, 112
    %v2883 = vpop.permute.xlu0 %2882
    %v2886 = vsel %vm818, %v2317, 0
    %2888 = vmatprep.subr.mxu0 0.0
    %2889 = vmatpush1.msra.mxu0 %v2883
    %2890 = vmatprep.subr.mxu0 0.0
    %2891 = vmatpush1.msra.mxu0 0.0
    %2892 = vmatprep.subr.mxu0 0.0
    %2893 = vmatpush1.msra.mxu0 0.0
    %2894 = vmatprep.subr.mxu0 0.0
    %2895 = vmatpush1.msra.mxu0 0.0
    %2896 = vmatprep.subr.mxu0 0.0
    %2897 = vmatpush1.msra.mxu0 0.0
    %2898 = vmatprep.subr.mxu0 0.0
    %2899 = vmatpush1.msra.mxu0 0.0
    %2900 = vmatprep.subr.mxu0 0.0
    %2901 = vmatpush1.msra.mxu0 0.0
    %2902 = vmatprep.subr.mxu0 0.0
    %2903 = vmatpush1.msra.mxu0 0.0
    %2904 = vmatprep.subr.mxu0 0.0
    %2905 = vmatpush1.msra.mxu0 0.0
    %2906 = vmatprep.subr.mxu0 0.0
    %2907 = vmatpush1.msra.mxu0 0.0
    %2908 = vmatprep.subr.mxu0 0.0
    %2909 = vmatpush1.msra.mxu0 0.0
    %2910 = vmatprep.subr.mxu0 0.0
    %2911 = vmatpush1.msra.mxu0 0.0
    %2912 = vmatprep.subr.mxu0 0.0
    %2913 = vmatpush1.msra.mxu0 0.0
    %2914 = vmatprep.subr.mxu0 0.0
    %2915 = vmatpush1.msra.mxu0 0.0
    %2916 = vmatprep.subr.mxu0 0.0
    %2917 = vmatpush1.msra.mxu0 0.0
    %2918 = vmatprep.subr.mxu0 0.0
    %2919 = vmatpush1.msra.mxu0 0.0
    %2920 = vmatprep.subr.mxu0 0.0
    %2921 = vmatpush1.msra.mxu0 0.0
    %2922 = vmatprep.subr.mxu0 0.0
    %2923 = vmatpush1.msra.mxu0 0.0
    %2924 = vmatprep.subr.mxu0 0.0
    %2925 = vmatpush1.msra.mxu0 0.0
    %2926 = vmatprep.subr.mxu0 0.0
    %2927 = vmatpush1.msra.mxu0 0.0
    %2928 = vmatprep.subr.mxu0 0.0
    %2929 = vmatpush1.msra.mxu0 0.0
    %2930 = vmatprep.subr.mxu0 0.0
    %2931 = vmatpush1.msra.mxu0 0.0
    %2932 = vmatprep.subr.mxu0 0.0
    %2933 = vmatpush1.msra.mxu0 0.0
    %2934 = vmatprep.subr.mxu0 0.0
    %2935 = vmatpush1.msra.mxu0 0.0
    %2936 = vmatprep.subr.mxu0 0.0
    %2937 = vmatpush1.msra.mxu0 0.0
    %2938 = vmatprep.subr.mxu0 0.0
    %2939 = vmatpush1.msra.mxu0 0.0
    %2940 = vmatprep.subr.mxu0 0.0
    %2941 = vmatpush1.msra.mxu0 0.0
    %2942 = vmatprep.subr.mxu0 0.0
    %2943 = vmatpush1.msra.mxu0 0.0
    %2944 = vmatprep.subr.mxu0 0.0
    %2945 = vmatpush1.msra.mxu0 0.0
    %2946 = vmatprep.subr.mxu0 0.0
    %2947 = vmatpush1.msra.mxu0 0.0
    %2948 = vmatprep.subr.mxu0 0.0
    %2949 = vmatpush1.msra.mxu0 0.0
    %2950 = vmatprep.subr.mxu0 0.0
    %2951 = vmatpush1.msra.mxu0 0.0
    %2952 = vmatprep.mubr.f32.mxu0 0.0
    %2953 = vmatmul.mubr.f32.gmra.mrb[0].mxu0 %v2886
    %v2954 = vpop.f32.mrb[0].mxu0
    %v2955 = vadd.f32 0.0, %v2954
    %v2956 = vpop.f32.mrb[0].mxu0
    %2957 = vdwg.mxu0
    %v2958 = vrcp.pop %v2320
    %v2959 = vmul.f32 1.0, %v2958
    %v2960 = vrcp.pop %v2323
    %v2961 = vmul.f32 1.0, %v2960
    %v2962 = vrcp.pop %v2326
    %v2963 = vmul.f32 1.0, %v2962
    %v2964 = vrcp.pop %v2329
    %v2965 = vmul.f32 1.0, %v2964
    %v2966 = vrcp.pop %v2332
    %v2967 = vmul.f32 1.0, %v2966
    %v2968 = vrcp.pop %v2335
    %v2969 = vmul.f32 1.0, %v2968
    %v2970 = vrcp.pop %v2338
    %v2971 = vmul.f32 1.0, %v2970
    %v2972 = vrcp.pop %v2341
    %v2973 = vmul.f32 1.0, %v2972
    %v2974 = vmul.f32 %v2416, %v2959
    %v2975 = vmul.f32 %v2493, %v2961
    %v2976 = vmul.f32 %v2570, %v2963
    %v2977 = vmul.f32 %v2647, %v2965
    %v2978 = vmul.f32 %v2724, %v2967
    %v2979 = vmul.f32 %v2801, %v2969
    %v2980 = vmul.f32 %v2878, %v2971
    %v2981 = vmul.f32 %v2955, %v2973
    %s2982 = scalar_lea.vmem %s2, 16
    %v2983 = vld [vmem:[%s2982] sm:$0xff]
    %v2984 = vld [vmem:[%s2982 + $0x8] sm:$0xff]
    %v2986 = vsel %vm196, %v2974, 0
    %v2989 = vsel %vm196, %v2975, 0
    %v2992 = vsel %vm196, %v2976, 0
    %v2995 = vsel %vm196, %v2977, 0
    %v2998 = vsel %vm196, %v2978, 0
    %v3001 = vsel %vm196, %v2979, 0
    %v3004 = vsel %vm196, %v2980, 0
    %v3007 = vsel %vm196, %v2981, 0
    %3009 = vmatprep.subr.mxu0 0.0
    %3010 = vmatpush1.msra.mxu0 %v2983
    %3011 = vmatprep.subr.mxu0 0.0
    %3012 = vmatpush1.msra.mxu0 %v2984
    %3013 = vmatprep.subr.mxu0 0.0
    %3014 = vmatpush1.msra.mxu0 0.0
    %3015 = vmatprep.subr.mxu0 0.0
    %3016 = vmatpush1.msra.mxu0 0.0
    %3017 = vmatprep.subr.mxu0 0.0
    %3018 = vmatpush1.msra.mxu0 0.0
    %3019 = vmatprep.subr.mxu0 0.0
    %3020 = vmatpush1.msra.mxu0 0.0
    %3021 = vmatprep.subr.mxu0 0.0
    %3022 = vmatpush1.msra.mxu0 0.0
    %3023 = vmatprep.subr.mxu0 0.0
    %3024 = vmatpush1.msra.mxu0 0.0
    %3025 = vmatprep.subr.mxu0 0.0
    %3026 = vmatpush1.msra.mxu0 0.0
    %3027 = vmatprep.subr.mxu0 0.0
    %3028 = vmatpush1.msra.mxu0 0.0
    %3029 = vmatprep.subr.mxu0 0.0
    %3030 = vmatpush1.msra.mxu0 0.0
    %3031 = vmatprep.subr.mxu0 0.0
    %3032 = vmatpush1.msra.mxu0 0.0
    %3033 = vmatprep.subr.mxu0 0.0
    %3034 = vmatpush1.msra.mxu0 0.0
    %3035 = vmatprep.subr.mxu0 0.0
    %3036 = vmatpush1.msra.mxu0 0.0
    %3037 = vmatprep.subr.mxu0 0.0
    %3038 = vmatpush1.msra.mxu0 0.0
    %3039 = vmatprep.subr.mxu0 0.0
    %3040 = vmatpush1.msra.mxu0 0.0
    %3041 = vmatprep.subr.mxu0 0.0
    %3042 = vmatpush1.msra.mxu0 0.0
    %3043 = vmatprep.subr.mxu0 0.0
    %3044 = vmatpush1.msra.mxu0 0.0
    %3045 = vmatprep.subr.mxu0 0.0
    %3046 = vmatpush1.msra.mxu0 0.0
    %3047 = vmatprep.subr.mxu0 0.0
    %3048 = vmatpush1.msra.mxu0 0.0
    %3049 = vmatprep.subr.mxu0 0.0
    %3050 = vmatpush1.msra.mxu0 0.0
    %3051 = vmatprep.subr.mxu0 0.0
    %3052 = vmatpush1.msra.mxu0 0.0
    %3053 = vmatprep.subr.mxu0 0.0
    %3054 = vmatpush1.msra.mxu0 0.0
    %3055 = vmatprep.subr.mxu0 0.0
    %3056 = vmatpush1.msra.mxu0 0.0
    %3057 = vmatprep.subr.mxu0 0.0
    %3058 = vmatpush1.msra.mxu0 0.0
    %3059 = vmatprep.subr.mxu0 0.0
    %3060 = vmatpush1.msra.mxu0 0.0
    %3061 = vmatprep.subr.mxu0 0.0
    %3062 = vmatpush1.msra.mxu0 0.0
    %3063 = vmatprep.subr.mxu0 0.0
    %3064 = vmatpush1.msra.mxu0 0.0
    %3065 = vmatprep.subr.mxu0 0.0
    %3066 = vmatpush1.msra.mxu0 0.0
    %3067 = vmatprep.subr.mxu0 0.0
    %3068 = vmatpush1.msra.mxu0 0.0
    %3069 = vmatprep.subr.mxu0 0.0
    %3070 = vmatpush1.msra.mxu0 0.0
    %3071 = vmatprep.subr.mxu0 0.0
    %3072 = vmatpush1.msra.mxu0 0.0
    %3073 = vmatprep.mubr.f32.mxu0 0.0
    %3074 = vmatmul.mubr.f32.gmra.mrb[0].mxu0 %v2986
    %v3075 = vpop.f32.mrb[0].mxu0
    %v3076 = vadd.f32 0.0, %v3075
    %v3077 = vpop.f32.mrb[0].mxu0
    %3078 = vmatprep.mubr.f32.mxu0 0.0
    %3079 = vmatmul.mubr.f32.gmra.mrb[0].mxu0 %v2989
    %v3080 = vpop.f32.mrb[0].mxu0
    %v3081 = vadd.f32 0.0, %v3080
    %v3082 = vpop.f32.mrb[0].mxu0
    %3083 = vmatprep.mubr.f32.mxu0 0.0
    %3084 = vmatmul.mubr.f32.gmra.mrb[0].mxu0 %v2992
    %v3085 = vpop.f32.mrb[0].mxu0
    %v3086 = vadd.f32 0.0, %v3085
    %v3087 = vpop.f32.mrb[0].mxu0
    %3088 = vmatprep.mubr.f32.mxu0 0.0
    %3089 = vmatmul.mubr.f32.gmra.mrb[0].mxu0 %v2995
    %v3090 = vpop.f32.mrb[0].mxu0
    %v3091 = vadd.f32 0.0, %v3090
    %v3092 = vpop.f32.mrb[0].mxu0
    %3093 = vmatprep.mubr.f32.mxu0 0.0
    %3094 = vmatmul.mubr.f32.gmra.mrb[0].mxu0 %v2998
    %v3095 = vpop.f32.mrb[0].mxu0
    %v3096 = vadd.f32 0.0, %v3095
    %v3097 = vpop.f32.mrb[0].mxu0
    %3098 = vmatprep.mubr.f32.mxu0 0.0
    %3099 = vmatmul.mubr.f32.gmra.mrb[0].mxu0 %v3001
    %v3100 = vpop.f32.mrb[0].mxu0
    %v3101 = vadd.f32 0.0, %v3100
    %v3102 = vpop.f32.mrb[0].mxu0
    %3103 = vmatprep.mubr.f32.mxu0 0.0
    %3104 = vmatmul.mubr.f32.gmra.mrb[0].mxu0 %v3004
    %v3105 = vpop.f32.mrb[0].mxu0
    %v3106 = vadd.f32 0.0, %v3105
    %v3107 = vpop.f32.mrb[0].mxu0
    %3108 = vmatprep.mubr.f32.mxu0 0.0
    %3109 = vmatmul.mubr.f32.gmra.mrb[0].mxu0 %v3007
    %v3110 = vpop.f32.mrb[0].mxu0
    %v3111 = vadd.f32 0.0, %v3110
    %v3112 = vpop.f32.mrb[0].mxu0
    %3113 = vdwg.mxu0
    %v3114 = vadd.f32 %v1630, %v3076
    %v3115 = vadd.f32 %v1631, %v3081
    %v3116 = vadd.f32 %v1632, %v3086
    %v3117 = vadd.f32 %v1633, %v3091
    %v3118 = vadd.f32 %v1634, %v3096
    %v3119 = vadd.f32 %v1635, %v3101
    %v3120 = vadd.f32 %v1636, %v3106
    %v3121 = vadd.f32 %v1637, %v3111
    %3122 = vrot.lane.b32.xlu0 %v140, 96
    %v3123 = vpop.permute.xlu0 %3122
    %3124 = vrot.lane.b32.xlu0 %v140, 32
    %v3125 = vpop.permute.xlu0 %3124
    %v3126 = vsel %vm196, %v3123, 0
    %v3128 = vsel %vm196, %v3125, 0
    %3130 = vmatprep.subr.mxu0 0.0
    %3131 = vmatpush1.xpose.msra.mxu0 %v3128
    %3132 = vmatprep.subr.mxu0 0.0
    %3133 = vmatpush1.xpose.msra.mxu0 0.0
    %3134 = vmatprep.subr.mxu0 0.0
    %3135 = vmatpush1.xpose.msra.mxu0 0.0
    %3136 = vmatprep.subr.mxu0 0.0
    %3137 = vmatpush1.xpose.msra.mxu0 0.0
    %3138 = vmatprep.subr.mxu0 0.0
    %3139 = vmatpush1.xpose.msra.mxu0 0.0
    %3140 = vmatprep.subr.mxu0 0.0
    %3141 = vmatpush1.xpose.msra.mxu0 0.0
    %3142 = vmatprep.subr.mxu0 0.0
    %3143 = vmatpush1.xpose.msra.mxu0 0.0
    %3144 = vmatprep.subr.mxu0 0.0
    %3145 = vmatpush1.xpose.msra.mxu0 0.0
    %3146 = vmatprep.subr.mxu0 0.0
    %3147 = vmatpush1.xpose.msra.mxu0 0.0
    %3148 = vmatprep.subr.mxu0 0.0
    %3149 = vmatpush1.xpose.msra.mxu0 0.0
    %3150 = vmatprep.subr.mxu0 0.0
    %3151 = vmatpush1.xpose.msra.mxu0 0.0
    %3152 = vmatprep.subr.mxu0 0.0
    %3153 = vmatpush1.xpose.msra.mxu0 0.0
    %3154 = vmatprep.subr.mxu0 0.0
    %3155 = vmatpush1.xpose.msra.mxu0 0.0
    %3156 = vmatprep.subr.mxu0 0.0
    %3157 = vmatpush1.xpose.msra.mxu0 0.0
    %3158 = vmatprep.subr.mxu0 0.0
    %3159 = vmatpush1.xpose.msra.mxu0 0.0
    %3160 = vmatprep.subr.mxu0 0.0
    %3161 = vmatpush1.xpose.msra.mxu0 0.0
    %3162 = vmatprep.subr.mxu0 0.0
    %3163 = vmatpush1.xpose.msra.mxu0 0.0
    %3164 = vmatprep.subr.mxu0 0.0
    %3165 = vmatpush1.xpose.msra.mxu0 0.0
    %3166 = vmatprep.subr.mxu0 0.0
    %3167 = vmatpush1.xpose.msra.mxu0 0.0
    %3168 = vmatprep.subr.mxu0 0.0
    %3169 = vmatpush1.xpose.msra.mxu0 0.0
    %3170 = vmatprep.subr.mxu0 0.0
    %3171 = vmatpush1.xpose.msra.mxu0 0.0
    %3172 = vmatprep.subr.mxu0 0.0
    %3173 = vmatpush1.xpose.msra.mxu0 0.0
    %3174 = vmatprep.subr.mxu0 0.0
    %3175 = vmatpush1.xpose.msra.mxu0 0.0
    %3176 = vmatprep.subr.mxu0 0.0
    %3177 = vmatpush1.xpose.msra.mxu0 0.0
    %3178 = vmatprep.subr.mxu0 0.0
    %3179 = vmatpush1.xpose.msra.mxu0 0.0
    %3180 = vmatprep.subr.mxu0 0.0
    %3181 = vmatpush1.xpose.msra.mxu0 0.0
    %3182 = vmatprep.subr.mxu0 0.0
    %3183 = vmatpush1.xpose.msra.mxu0 0.0
    %3184 = vmatprep.subr.mxu0 0.0
    %3185 = vmatpush1.xpose.msra.mxu0 0.0
    %3186 = vmatprep.subr.mxu0 0.0
    %3187 = vmatpush1.xpose.msra.mxu0 0.0
    %3188 = vmatprep.subr.mxu0 0.0
    %3189 = vmatpush1.xpose.msra.mxu0 0.0
    %3190 = vmatprep.subr.mxu0 0.0
    %3191 = vmatpush1.xpose.msra.mxu0 0.0
    %3192 = vmatprep.subr.mxu0 0.0
    %3193 = vmatpush1.xpose.msra.mxu0 0.0
    %3194 = vmatprep.mubr.f32.mxu0 0.0
    %3195 = vmatmul.mubr.f32.gmra.mrb[0].mxu0 %v3126
    %v3196 = vpop.f32.mrb[0].mxu0
    %v3197 = vadd.f32 0.0, %v3196
    %v3198 = vpop.f32.mrb[0].mxu0
    %3199 = vdwg.mxu0
    %3200 = vrot.lane.b32.xlu0 %v146, 96
    %v3201 = vpop.permute.xlu0 %3200
    %3202 = vrot.lane.b32.xlu0 %v146, 32
    %v3203 = vpop.permute.xlu0 %3202
    %v3204 = vsel %vm196, %v3201, 0
    %v3206 = vsel %vm196, %v3203, 0
    %3208 = vmatprep.subr.mxu0 0.0
    %3209 = vmatpush1.xpose.msra.mxu0 %v3206
    %3210 = vmatprep.subr.mxu0 0.0
    %3211 = vmatpush1.xpose.msra.mxu0 0.0
    %3212 = vmatprep.subr.mxu0 0.0
    %3213 = vmatpush1.xpose.msra.mxu0 0.0
    %3214 = vmatprep.subr.mxu0 0.0
    %3215 = vmatpush1.xpose.msra.mxu0 0.0
    %3216 = vmatprep.subr.mxu0 0.0
    %3217 = vmatpush1.xpose.msra.mxu0 0.0
    %3218 = vmatprep.subr.mxu0 0.0
    %3219 = vmatpush1.xpose.msra.mxu0 0.0
    %3220 = vmatprep.subr.mxu0 0.0
    %3221 = vmatpush1.xpose.msra.mxu0 0.0
    %3222 = vmatprep.subr.mxu0 0.0
    %3223 = vmatpush1.xpose.msra.mxu0 0.0
    %3224 = vmatprep.subr.mxu0 0.0
    %3225 = vmatpush1.xpose.msra.mxu0 0.0
    %3226 = vmatprep.subr.mxu0 0.0
    %3227 = vmatpush1.xpose.msra.mxu0 0.0
    %3228 = vmatprep.subr.mxu0 0.0
    %3229 = vmatpush1.xpose.msra.mxu0 0.0
    %3230 = vmatprep.subr.mxu0 0.0
    %3231 = vmatpush1.xpose.msra.mxu0 0.0
    %3232 = vmatprep.subr.mxu0 0.0
    %3233 = vmatpush1.xpose.msra.mxu0 0.0
    %3234 = vmatprep.subr.mxu0 0.0
    %3235 = vmatpush1.xpose.msra.mxu0 0.0
    %3236 = vmatprep.subr.mxu0 0.0
    %3237 = vmatpush1.xpose.msra.mxu0 0.0
    %3238 = vmatprep.subr.mxu0 0.0
    %3239 = vmatpush1.xpose.msra.mxu0 0.0
    %3240 = vmatprep.subr.mxu0 0.0
    %3241 = vmatpush1.xpose.msra.mxu0 0.0
    %3242 = vmatprep.subr.mxu0 0.0
    %3243 = vmatpush1.xpose.msra.mxu0 0.0
    %3244 = vmatprep.subr.mxu0 0.0
    %3245 = vmatpush1.xpose.msra.mxu0 0.0
    %3246 = vmatprep.subr.mxu0 0.0
    %3247 = vmatpush1.xpose.msra.mxu0 0.0
    %3248 = vmatprep.subr.mxu0 0.0
    %3249 = vmatpush1.xpose.msra.mxu0 0.0
    %3250 = vmatprep.subr.mxu0 0.0
    %3251 = vmatpush1.xpose.msra.mxu0 0.0
    %3252 = vmatprep.subr.mxu0 0.0
    %3253 = vmatpush1.xpose.msra.mxu0 0.0
    %3254 = vmatprep.subr.mxu0 0.0
    %3255 = vmatpush1.xpose.msra.mxu0 0.0
    %3256 = vmatprep.subr.mxu0 0.0
    %3257 = vmatpush1.xpose.msra.mxu0 0.0
    %3258 = vmatprep.subr.mxu0 0.0
    %3259 = vmatpush1.xpose.msra.mxu0 0.0
    %3260 = vmatprep.subr.mxu0 0.0
    %3261 = vmatpush1.xpose.msra.mxu0 0.0
    %3262 = vmatprep.subr.mxu0 0.0
    %3263 = vmatpush1.xpose.msra.mxu0 0.0
    %3264 = vmatprep.subr.mxu0 0.0
    %3265 = vmatpush1.xpose.msra.mxu0 0.0
    %3266 = vmatprep.subr.mxu0 0.0
    %3267 = vmatpush1.xpose.msra.mxu0 0.0
    %3268 = vmatprep.subr.mxu0 0.0
    %3269 = vmatpush1.xpose.msra.mxu0 0.0
    %3270 = vmatprep.subr.mxu0 0.0
    %3271 = vmatpush1.xpose.msra.mxu0 0.0
    %3272 = vmatprep.mubr.f32.mxu0 0.0
    %3273 = vmatmul.mubr.f32.gmra.mrb[0].mxu0 %v3204
    %v3274 = vpop.f32.mrb[0].mxu0
    %v3275 = vadd.f32 0.0, %v3274
    %v3276 = vpop.f32.mrb[0].mxu0
    %3277 = vdwg.mxu0
    %3278 = vrot.lane.b32.xlu0 %v152, 96
    %v3279 = vpop.permute.xlu0 %3278
    %3280 = vrot.lane.b32.xlu0 %v152, 32
    %v3281 = vpop.permute.xlu0 %3280
    %v3282 = vsel %vm196, %v3279, 0
    %v3284 = vsel %vm196, %v3281, 0
    %3286 = vmatprep.subr.mxu0 0.0
    %3287 = vmatpush1.xpose.msra.mxu0 %v3284
    %3288 = vmatprep.subr.mxu0 0.0
    %3289 = vmatpush1.xpose.msra.mxu0 0.0
    %3290 = vmatprep.subr.mxu0 0.0
    %3291 = vmatpush1.xpose.msra.mxu0 0.0
    %3292 = vmatprep.subr.mxu0 0.0
    %3293 = vmatpush1.xpose.msra.mxu0 0.0
    %3294 = vmatprep.subr.mxu0 0.0
    %3295 = vmatpush1.xpose.msra.mxu0 0.0
    %3296 = vmatprep.subr.mxu0 0.0
    %3297 = vmatpush1.xpose.msra.mxu0 0.0
    %3298 = vmatprep.subr.mxu0 0.0
    %3299 = vmatpush1.xpose.msra.mxu0 0.0
    %3300 = vmatprep.subr.mxu0 0.0
    %3301 = vmatpush1.xpose.msra.mxu0 0.0
    %3302 = vmatprep.subr.mxu0 0.0
    %3303 = vmatpush1.xpose.msra.mxu0 0.0
    %3304 = vmatprep.subr.mxu0 0.0
    %3305 = vmatpush1.xpose.msra.mxu0 0.0
    %3306 = vmatprep.subr.mxu0 0.0
    %3307 = vmatpush1.xpose.msra.mxu0 0.0
    %3308 = vmatprep.subr.mxu0 0.0
    %3309 = vmatpush1.xpose.msra.mxu0 0.0
    %3310 = vmatprep.subr.mxu0 0.0
    %3311 = vmatpush1.xpose.msra.mxu0 0.0
    %3312 = vmatprep.subr.mxu0 0.0
    %3313 = vmatpush1.xpose.msra.mxu0 0.0
    %3314 = vmatprep.subr.mxu0 0.0
    %3315 = vmatpush1.xpose.msra.mxu0 0.0
    %3316 = vmatprep.subr.mxu0 0.0
    %3317 = vmatpush1.xpose.msra.mxu0 0.0
    %3318 = vmatprep.subr.mxu0 0.0
    %3319 = vmatpush1.xpose.msra.mxu0 0.0
    %3320 = vmatprep.subr.mxu0 0.0
    %3321 = vmatpush1.xpose.msra.mxu0 0.0
    %3322 = vmatprep.subr.mxu0 0.0
    %3323 = vmatpush1.xpose.msra.mxu0 0.0
    %3324 = vmatprep.subr.mxu0 0.0
    %3325 = vmatpush1.xpose.msra.mxu0 0.0
    %3326 = vmatprep.subr.mxu0 0.0
    %3327 = vmatpush1.xpose.msra.mxu0 0.0
    %3328 = vmatprep.subr.mxu0 0.0
    %3329 = vmatpush1.xpose.msra.mxu0 0.0
    %3330 = vmatprep.subr.mxu0 0.0
    %3331 = vmatpush1.xpose.msra.mxu0 0.0
    %3332 = vmatprep.subr.mxu0 0.0
    %3333 = vmatpush1.xpose.msra.mxu0 0.0
    %3334 = vmatprep.subr.mxu0 0.0
    %3335 = vmatpush1.xpose.msra.mxu0 0.0
    %3336 = vmatprep.subr.mxu0 0.0
    %3337 = vmatpush1.xpose.msra.mxu0 0.0
    %3338 = vmatprep.subr.mxu0 0.0
    %3339 = vmatpush1.xpose.msra.mxu0 0.0
    %3340 = vmatprep.subr.mxu0 0.0
    %3341 = vmatpush1.xpose.msra.mxu0 0.0
    %3342 = vmatprep.subr.mxu0 0.0
    %3343 = vmatpush1.xpose.msra.mxu0 0.0
    %3344 = vmatprep.subr.mxu0 0.0
    %3345 = vmatpush1.xpose.msra.mxu0 0.0
    %3346 = vmatprep.subr.mxu0 0.0
    %3347 = vmatpush1.xpose.msra.mxu0 0.0
    %3348 = vmatprep.subr.mxu0 0.0
    %3349 = vmatpush1.xpose.msra.mxu0 0.0
    %3350 = vmatprep.mubr.f32.mxu0 0.0
    %3351 = vmatmul.mubr.f32.gmra.mrb[0].mxu0 %v3282
    %v3352 = vpop.f32.mrb[0].mxu0
    %v3353 = vadd.f32 0.0, %v3352
    %v3354 = vpop.f32.mrb[0].mxu0
    %3355 = vdwg.mxu0
    %3356 = vrot.lane.b32.xlu0 %v158, 96
    %v3357 = vpop.permute.xlu0 %3356
    %3358 = vrot.lane.b32.xlu0 %v158, 32
    %v3359 = vpop.permute.xlu0 %3358
    %v3360 = vsel %vm196, %v3357, 0
    %v3362 = vsel %vm196, %v3359, 0
    %3364 = vmatprep.subr.mxu0 0.0
    %3365 = vmatpush1.xpose.msra.mxu0 %v3362
    %3366 = vmatprep.subr.mxu0 0.0
    %3367 = vmatpush1.xpose.msra.mxu0 0.0
    %3368 = vmatprep.subr.mxu0 0.0
    %3369 = vmatpush1.xpose.msra.mxu0 0.0
    %3370 = vmatprep.subr.mxu0 0.0
    %3371 = vmatpush1.xpose.msra.mxu0 0.0
    %3372 = vmatprep.subr.mxu0 0.0
    %3373 = vmatpush1.xpose.msra.mxu0 0.0
    %3374 = vmatprep.subr.mxu0 0.0
    %3375 = vmatpush1.xpose.msra.mxu0 0.0
    %3376 = vmatprep.subr.mxu0 0.0
    %3377 = vmatpush1.xpose.msra.mxu0 0.0
    %3378 = vmatprep.subr.mxu0 0.0
    %3379 = vmatpush1.xpose.msra.mxu0 0.0
    %3380 = vmatprep.subr.mxu0 0.0
    %3381 = vmatpush1.xpose.msra.mxu0 0.0
    %3382 = vmatprep.subr.mxu0 0.0
    %3383 = vmatpush1.xpose.msra.mxu0 0.0
    %3384 = vmatprep.subr.mxu0 0.0
    %3385 = vmatpush1.xpose.msra.mxu0 0.0
    %3386 = vmatprep.subr.mxu0 0.0
    %3387 = vmatpush1.xpose.msra.mxu0 0.0
    %3388 = vmatprep.subr.mxu0 0.0
    %3389 = vmatpush1.xpose.msra.mxu0 0.0
    %3390 = vmatprep.subr.mxu0 0.0
    %3391 = vmatpush1.xpose.msra.mxu0 0.0
    %3392 = vmatprep.subr.mxu0 0.0
    %3393 = vmatpush1.xpose.msra.mxu0 0.0
    %3394 = vmatprep.subr.mxu0 0.0
    %3395 = vmatpush1.xpose.msra.mxu0 0.0
    %3396 = vmatprep.subr.mxu0 0.0
    %3397 = vmatpush1.xpose.msra.mxu0 0.0
    %3398 = vmatprep.subr.mxu0 0.0
    %3399 = vmatpush1.xpose.msra.mxu0 0.0
    %3400 = vmatprep.subr.mxu0 0.0
    %3401 = vmatpush1.xpose.msra.mxu0 0.0
    %3402 = vmatprep.subr.mxu0 0.0
    %3403 = vmatpush1.xpose.msra.mxu0 0.0
    %3404 = vmatprep.subr.mxu0 0.0
    %3405 = vmatpush1.xpose.msra.mxu0 0.0
    %3406 = vmatprep.subr.mxu0 0.0
    %3407 = vmatpush1.xpose.msra.mxu0 0.0
    %3408 = vmatprep.subr.mxu0 0.0
    %3409 = vmatpush1.xpose.msra.mxu0 0.0
    %3410 = vmatprep.subr.mxu0 0.0
    %3411 = vmatpush1.xpose.msra.mxu0 0.0
    %3412 = vmatprep.subr.mxu0 0.0
    %3413 = vmatpush1.xpose.msra.mxu0 0.0
    %3414 = vmatprep.subr.mxu0 0.0
    %3415 = vmatpush1.xpose.msra.mxu0 0.0
    %3416 = vmatprep.subr.mxu0 0.0
    %3417 = vmatpush1.xpose.msra.mxu0 0.0
    %3418 = vmatprep.subr.mxu0 0.0
    %3419 = vmatpush1.xpose.msra.mxu0 0.0
    %3420 = vmatprep.subr.mxu0 0.0
    %3421 = vmatpush1.xpose.msra.mxu0 0.0
    %3422 = vmatprep.subr.mxu0 0.0
    %3423 = vmatpush1.xpose.msra.mxu0 0.0
    %3424 = vmatprep.subr.mxu0 0.0
    %3425 = vmatpush1.xpose.msra.mxu0 0.0
    %3426 = vmatprep.subr.mxu0 0.0
    %3427 = vmatpush1.xpose.msra.mxu0 0.0
    %3428 = vmatprep.mubr.f32.mxu0 0.0
    %3429 = vmatmul.mubr.f32.gmra.mrb[0].mxu0 %v3360
    %v3430 = vpop.f32.mrb[0].mxu0
    %v3431 = vadd.f32 0.0, %v3430
    %v3432 = vpop.f32.mrb[0].mxu0
    %3433 = vdwg.mxu0
    %3434 = vrot.lane.b32.xlu0 %v164, 96
    %v3435 = vpop.permute.xlu0 %3434
    %3436 = vrot.lane.b32.xlu0 %v164, 32
    %v3437 = vpop.permute.xlu0 %3436
    %v3438 = vsel %vm196, %v3435, 0
    %v3440 = vsel %vm196, %v3437, 0
    %3442 = vmatprep.subr.mxu0 0.0
    %3443 = vmatpush1.xpose.msra.mxu0 %v3440
    %3444 = vmatprep.subr.mxu0 0.0
    %3445 = vmatpush1.xpose.msra.mxu0 0.0
    %3446 = vmatprep.subr.mxu0 0.0
    %3447 = vmatpush1.xpose.msra.mxu0 0.0
    %3448 = vmatprep.subr.mxu0 0.0
    %3449 = vmatpush1.xpose.msra.mxu0 0.0
    %3450 = vmatprep.subr.mxu0 0.0
    %3451 = vmatpush1.xpose.msra.mxu0 0.0
    %3452 = vmatprep.subr.mxu0 0.0
    %3453 = vmatpush1.xpose.msra.mxu0 0.0
    %3454 = vmatprep.subr.mxu0 0.0
    %3455 = vmatpush1.xpose.msra.mxu0 0.0
    %3456 = vmatprep.subr.mxu0 0.0
    %3457 = vmatpush1.xpose.msra.mxu0 0.0
    %3458 = vmatprep.subr.mxu0 0.0
    %3459 = vmatpush1.xpose.msra.mxu0 0.0
    %3460 = vmatprep.subr.mxu0 0.0
    %3461 = vmatpush1.xpose.msra.mxu0 0.0
    %3462 = vmatprep.subr.mxu0 0.0
    %3463 = vmatpush1.xpose.msra.mxu0 0.0
    %3464 = vmatprep.subr.mxu0 0.0
    %3465 = vmatpush1.xpose.msra.mxu0 0.0
    %3466 = vmatprep.subr.mxu0 0.0
    %3467 = vmatpush1.xpose.msra.mxu0 0.0
    %3468 = vmatprep.subr.mxu0 0.0
    %3469 = vmatpush1.xpose.msra.mxu0 0.0
    %3470 = vmatprep.subr.mxu0 0.0
    %3471 = vmatpush1.xpose.msra.mxu0 0.0
    %3472 = vmatprep.subr.mxu0 0.0
    %3473 = vmatpush1.xpose.msra.mxu0 0.0
    %3474 = vmatprep.subr.mxu0 0.0
    %3475 = vmatpush1.xpose.msra.mxu0 0.0
    %3476 = vmatprep.subr.mxu0 0.0
    %3477 = vmatpush1.xpose.msra.mxu0 0.0
    %3478 = vmatprep.subr.mxu0 0.0
    %3479 = vmatpush1.xpose.msra.mxu0 0.0
    %3480 = vmatprep.subr.mxu0 0.0
    %3481 = vmatpush1.xpose.msra.mxu0 0.0
    %3482 = vmatprep.subr.mxu0 0.0
    %3483 = vmatpush1.xpose.msra.mxu0 0.0
    %3484 = vmatprep.subr.mxu0 0.0
    %3485 = vmatpush1.xpose.msra.mxu0 0.0
    %3486 = vmatprep.subr.mxu0 0.0
    %3487 = vmatpush1.xpose.msra.mxu0 0.0
    %3488 = vmatprep.subr.mxu0 0.0
    %3489 = vmatpush1.xpose.msra.mxu0 0.0
    %3490 = vmatprep.subr.mxu0 0.0
    %3491 = vmatpush1.xpose.msra.mxu0 0.0
    %3492 = vmatprep.subr.mxu0 0.0
    %3493 = vmatpush1.xpose.msra.mxu0 0.0
    %3494 = vmatprep.subr.mxu0 0.0
    %3495 = vmatpush1.xpose.msra.mxu0 0.0
    %3496 = vmatprep.subr.mxu0 0.0
    %3497 = vmatpush1.xpose.msra.mxu0 0.0
    %3498 = vmatprep.subr.mxu0 0.0
    %3499 = vmatpush1.xpose.msra.mxu0 0.0
    %3500 = vmatprep.subr.mxu0 0.0
    %3501 = vmatpush1.xpose.msra.mxu0 0.0
    %3502 = vmatprep.subr.mxu0 0.0
    %3503 = vmatpush1.xpose.msra.mxu0 0.0
    %3504 = vmatprep.subr.mxu0 0.0
    %3505 = vmatpush1.xpose.msra.mxu0 0.0
    %3506 = vmatprep.mubr.f32.mxu0 0.0
    %3507 = vmatmul.mubr.f32.gmra.mrb[0].mxu0 %v3438
    %v3508 = vpop.f32.mrb[0].mxu0
    %v3509 = vadd.f32 0.0, %v3508
    %v3510 = vpop.f32.mrb[0].mxu0
    %3511 = vdwg.mxu0
    %3512 = vrot.lane.b32.xlu0 %v170, 96
    %v3513 = vpop.permute.xlu0 %3512
    %3514 = vrot.lane.b32.xlu0 %v170, 32
    %v3515 = vpop.permute.xlu0 %3514
    %v3516 = vsel %vm196, %v3513, 0
    %v3518 = vsel %vm196, %v3515, 0
    %3520 = vmatprep.subr.mxu0 0.0
    %3521 = vmatpush1.xpose.msra.mxu0 %v3518
    %3522 = vmatprep.subr.mxu0 0.0
    %3523 = vmatpush1.xpose.msra.mxu0 0.0
    %3524 = vmatprep.subr.mxu0 0.0
    %3525 = vmatpush1.xpose.msra.mxu0 0.0
    %3526 = vmatprep.subr.mxu0 0.0
    %3527 = vmatpush1.xpose.msra.mxu0 0.0
    %3528 = vmatprep.subr.mxu0 0.0
    %3529 = vmatpush1.xpose.msra.mxu0 0.0
    %3530 = vmatprep.subr.mxu0 0.0
    %3531 = vmatpush1.xpose.msra.mxu0 0.0
    %3532 = vmatprep.subr.mxu0 0.0
    %3533 = vmatpush1.xpose.msra.mxu0 0.0
    %3534 = vmatprep.subr.mxu0 0.0
    %3535 = vmatpush1.xpose.msra.mxu0 0.0
    %3536 = vmatprep.subr.mxu0 0.0
    %3537 = vmatpush1.xpose.msra.mxu0 0.0
    %3538 = vmatprep.subr.mxu0 0.0
    %3539 = vmatpush1.xpose.msra.mxu0 0.0
    %3540 = vmatprep.subr.mxu0 0.0
    %3541 = vmatpush1.xpose.msra.mxu0 0.0
    %3542 = vmatprep.subr.mxu0 0.0
    %3543 = vmatpush1.xpose.msra.mxu0 0.0
    %3544 = vmatprep.subr.mxu0 0.0
    %3545 = vmatpush1.xpose.msra.mxu0 0.0
    %3546 = vmatprep.subr.mxu0 0.0
    %3547 = vmatpush1.xpose.msra.mxu0 0.0
    %3548 = vmatprep.subr.mxu0 0.0
    %3549 = vmatpush1.xpose.msra.mxu0 0.0
    %3550 = vmatprep.subr.mxu0 0.0
    %3551 = vmatpush1.xpose.msra.mxu0 0.0
    %3552 = vmatprep.subr.mxu0 0.0
    %3553 = vmatpush1.xpose.msra.mxu0 0.0
    %3554 = vmatprep.subr.mxu0 0.0
    %3555 = vmatpush1.xpose.msra.mxu0 0.0
    %3556 = vmatprep.subr.mxu0 0.0
    %3557 = vmatpush1.xpose.msra.mxu0 0.0
    %3558 = vmatprep.subr.mxu0 0.0
    %3559 = vmatpush1.xpose.msra.mxu0 0.0
    %3560 = vmatprep.subr.mxu0 0.0
    %3561 = vmatpush1.xpose.msra.mxu0 0.0
    %3562 = vmatprep.subr.mxu0 0.0
    %3563 = vmatpush1.xpose.msra.mxu0 0.0
    %3564 = vmatprep.subr.mxu0 0.0
    %3565 = vmatpush1.xpose.msra.mxu0 0.0
    %3566 = vmatprep.subr.mxu0 0.0
    %3567 = vmatpush1.xpose.msra.mxu0 0.0
    %3568 = vmatprep.subr.mxu0 0.0
    %3569 = vmatpush1.xpose.msra.mxu0 0.0
    %3570 = vmatprep.subr.mxu0 0.0
    %3571 = vmatpush1.xpose.msra.mxu0 0.0
    %3572 = vmatprep.subr.mxu0 0.0
    %3573 = vmatpush1.xpose.msra.mxu0 0.0
    %3574 = vmatprep.subr.mxu0 0.0
    %3575 = vmatpush1.xpose.msra.mxu0 0.0
    %3576 = vmatprep.subr.mxu0 0.0
    %3577 = vmatpush1.xpose.msra.mxu0 0.0
    %3578 = vmatprep.subr.mxu0 0.0
    %3579 = vmatpush1.xpose.msra.mxu0 0.0
    %3580 = vmatprep.subr.mxu0 0.0
    %3581 = vmatpush1.xpose.msra.mxu0 0.0
    %3582 = vmatprep.subr.mxu0 0.0
    %3583 = vmatpush1.xpose.msra.mxu0 0.0
    %3584 = vmatprep.mubr.f32.mxu0 0.0
    %3585 = vmatmul.mubr.f32.gmra.mrb[0].mxu0 %v3516
    %v3586 = vpop.f32.mrb[0].mxu0
    %v3587 = vadd.f32 0.0, %v3586
    %v3588 = vpop.f32.mrb[0].mxu0
    %3589 = vdwg.mxu0
    %3590 = vrot.lane.b32.xlu0 %v176, 96
    %v3591 = vpop.permute.xlu0 %3590
    %3592 = vrot.lane.b32.xlu0 %v176, 32
    %v3593 = vpop.permute.xlu0 %3592
    %v3594 = vsel %vm196, %v3591, 0
    %v3596 = vsel %vm196, %v3593, 0
    %3598 = vmatprep.subr.mxu0 0.0
    %3599 = vmatpush1.xpose.msra.mxu0 %v3596
    %3600 = vmatprep.subr.mxu0 0.0
    %3601 = vmatpush1.xpose.msra.mxu0 0.0
    %3602 = vmatprep.subr.mxu0 0.0
    %3603 = vmatpush1.xpose.msra.mxu0 0.0
    %3604 = vmatprep.subr.mxu0 0.0
    %3605 = vmatpush1.xpose.msra.mxu0 0.0
    %3606 = vmatprep.subr.mxu0 0.0
    %3607 = vmatpush1.xpose.msra.mxu0 0.0
    %3608 = vmatprep.subr.mxu0 0.0
    %3609 = vmatpush1.xpose.msra.mxu0 0.0
    %3610 = vmatprep.subr.mxu0 0.0
    %3611 = vmatpush1.xpose.msra.mxu0 0.0
    %3612 = vmatprep.subr.mxu0 0.0
    %3613 = vmatpush1.xpose.msra.mxu0 0.0
    %3614 = vmatprep.subr.mxu0 0.0
    %3615 = vmatpush1.xpose.msra.mxu0 0.0
    %3616 = vmatprep.subr.mxu0 0.0
    %3617 = vmatpush1.xpose.msra.mxu0 0.0
    %3618 = vmatprep.subr.mxu0 0.0
    %3619 = vmatpush1.xpose.msra.mxu0 0.0
    %3620 = vmatprep.subr.mxu0 0.0
    %3621 = vmatpush1.xpose.msra.mxu0 0.0
    %3622 = vmatprep.subr.mxu0 0.0
    %3623 = vmatpush1.xpose.msra.mxu0 0.0
    %3624 = vmatprep.subr.mxu0 0.0
    %3625 = vmatpush1.xpose.msra.mxu0 0.0
    %3626 = vmatprep.subr.mxu0 0.0
    %3627 = vmatpush1.xpose.msra.mxu0 0.0
    %3628 = vmatprep.subr.mxu0 0.0
    %3629 = vmatpush1.xpose.msra.mxu0 0.0
    %3630 = vmatprep.subr.mxu0 0.0
    %3631 = vmatpush1.xpose.msra.mxu0 0.0
    %3632 = vmatprep.subr.mxu0 0.0
    %3633 = vmatpush1.xpose.msra.mxu0 0.0
    %3634 = vmatprep.subr.mxu0 0.0
    %3635 = vmatpush1.xpose.msra.mxu0 0.0
    %3636 = vmatprep.subr.mxu0 0.0
    %3637 = vmatpush1.xpose.msra.mxu0 0.0
    %3638 = vmatprep.subr.mxu0 0.0
    %3639 = vmatpush1.xpose.msra.mxu0 0.0
    %3640 = vmatprep.subr.mxu0 0.0
    %3641 = vmatpush1.xpose.msra.mxu0 0.0
    %3642 = vmatprep.subr.mxu0 0.0
    %3643 = vmatpush1.xpose.msra.mxu0 0.0
    %3644 = vmatprep.subr.mxu0 0.0
    %3645 = vmatpush1.xpose.msra.mxu0 0.0
    %3646 = vmatprep.subr.mxu0 0.0
    %3647 = vmatpush1.xpose.msra.mxu0 0.0
    %3648 = vmatprep.subr.mxu0 0.0
    %3649 = vmatpush1.xpose.msra.mxu0 0.0
    %3650 = vmatprep.subr.mxu0 0.0
    %3651 = vmatpush1.xpose.msra.mxu0 0.0
    %3652 = vmatprep.subr.mxu0 0.0
    %3653 = vmatpush1.xpose.msra.mxu0 0.0
    %3654 = vmatprep.subr.mxu0 0.0
    %3655 = vmatpush1.xpose.msra.mxu0 0.0
    %3656 = vmatprep.subr.mxu0 0.0
    %3657 = vmatpush1.xpose.msra.mxu0 0.0
    %3658 = vmatprep.subr.mxu0 0.0
    %3659 = vmatpush1.xpose.msra.mxu0 0.0
    %3660 = vmatprep.subr.mxu0 0.0
    %3661 = vmatpush1.xpose.msra.mxu0 0.0
    %3662 = vmatprep.mubr.f32.mxu0 0.0
    %3663 = vmatmul.mubr.f32.gmra.mrb[0].mxu0 %v3594
    %v3664 = vpop.f32.mrb[0].mxu0
    %v3665 = vadd.f32 0.0, %v3664
    %v3666 = vpop.f32.mrb[0].mxu0
    %3667 = vdwg.mxu0
    %3668 = vrot.lane.b32.xlu0 %v182, 96
    %v3669 = vpop.permute.xlu0 %3668
    %3670 = vrot.lane.b32.xlu0 %v182, 32
    %v3671 = vpop.permute.xlu0 %3670
    %v3672 = vsel %vm196, %v3669, 0
    %v3674 = vsel %vm196, %v3671, 0
    %3676 = vmatprep.subr.mxu0 0.0
    %3677 = vmatpush1.xpose.msra.mxu0 %v3674
    %3678 = vmatprep.subr.mxu0 0.0
    %3679 = vmatpush1.xpose.msra.mxu0 0.0
    %3680 = vmatprep.subr.mxu0 0.0
    %3681 = vmatpush1.xpose.msra.mxu0 0.0
    %3682 = vmatprep.subr.mxu0 0.0
    %3683 = vmatpush1.xpose.msra.mxu0 0.0
    %3684 = vmatprep.subr.mxu0 0.0
    %3685 = vmatpush1.xpose.msra.mxu0 0.0
    %3686 = vmatprep.subr.mxu0 0.0
    %3687 = vmatpush1.xpose.msra.mxu0 0.0
    %3688 = vmatprep.subr.mxu0 0.0
    %3689 = vmatpush1.xpose.msra.mxu0 0.0
    %3690 = vmatprep.subr.mxu0 0.0
    %3691 = vmatpush1.xpose.msra.mxu0 0.0
    %3692 = vmatprep.subr.mxu0 0.0
    %3693 = vmatpush1.xpose.msra.mxu0 0.0
    %3694 = vmatprep.subr.mxu0 0.0
    %3695 = vmatpush1.xpose.msra.mxu0 0.0
    %3696 = vmatprep.subr.mxu0 0.0
    %3697 = vmatpush1.xpose.msra.mxu0 0.0
    %3698 = vmatprep.subr.mxu0 0.0
    %3699 = vmatpush1.xpose.msra.mxu0 0.0
    %3700 = vmatprep.subr.mxu0 0.0
    %3701 = vmatpush1.xpose.msra.mxu0 0.0
    %3702 = vmatprep.subr.mxu0 0.0
    %3703 = vmatpush1.xpose.msra.mxu0 0.0
    %3704 = vmatprep.subr.mxu0 0.0
    %3705 = vmatpush1.xpose.msra.mxu0 0.0
    %3706 = vmatprep.subr.mxu0 0.0
    %3707 = vmatpush1.xpose.msra.mxu0 0.0
    %3708 = vmatprep.subr.mxu0 0.0
    %3709 = vmatpush1.xpose.msra.mxu0 0.0
    %3710 = vmatprep.subr.mxu0 0.0
    %3711 = vmatpush1.xpose.msra.mxu0 0.0
    %3712 = vmatprep.subr.mxu0 0.0
    %3713 = vmatpush1.xpose.msra.mxu0 0.0
    %3714 = vmatprep.subr.mxu0 0.0
    %3715 = vmatpush1.xpose.msra.mxu0 0.0
    %3716 = vmatprep.subr.mxu0 0.0
    %3717 = vmatpush1.xpose.msra.mxu0 0.0
    %3718 = vmatprep.subr.mxu0 0.0
    %3719 = vmatpush1.xpose.msra.mxu0 0.0
    %3720 = vmatprep.subr.mxu0 0.0
    %3721 = vmatpush1.xpose.msra.mxu0 0.0
    %3722 = vmatprep.subr.mxu0 0.0
    %3723 = vmatpush1.xpose.msra.mxu0 0.0
    %3724 = vmatprep.subr.mxu0 0.0
    %3725 = vmatpush1.xpose.msra.mxu0 0.0
    %3726 = vmatprep.subr.mxu0 0.0
    %3727 = vmatpush1.xpose.msra.mxu0 0.0
    %3728 = vmatprep.subr.mxu0 0.0
    %3729 = vmatpush1.xpose.msra.mxu0 0.0
    %3730 = vmatprep.subr.mxu0 0.0
    %3731 = vmatpush1.xpose.msra.mxu0 0.0
    %3732 = vmatprep.subr.mxu0 0.0
    %3733 = vmatpush1.xpose.msra.mxu0 0.0
    %3734 = vmatprep.subr.mxu0 0.0
    %3735 = vmatpush1.xpose.msra.mxu0 0.0
    %3736 = vmatprep.subr.mxu0 0.0
    %3737 = vmatpush1.xpose.msra.mxu0 0.0
    %3738 = vmatprep.subr.mxu0 0.0
    %3739 = vmatpush1.xpose.msra.mxu0 0.0
    %3740 = vmatprep.mubr.f32.mxu0 0.0
    %3741 = vmatmul.mubr.f32.gmra.mrb[0].mxu0 %v3672
    %v3742 = vpop.f32.mrb[0].mxu0
    %v3743 = vadd.f32 0.0, %v3742
    %v3744 = vpop.f32.mrb[0].mxu0
    %3745 = vdwg.mxu0
    %v3746 = vmul.f32 %v3197, 0.25
    %v3747 = vmul.f32 %v3275, 0.25
    %v3748 = vmul.f32 %v3353, 0.25
    %v3749 = vmul.f32 %v3431, 0.25
    %v3750 = vmul.f32 %v3509, 0.25
    %v3751 = vmul.f32 %v3587, 0.25
    %v3752 = vmul.f32 %v3665, 0.25
    %v3753 = vmul.f32 %v3743, 0.25
    %v3754 = vsel %vm818, %v3746, -inf
    %3755 = vmax.xlane.f32.xlu0 %v3754
    %v3756 = vpop.xlane.xlu0 %3755
    %v3757 = vsel %vm818, %v3747, -inf
    %3758 = vmax.xlane.f32.xlu0 %v3757
    %v3759 = vpop.xlane.xlu0 %3758
    %v3760 = vsel %vm818, %v3748, -inf
    %3761 = vmax.xlane.f32.xlu0 %v3760
    %v3762 = vpop.xlane.xlu0 %3761
    %v3763 = vsel %vm818, %v3749, -inf
    %3764 = vmax.xlane.f32.xlu0 %v3763
    %v3765 = vpop.xlane.xlu0 %3764
    %v3766 = vsel %vm818, %v3750, -inf
    %3767 = vmax.xlane.f32.xlu0 %v3766
    %v3768 = vpop.xlane.xlu0 %3767
    %v3769 = vsel %vm818, %v3751, -inf
    %3770 = vmax.xlane.f32.xlu0 %v3769
    %v3771 = vpop.xlane.xlu0 %3770
    %v3772 = vsel %vm818, %v3752, -inf
    %3773 = vmax.xlane.f32.xlu0 %v3772
    %v3774 = vpop.xlane.xlu0 %3773
    %v3775 = vsel %vm818, %v3753, -inf
    %3776 = vmax.xlane.f32.xlu0 %v3775
    %v3777 = vpop.xlane.xlu0 %3776
    %v3778 = vsub.f32 %v3746, %v3756
    %v3779 = vsub.f32 %v3747, %v3759
    %v3780 = vsub.f32 %v3748, %v3762
    %v3781 = vsub.f32 %v3749, %v3765
    %v3782 = vsub.f32 %v3750, %v3768
    %v3783 = vsub.f32 %v3751, %v3771
    %v3784 = vsub.f32 %v3752, %v3774
    %v3785 = vsub.f32 %v3753, %v3777
    %v3786 = vmul.f32 %v3778, 1.442695
    %v3787 = vpow.pop %v3786
    %v3788 = vmul.f32 %v3779, 1.442695
    %v3789 = vpow.pop %v3788
    %v3790 = vmul.f32 %v3780, 1.442695
    %v3791 = vpow.pop %v3790
    %v3792 = vmul.f32 %v3781, 1.442695
    %v3793 = vpow.pop %v3792
    %v3794 = vmul.f32 %v3782, 1.442695
    %v3795 = vpow.pop %v3794
    %v3796 = vmul.f32 %v3783, 1.442695
    %v3797 = vpow.pop %v3796
    %v3798 = vmul.f32 %v3784, 1.442695
    %v3799 = vpow.pop %v3798
    %v3800 = vmul.f32 %v3785, 1.442695
    %v3801 = vpow.pop %v3800
    %v3802 = vsel %vm818, %v3787, 0.0
    %3803 = vadd.xlane.f32.xlu0 %v3802
    %v3804 = vpop.xlane.xlu0 %3803
    %v3805 = vsel %vm818, %v3789, 0.0
    %3806 = vadd.xlane.f32.xlu0 %v3805
    %v3807 = vpop.xlane.xlu0 %3806
    %v3808 = vsel %vm818, %v3791, 0.0
    %3809 = vadd.xlane.f32.xlu0 %v3808
    %v3810 = vpop.xlane.xlu0 %3809
    %v3811 = vsel %vm818, %v3793, 0.0
    %3812 = vadd.xlane.f32.xlu0 %v3811
    %v3813 = vpop.xlane.xlu0 %3812
    %v3814 = vsel %vm818, %v3795, 0.0
    %3815 = vadd.xlane.f32.xlu0 %v3814
    %v3816 = vpop.xlane.xlu0 %3815
    %v3817 = vsel %vm818, %v3797, 0.0
    %3818 = vadd.xlane.f32.xlu0 %v3817
    %v3819 = vpop.xlane.xlu0 %3818
    %v3820 = vsel %vm818, %v3799, 0.0
    %3821 = vadd.xlane.f32.xlu0 %v3820
    %v3822 = vpop.xlane.xlu0 %3821
    %v3823 = vsel %vm818, %v3801, 0.0
    %3824 = vadd.xlane.f32.xlu0 %v3823
    %v3825 = vpop.xlane.xlu0 %3824
    %3826 = vrot.lane.b32.xlu0 %v142, 96
    %v3827 = vpop.permute.xlu0 %3826
    %v3830 = vsel %vm818, %v3787, 0
    %3832 = vmatprep.subr.mxu0 0.0
    %3833 = vmatpush1.msra.mxu0 %v3827
    %3834 = vmatprep.subr.mxu0 0.0
    %3835 = vmatpush1.msra.mxu0 0.0
    %3836 = vmatprep.subr.mxu0 0.0
    %3837 = vmatpush1.msra.mxu0 0.0
    %3838 = vmatprep.subr.mxu0 0.0
    %3839 = vmatpush1.msra.mxu0 0.0
    %3840 = vmatprep.subr.mxu0 0.0
    %3841 = vmatpush1.msra.mxu0 0.0
    %3842 = vmatprep.subr.mxu0 0.0
    %3843 = vmatpush1.msra.mxu0 0.0
    %3844 = vmatprep.subr.mxu0 0.0
    %3845 = vmatpush1.msra.mxu0 0.0
    %3846 = vmatprep.subr.mxu0 0.0
    %3847 = vmatpush1.msra.mxu0 0.0
    %3848 = vmatprep.subr.mxu0 0.0
    %3849 = vmatpush1.msra.mxu0 0.0
    %3850 = vmatprep.subr.mxu0 0.0
    %3851 = vmatpush1.msra.mxu0 0.0
    %3852 = vmatprep.subr.mxu0 0.0
    %3853 = vmatpush1.msra.mxu0 0.0
    %3854 = vmatprep.subr.mxu0 0.0
    %3855 = vmatpush1.msra.mxu0 0.0
    %3856 = vmatprep.subr.mxu0 0.0
    %3857 = vmatpush1.msra.mxu0 0.0
    %3858 = vmatprep.subr.mxu0 0.0
    %3859 = vmatpush1.msra.mxu0 0.0
    %3860 = vmatprep.subr.mxu0 0.0
    %3861 = vmatpush1.msra.mxu0 0.0
    %3862 = vmatprep.subr.mxu0 0.0
    %3863 = vmatpush1.msra.mxu0 0.0
    %3864 = vmatprep.subr.mxu0 0.0
    %3865 = vmatpush1.msra.mxu0 0.0
    %3866 = vmatprep.subr.mxu0 0.0
    %3867 = vmatpush1.msra.mxu0 0.0
    %3868 = vmatprep.subr.mxu0 0.0
    %3869 = vmatpush1.msra.mxu0 0.0
    %3870 = vmatprep.subr.mxu0 0.0
    %3871 = vmatpush1.msra.mxu0 0.0
    %3872 = vmatprep.subr.mxu0 0.0
    %3873 = vmatpush1.msra.mxu0 0.0
    %3874 = vmatprep.subr.mxu0 0.0
    %3875 = vmatpush1.msra.mxu0 0.0
    %3876 = vmatprep.subr.mxu0 0.0
    %3877 = vmatpush1.msra.mxu0 0.0
    %3878 = vmatprep.subr.mxu0 0.0
    %3879 = vmatpush1.msra.mxu0 0.0
    %3880 = vmatprep.subr.mxu0 0.0
    %3881 = vmatpush1.msra.mxu0 0.0
    %3882 = vmatprep.subr.mxu0 0.0
    %3883 = vmatpush1.msra.mxu0 0.0
    %3884 = vmatprep.subr.mxu0 0.0
    %3885 = vmatpush1.msra.mxu0 0.0
    %3886 = vmatprep.subr.mxu0 0.0
    %3887 = vmatpush1.msra.mxu0 0.0
    %3888 = vmatprep.subr.mxu0 0.0
    %3889 = vmatpush1.msra.mxu0 0.0
    %3890 = vmatprep.subr.mxu0 0.0
    %3891 = vmatpush1.msra.mxu0 0.0
    %3892 = vmatprep.subr.mxu0 0.0
    %3893 = vmatpush1.msra.mxu0 0.0
    %3894 = vmatprep.subr.mxu0 0.0
    %3895 = vmatpush1.msra.mxu0 0.0
    %3896 = vmatprep.mubr.f32.mxu0 0.0
    %3897 = vmatmul.mubr.f32.gmra.mrb[0].mxu0 %v3830
    %v3898 = vpop.f32.mrb[0].mxu0
    %v3899 = vadd.f32 0.0, %v3898
    %v3900 = vpop.f32.mrb[0].mxu0
    %3901 = vdwg.mxu0
    %3902 = vrot.lane.b32.xlu0 %v148, 96
    %v3903 = vpop.permute.xlu0 %3902
    %v3906 = vsel %vm818, %v3789, 0
    %3908 = vmatprep.subr.mxu0 0.0
    %3909 = vmatpush1.msra.mxu0 %v3903
    %3910 = vmatprep.subr.mxu0 0.0
    %3911 = vmatpush1.msra.mxu0 0.0
    %3912 = vmatprep.subr.mxu0 0.0
    %3913 = vmatpush1.msra.mxu0 0.0
    %3914 = vmatprep.subr.mxu0 0.0
    %3915 = vmatpush1.msra.mxu0 0.0
    %3916 = vmatprep.subr.mxu0 0.0
    %3917 = vmatpush1.msra.mxu0 0.0
    %3918 = vmatprep.subr.mxu0 0.0
    %3919 = vmatpush1.msra.mxu0 0.0
    %3920 = vmatprep.subr.mxu0 0.0
    %3921 = vmatpush1.msra.mxu0 0.0
    %3922 = vmatprep.subr.mxu0 0.0
    %3923 = vmatpush1.msra.mxu0 0.0
    %3924 = vmatprep.subr.mxu0 0.0
    %3925 = vmatpush1.msra.mxu0 0.0
    %3926 = vmatprep.subr.mxu0 0.0
    %3927 = vmatpush1.msra.mxu0 0.0
    %3928 = vmatprep.subr.mxu0 0.0
    %3929 = vmatpush1.msra.mxu0 0.0
    %3930 = vmatprep.subr.mxu0 0.0
    %3931 = vmatpush1.msra.mxu0 0.0
    %3932 = vmatprep.subr.mxu0 0.0
    %3933 = vmatpush1.msra.mxu0 0.0
    %3934 = vmatprep.subr.mxu0 0.0
    %3935 = vmatpush1.msra.mxu0 0.0
    %3936 = vmatprep.subr.mxu0 0.0
    %3937 = vmatpush1.msra.mxu0 0.0
    %3938 = vmatprep.subr.mxu0 0.0
    %3939 = vmatpush1.msra.mxu0 0.0
    %3940 = vmatprep.subr.mxu0 0.0
    %3941 = vmatpush1.msra.mxu0 0.0
    %3942 = vmatprep.subr.mxu0 0.0
    %3943 = vmatpush1.msra.mxu0 0.0
    %3944 = vmatprep.subr.mxu0 0.0
    %3945 = vmatpush1.msra.mxu0 0.0
    %3946 = vmatprep.subr.mxu0 0.0
    %3947 = vmatpush1.msra.mxu0 0.0
    %3948 = vmatprep.subr.mxu0 0.0
    %3949 = vmatpush1.msra.mxu0 0.0
    %3950 = vmatprep.subr.mxu0 0.0
    %3951 = vmatpush1.msra.mxu0 0.0
    %3952 = vmatprep.subr.mxu0 0.0
    %3953 = vmatpush1.msra.mxu0 0.0
    %3954 = vmatprep.subr.mxu0 0.0
    %3955 = vmatpush1.msra.mxu0 0.0
    %3956 = vmatprep.subr.mxu0 0.0
    %3957 = vmatpush1.msra.mxu0 0.0
    %3958 = vmatprep.subr.mxu0 0.0
    %3959 = vmatpush1.msra.mxu0 0.0
    %3960 = vmatprep.subr.mxu0 0.0
    %3961 = vmatpush1.msra.mxu0 0.0
    %3962 = vmatprep.subr.mxu0 0.0
    %3963 = vmatpush1.msra.mxu0 0.0
    %3964 = vmatprep.subr.mxu0 0.0
    %3965 = vmatpush1.msra.mxu0 0.0
    %3966 = vmatprep.subr.mxu0 0.0
    %3967 = vmatpush1.msra.mxu0 0.0
    %3968 = vmatprep.subr.mxu0 0.0
    %3969 = vmatpush1.msra.mxu0 0.0
    %3970 = vmatprep.subr.mxu0 0.0
    %3971 = vmatpush1.msra.mxu0 0.0
    %3972 = vmatprep.mubr.f32.mxu0 0.0
    %3973 = vmatmul.mubr.f32.gmra.mrb[0].mxu0 %v3906
    %v3974 = vpop.f32.mrb[0].mxu0
    %v3975 = vadd.f32 0.0, %v3974
    %v3976 = vpop.f32.mrb[0].mxu0
    %3977 = vdwg.mxu0
    %3978 = vrot.lane.b32.xlu0 %v154, 96
    %v3979 = vpop.permute.xlu0 %3978
    %v3982 = vsel %vm818, %v3791, 0
    %3984 = vmatprep.subr.mxu0 0.0
    %3985 = vmatpush1.msra.mxu0 %v3979
    %3986 = vmatprep.subr.mxu0 0.0
    %3987 = vmatpush1.msra.mxu0 0.0
    %3988 = vmatprep.subr.mxu0 0.0
    %3989 = vmatpush1.msra.mxu0 0.0
    %3990 = vmatprep.subr.mxu0 0.0
    %3991 = vmatpush1.msra.mxu0 0.0
    %3992 = vmatprep.subr.mxu0 0.0
    %3993 = vmatpush1.msra.mxu0 0.0
    %3994 = vmatprep.subr.mxu0 0.0
    %3995 = vmatpush1.msra.mxu0 0.0
    %3996 = vmatprep.subr.mxu0 0.0
    %3997 = vmatpush1.msra.mxu0 0.0
    %3998 = vmatprep.subr.mxu0 0.0
    %3999 = vmatpush1.msra.mxu0 0.0
    %4000 = vmatprep.subr.mxu0 0.0
    %4001 = vmatpush1.msra.mxu0 0.0
    %4002 = vmatprep.subr.mxu0 0.0
    %4003 = vmatpush1.msra.mxu0 0.0
    %4004 = vmatprep.subr.mxu0 0.0
    %4005 = vmatpush1.msra.mxu0 0.0
    %4006 = vmatprep.subr.mxu0 0.0
    %4007 = vmatpush1.msra.mxu0 0.0
    %4008 = vmatprep.subr.mxu0 0.0
    %4009 = vmatpush1.msra.mxu0 0.0
    %4010 = vmatprep.subr.mxu0 0.0
    %4011 = vmatpush1.msra.mxu0 0.0
    %4012 = vmatprep.subr.mxu0 0.0
    %4013 = vmatpush1.msra.mxu0 0.0
    %4014 = vmatprep.subr.mxu0 0.0
    %4015 = vmatpush1.msra.mxu0 0.0
    %4016 = vmatprep.subr.mxu0 0.0
    %4017 = vmatpush1.msra.mxu0 0.0
    %4018 = vmatprep.subr.mxu0 0.0
    %4019 = vmatpush1.msra.mxu0 0.0
    %4020 = vmatprep.subr.mxu0 0.0
    %4021 = vmatpush1.msra.mxu0 0.0
    %4022 = vmatprep.subr.mxu0 0.0
    %4023 = vmatpush1.msra.mxu0 0.0
    %4024 = vmatprep.subr.mxu0 0.0
    %4025 = vmatpush1.msra.mxu0 0.0
    %4026 = vmatprep.subr.mxu0 0.0
    %4027 = vmatpush1.msra.mxu0 0.0
    %4028 = vmatprep.subr.mxu0 0.0
    %4029 = vmatpush1.msra.mxu0 0.0
    %4030 = vmatprep.subr.mxu0 0.0
    %4031 = vmatpush1.msra.mxu0 0.0
    %4032 = vmatprep.subr.mxu0 0.0
    %4033 = vmatpush1.msra.mxu0 0.0
    %4034 = vmatprep.subr.mxu0 0.0
    %4035 = vmatpush1.msra.mxu0 0.0
    %4036 = vmatprep.subr.mxu0 0.0
    %4037 = vmatpush1.msra.mxu0 0.0
    %4038 = vmatprep.subr.mxu0 0.0
    %4039 = vmatpush1.msra.mxu0 0.0
    %4040 = vmatprep.subr.mxu0 0.0
    %4041 = vmatpush1.msra.mxu0 0.0
    %4042 = vmatprep.subr.mxu0 0.0
    %4043 = vmatpush1.msra.mxu0 0.0
    %4044 = vmatprep.subr.mxu0 0.0
    %4045 = vmatpush1.msra.mxu0 0.0
    %4046 = vmatprep.subr.mxu0 0.0
    %4047 = vmatpush1.msra.mxu0 0.0
    %4048 = vmatprep.mubr.f32.mxu0 0.0
    %4049 = vmatmul.mubr.f32.gmra.mrb[0].mxu0 %v3982
    %v4050 = vpop.f32.mrb[0].mxu0
    %v4051 = vadd.f32 0.0, %v4050
    %v4052 = vpop.f32.mrb[0].mxu0
    %4053 = vdwg.mxu0
    %4054 = vrot.lane.b32.xlu0 %v160, 96
    %v4055 = vpop.permute.xlu0 %4054
    %v4058 = vsel %vm818, %v3793, 0
    %4060 = vmatprep.subr.mxu0 0.0
    %4061 = vmatpush1.msra.mxu0 %v4055
    %4062 = vmatprep.subr.mxu0 0.0
    %4063 = vmatpush1.msra.mxu0 0.0
    %4064 = vmatprep.subr.mxu0 0.0
    %4065 = vmatpush1.msra.mxu0 0.0
    %4066 = vmatprep.subr.mxu0 0.0
    %4067 = vmatpush1.msra.mxu0 0.0
    %4068 = vmatprep.subr.mxu0 0.0
    %4069 = vmatpush1.msra.mxu0 0.0
    %4070 = vmatprep.subr.mxu0 0.0
    %4071 = vmatpush1.msra.mxu0 0.0
    %4072 = vmatprep.subr.mxu0 0.0
    %4073 = vmatpush1.msra.mxu0 0.0
    %4074 = vmatprep.subr.mxu0 0.0
    %4075 = vmatpush1.msra.mxu0 0.0
    %4076 = vmatprep.subr.mxu0 0.0
    %4077 = vmatpush1.msra.mxu0 0.0
    %4078 = vmatprep.subr.mxu0 0.0
    %4079 = vmatpush1.msra.mxu0 0.0
    %4080 = vmatprep.subr.mxu0 0.0
    %4081 = vmatpush1.msra.mxu0 0.0
    %4082 = vmatprep.subr.mxu0 0.0
    %4083 = vmatpush1.msra.mxu0 0.0
    %4084 = vmatprep.subr.mxu0 0.0
    %4085 = vmatpush1.msra.mxu0 0.0
    %4086 = vmatprep.subr.mxu0 0.0
    %4087 = vmatpush1.msra.mxu0 0.0
    %4088 = vmatprep.subr.mxu0 0.0
    %4089 = vmatpush1.msra.mxu0 0.0
    %4090 = vmatprep.subr.mxu0 0.0
    %4091 = vmatpush1.msra.mxu0 0.0
    %4092 = vmatprep.subr.mxu0 0.0
    %4093 = vmatpush1.msra.mxu0 0.0
    %4094 = vmatprep.subr.mxu0 0.0
    %4095 = vmatpush1.msra.mxu0 0.0
    %4096 = vmatprep.subr.mxu0 0.0
    %4097 = vmatpush1.msra.mxu0 0.0
    %4098 = vmatprep.subr.mxu0 0.0
    %4099 = vmatpush1.msra.mxu0 0.0
    %4100 = vmatprep.subr.mxu0 0.0
    %4101 = vmatpush1.msra.mxu0 0.0
    %4102 = vmatprep.subr.mxu0 0.0
    %4103 = vmatpush1.msra.mxu0 0.0
    %4104 = vmatprep.subr.mxu0 0.0
    %4105 = vmatpush1.msra.mxu0 0.0
    %4106 = vmatprep.subr.mxu0 0.0
    %4107 = vmatpush1.msra.mxu0 0.0
    %4108 = vmatprep.subr.mxu0 0.0
    %4109 = vmatpush1.msra.mxu0 0.0
    %4110 = vmatprep.subr.mxu0 0.0
    %4111 = vmatpush1.msra.mxu0 0.0
    %4112 = vmatprep.subr.mxu0 0.0
    %4113 = vmatpush1.msra.mxu0 0.0
    %4114 = vmatprep.subr.mxu0 0.0
    %4115 = vmatpush1.msra.mxu0 0.0
    %4116 = vmatprep.subr.mxu0 0.0
    %4117 = vmatpush1.msra.mxu0 0.0
    %4118 = vmatprep.subr.mxu0 0.0
    %4119 = vmatpush1.msra.mxu0 0.0
    %4120 = vmatprep.subr.mxu0 0.0
    %4121 = vmatpush1.msra.mxu0 0.0
    %4122 = vmatprep.subr.mxu0 0.0
    %4123 = vmatpush1.msra.mxu0 0.0
    %4124 = vmatprep.mubr.f32.mxu0 0.0
    %4125 = vmatmul.mubr.f32.gmra.mrb[0].mxu0 %v4058
    %v4126 = vpop.f32.mrb[0].mxu0
    %v4127 = vadd.f32 0.0, %v4126
    %v4128 = vpop.f32.mrb[0].mxu0
    %4129 = vdwg.mxu0
    %4130 = vrot.lane.b32.xlu0 %v166, 96
    %v4131 = vpop.permute.xlu0 %4130
    %v4134 = vsel %vm818, %v3795, 0
    %4136 = vmatprep.subr.mxu0 0.0
    %4137 = vmatpush1.msra.mxu0 %v4131
    %4138 = vmatprep.subr.mxu0 0.0
    %4139 = vmatpush1.msra.mxu0 0.0
    %4140 = vmatprep.subr.mxu0 0.0
    %4141 = vmatpush1.msra.mxu0 0.0
    %4142 = vmatprep.subr.mxu0 0.0
    %4143 = vmatpush1.msra.mxu0 0.0
    %4144 = vmatprep.subr.mxu0 0.0
    %4145 = vmatpush1.msra.mxu0 0.0
    %4146 = vmatprep.subr.mxu0 0.0
    %4147 = vmatpush1.msra.mxu0 0.0
    %4148 = vmatprep.subr.mxu0 0.0
    %4149 = vmatpush1.msra.mxu0 0.0
    %4150 = vmatprep.subr.mxu0 0.0
    %4151 = vmatpush1.msra.mxu0 0.0
    %4152 = vmatprep.subr.mxu0 0.0
    %4153 = vmatpush1.msra.mxu0 0.0
    %4154 = vmatprep.subr.mxu0 0.0
    %4155 = vmatpush1.msra.mxu0 0.0
    %4156 = vmatprep.subr.mxu0 0.0
    %4157 = vmatpush1.msra.mxu0 0.0
    %4158 = vmatprep.subr.mxu0 0.0
    %4159 = vmatpush1.msra.mxu0 0.0
    %4160 = vmatprep.subr.mxu0 0.0
    %4161 = vmatpush1.msra.mxu0 0.0
    %4162 = vmatprep.subr.mxu0 0.0
    %4163 = vmatpush1.msra.mxu0 0.0
    %4164 = vmatprep.subr.mxu0 0.0
    %4165 = vmatpush1.msra.mxu0 0.0
    %4166 = vmatprep.subr.mxu0 0.0
    %4167 = vmatpush1.msra.mxu0 0.0
    %4168 = vmatprep.subr.mxu0 0.0
    %4169 = vmatpush1.msra.mxu0 0.0
    %4170 = vmatprep.subr.mxu0 0.0
    %4171 = vmatpush1.msra.mxu0 0.0
    %4172 = vmatprep.subr.mxu0 0.0
    %4173 = vmatpush1.msra.mxu0 0.0
    %4174 = vmatprep.subr.mxu0 0.0
    %4175 = vmatpush1.msra.mxu0 0.0
    %4176 = vmatprep.subr.mxu0 0.0
    %4177 = vmatpush1.msra.mxu0 0.0
    %4178 = vmatprep.subr.mxu0 0.0
    %4179 = vmatpush1.msra.mxu0 0.0
    %4180 = vmatprep.subr.mxu0 0.0
    %4181 = vmatpush1.msra.mxu0 0.0
    %4182 = vmatprep.subr.mxu0 0.0
    %4183 = vmatpush1.msra.mxu0 0.0
    %4184 = vmatprep.subr.mxu0 0.0
    %4185 = vmatpush1.msra.mxu0 0.0
    %4186 = vmatprep.subr.mxu0 0.0
    %4187 = vmatpush1.msra.mxu0 0.0
    %4188 = vmatprep.subr.mxu0 0.0
    %4189 = vmatpush1.msra.mxu0 0.0
    %4190 = vmatprep.subr.mxu0 0.0
    %4191 = vmatpush1.msra.mxu0 0.0
    %4192 = vmatprep.subr.mxu0 0.0
    %4193 = vmatpush1.msra.mxu0 0.0
    %4194 = vmatprep.subr.mxu0 0.0
    %4195 = vmatpush1.msra.mxu0 0.0
    %4196 = vmatprep.subr.mxu0 0.0
    %4197 = vmatpush1.msra.mxu0 0.0
    %4198 = vmatprep.subr.mxu0 0.0
    %4199 = vmatpush1.msra.mxu0 0.0
    %4200 = vmatprep.mubr.f32.mxu0 0.0
    %4201 = vmatmul.mubr.f32.gmra.mrb[0].mxu0 %v4134
    %v4202 = vpop.f32.mrb[0].mxu0
    %v4203 = vadd.f32 0.0, %v4202
    %v4204 = vpop.f32.mrb[0].mxu0
    %4205 = vdwg.mxu0
    %4206 = vrot.lane.b32.xlu0 %v172, 96
    %v4207 = vpop.permute.xlu0 %4206
    %v4210 = vsel %vm818, %v3797, 0
    %4212 = vmatprep.subr.mxu0 0.0
    %4213 = vmatpush1.msra.mxu0 %v4207
    %4214 = vmatprep.subr.mxu0 0.0
    %4215 = vmatpush1.msra.mxu0 0.0
    %4216 = vmatprep.subr.mxu0 0.0
    %4217 = vmatpush1.msra.mxu0 0.0
    %4218 = vmatprep.subr.mxu0 0.0
    %4219 = vmatpush1.msra.mxu0 0.0
    %4220 = vmatprep.subr.mxu0 0.0
    %4221 = vmatpush1.msra.mxu0 0.0
    %4222 = vmatprep.subr.mxu0 0.0
    %4223 = vmatpush1.msra.mxu0 0.0
    %4224 = vmatprep.subr.mxu0 0.0
    %4225 = vmatpush1.msra.mxu0 0.0
    %4226 = vmatprep.subr.mxu0 0.0
    %4227 = vmatpush1.msra.mxu0 0.0
    %4228 = vmatprep.subr.mxu0 0.0
    %4229 = vmatpush1.msra.mxu0 0.0
    %4230 = vmatprep.subr.mxu0 0.0
    %4231 = vmatpush1.msra.mxu0 0.0
    %4232 = vmatprep.subr.mxu0 0.0
    %4233 = vmatpush1.msra.mxu0 0.0
    %4234 = vmatprep.subr.mxu0 0.0
    %4235 = vmatpush1.msra.mxu0 0.0
    %4236 = vmatprep.subr.mxu0 0.0
    %4237 = vmatpush1.msra.mxu0 0.0
    %4238 = vmatprep.subr.mxu0 0.0
    %4239 = vmatpush1.msra.mxu0 0.0
    %4240 = vmatprep.subr.mxu0 0.0
    %4241 = vmatpush1.msra.mxu0 0.0
    %4242 = vmatprep.subr.mxu0 0.0
    %4243 = vmatpush1.msra.mxu0 0.0
    %4244 = vmatprep.subr.mxu0 0.0
    %4245 = vmatpush1.msra.mxu0 0.0
    %4246 = vmatprep.subr.mxu0 0.0
    %4247 = vmatpush1.msra.mxu0 0.0
    %4248 = vmatprep.subr.mxu0 0.0
    %4249 = vmatpush1.msra.mxu0 0.0
    %4250 = vmatprep.subr.mxu0 0.0
    %4251 = vmatpush1.msra.mxu0 0.0
    %4252 = vmatprep.subr.mxu0 0.0
    %4253 = vmatpush1.msra.mxu0 0.0
    %4254 = vmatprep.subr.mxu0 0.0
    %4255 = vmatpush1.msra.mxu0 0.0
    %4256 = vmatprep.subr.mxu0 0.0
    %4257 = vmatpush1.msra.mxu0 0.0
    %4258 = vmatprep.subr.mxu0 0.0
    %4259 = vmatpush1.msra.mxu0 0.0
    %4260 = vmatprep.subr.mxu0 0.0
    %4261 = vmatpush1.msra.mxu0 0.0
    %4262 = vmatprep.subr.mxu0 0.0
    %4263 = vmatpush1.msra.mxu0 0.0
    %4264 = vmatprep.subr.mxu0 0.0
    %4265 = vmatpush1.msra.mxu0 0.0
    %4266 = vmatprep.subr.mxu0 0.0
    %4267 = vmatpush1.msra.mxu0 0.0
    %4268 = vmatprep.subr.mxu0 0.0
    %4269 = vmatpush1.msra.mxu0 0.0
    %4270 = vmatprep.subr.mxu0 0.0
    %4271 = vmatpush1.msra.mxu0 0.0
    %4272 = vmatprep.subr.mxu0 0.0
    %4273 = vmatpush1.msra.mxu0 0.0
    %4274 = vmatprep.subr.mxu0 0.0
    %4275 = vmatpush1.msra.mxu0 0.0
    %4276 = vmatprep.mubr.f32.mxu0 0.0
    %4277 = vmatmul.mubr.f32.gmra.mrb[0].mxu0 %v4210
    %v4278 = vpop.f32.mrb[0].mxu0
    %v4279 = vadd.f32 0.0, %v4278
    %v4280 = vpop.f32.mrb[0].mxu0
    %4281 = vdwg.mxu0
    %4282 = vrot.lane.b32.xlu0 %v178, 96
    %v4283 = vpop.permute.xlu0 %4282
    %v4286 = vsel %vm818, %v3799, 0
    %4288 = vmatprep.subr.mxu0 0.0
    %4289 = vmatpush1.msra.mxu0 %v4283
    %4290 = vmatprep.subr.mxu0 0.0
    %4291 = vmatpush1.msra.mxu0 0.0
    %4292 = vmatprep.subr.mxu0 0.0
    %4293 = vmatpush1.msra.mxu0 0.0
    %4294 = vmatprep.subr.mxu0 0.0
    %4295 = vmatpush1.msra.mxu0 0.0
    %4296 = vmatprep.subr.mxu0 0.0
    %4297 = vmatpush1.msra.mxu0 0.0
    %4298 = vmatprep.subr.mxu0 0.0
    %4299 = vmatpush1.msra.mxu0 0.0
    %4300 = vmatprep.subr.mxu0 0.0
    %4301 = vmatpush1.msra.mxu0 0.0
    %4302 = vmatprep.subr.mxu0 0.0
    %4303 = vmatpush1.msra.mxu0 0.0
    %4304 = vmatprep.subr.mxu0 0.0
    %4305 = vmatpush1.msra.mxu0 0.0
    %4306 = vmatprep.subr.mxu0 0.0
    %4307 = vmatpush1.msra.mxu0 0.0
    %4308 = vmatprep.subr.mxu0 0.0
    %4309 = vmatpush1.msra.mxu0 0.0
    %4310 = vmatprep.subr.mxu0 0.0
    %4311 = vmatpush1.msra.mxu0 0.0
    %4312 = vmatprep.subr.mxu0 0.0
    %4313 = vmatpush1.msra.mxu0 0.0
    %4314 = vmatprep.subr.mxu0 0.0
    %4315 = vmatpush1.msra.mxu0 0.0
    %4316 = vmatprep.subr.mxu0 0.0
    %4317 = vmatpush1.msra.mxu0 0.0
    %4318 = vmatprep.subr.mxu0 0.0
    %4319 = vmatpush1.msra.mxu0 0.0
    %4320 = vmatprep.subr.mxu0 0.0
    %4321 = vmatpush1.msra.mxu0 0.0
    %4322 = vmatprep.subr.mxu0 0.0
    %4323 = vmatpush1.msra.mxu0 0.0
    %4324 = vmatprep.subr.mxu0 0.0
    %4325 = vmatpush1.msra.mxu0 0.0
    %4326 = vmatprep.subr.mxu0 0.0
    %4327 = vmatpush1.msra.mxu0 0.0
    %4328 = vmatprep.subr.mxu0 0.0
    %4329 = vmatpush1.msra.mxu0 0.0
    %4330 = vmatprep.subr.mxu0 0.0
    %4331 = vmatpush1.msra.mxu0 0.0
    %4332 = vmatprep.subr.mxu0 0.0
    %4333 = vmatpush1.msra.mxu0 0.0
    %4334 = vmatprep.subr.mxu0 0.0
    %4335 = vmatpush1.msra.mxu0 0.0
    %4336 = vmatprep.subr.mxu0 0.0
    %4337 = vmatpush1.msra.mxu0 0.0
    %4338 = vmatprep.subr.mxu0 0.0
    %4339 = vmatpush1.msra.mxu0 0.0
    %4340 = vmatprep.subr.mxu0 0.0
    %4341 = vmatpush1.msra.mxu0 0.0
    %4342 = vmatprep.subr.mxu0 0.0
    %4343 = vmatpush1.msra.mxu0 0.0
    %4344 = vmatprep.subr.mxu0 0.0
    %4345 = vmatpush1.msra.mxu0 0.0
    %4346 = vmatprep.subr.mxu0 0.0
    %4347 = vmatpush1.msra.mxu0 0.0
    %4348 = vmatprep.subr.mxu0 0.0
    %4349 = vmatpush1.msra.mxu0 0.0
    %4350 = vmatprep.subr.mxu0 0.0
    %4351 = vmatpush1.msra.mxu0 0.0
    %4352 = vmatprep.mubr.f32.mxu0 0.0
    %4353 = vmatmul.mubr.f32.gmra.mrb[0].mxu0 %v4286
    %v4354 = vpop.f32.mrb[0].mxu0
    %v4355 = vadd.f32 0.0, %v4354
    %v4356 = vpop.f32.mrb[0].mxu0
    %4357 = vdwg.mxu0
    %4358 = vrot.lane.b32.xlu0 %v184, 96
    %v4359 = vpop.permute.xlu0 %4358
    %v4362 = vsel %vm818, %v3801, 0
    %4364 = vmatprep.subr.mxu0 0.0
    %4365 = vmatpush1.msra.mxu0 %v4359
    %4366 = vmatprep.subr.mxu0 0.0
    %4367 = vmatpush1.msra.mxu0 0.0
    %4368 = vmatprep.subr.mxu0 0.0
    %4369 = vmatpush1.msra.mxu0 0.0
    %4370 = vmatprep.subr.mxu0 0.0
    %4371 = vmatpush1.msra.mxu0 0.0
    %4372 = vmatprep.subr.mxu0 0.0
    %4373 = vmatpush1.msra.mxu0 0.0
    %4374 = vmatprep.subr.mxu0 0.0
    %4375 = vmatpush1.msra.mxu0 0.0
    %4376 = vmatprep.subr.mxu0 0.0
    %4377 = vmatpush1.msra.mxu0 0.0
    %4378 = vmatprep.subr.mxu0 0.0
    %4379 = vmatpush1.msra.mxu0 0.0
    %4380 = vmatprep.subr.mxu0 0.0
    %4381 = vmatpush1.msra.mxu0 0.0
    %4382 = vmatprep.subr.mxu0 0.0
    %4383 = vmatpush1.msra.mxu0 0.0
    %4384 = vmatprep.subr.mxu0 0.0
    %4385 = vmatpush1.msra.mxu0 0.0
    %4386 = vmatprep.subr.mxu0 0.0
    %4387 = vmatpush1.msra.mxu0 0.0
    %4388 = vmatprep.subr.mxu0 0.0
    %4389 = vmatpush1.msra.mxu0 0.0
    %4390 = vmatprep.subr.mxu0 0.0
    %4391 = vmatpush1.msra.mxu0 0.0
    %4392 = vmatprep.subr.mxu0 0.0
    %4393 = vmatpush1.msra.mxu0 0.0
    %4394 = vmatprep.subr.mxu0 0.0
    %4395 = vmatpush1.msra.mxu0 0.0
    %4396 = vmatprep.subr.mxu0 0.0
    %4397 = vmatpush1.msra.mxu0 0.0
    %4398 = vmatprep.subr.mxu0 0.0
    %4399 = vmatpush1.msra.mxu0 0.0
    %4400 = vmatprep.subr.mxu0 0.0
    %4401 = vmatpush1.msra.mxu0 0.0
    %4402 = vmatprep.subr.mxu0 0.0
    %4403 = vmatpush1.msra.mxu0 0.0
    %4404 = vmatprep.subr.mxu0 0.0
    %4405 = vmatpush1.msra.mxu0 0.0
    %4406 = vmatprep.subr.mxu0 0.0
    %4407 = vmatpush1.msra.mxu0 0.0
    %4408 = vmatprep.subr.mxu0 0.0
    %4409 = vmatpush1.msra.mxu0 0.0
    %4410 = vmatprep.subr.mxu0 0.0
    %4411 = vmatpush1.msra.mxu0 0.0
    %4412 = vmatprep.subr.mxu0 0.0
    %4413 = vmatpush1.msra.mxu0 0.0
    %4414 = vmatprep.subr.mxu0 0.0
    %4415 = vmatpush1.msra.mxu0 0.0
    %4416 = vmatprep.subr.mxu0 0.0
    %4417 = vmatpush1.msra.mxu0 0.0
    %4418 = vmatprep.subr.mxu0 0.0
    %4419 = vmatpush1.msra.mxu0 0.0
    %4420 = vmatprep.subr.mxu0 0.0
    %4421 = vmatpush1.msra.mxu0 0.0
    %4422 = vmatprep.subr.mxu0 0.0
    %4423 = vmatpush1.msra.mxu0 0.0
    %4424 = vmatprep.subr.mxu0 0.0
    %4425 = vmatpush1.msra.mxu0 0.0
    %4426 = vmatprep.subr.mxu0 0.0
    %4427 = vmatpush1.msra.mxu0 0.0
    %4428 = vmatprep.mubr.f32.mxu0 0.0
    %4429 = vmatmul.mubr.f32.gmra.mrb[0].mxu0 %v4362
    %v4430 = vpop.f32.mrb[0].mxu0
    %v4431 = vadd.f32 0.0, %v4430
    %v4432 = vpop.f32.mrb[0].mxu0
    %4433 = vdwg.mxu0
    %v4434 = vrcp.pop %v3804
    %v4435 = vmul.f32 1.0, %v4434
    %v4436 = vrcp.pop %v3807
    %v4437 = vmul.f32 1.0, %v4436
    %v4438 = vrcp.pop %v3810
    %v4439 = vmul.f32 1.0, %v4438
    %v4440 = vrcp.pop %v3813
    %v4441 = vmul.f32 1.0, %v4440
    %v4442 = vrcp.pop %v3816
    %v4443 = vmul.f32 1.0, %v4442
    %v4444 = vrcp.pop %v3819
    %v4445 = vmul.f32 1.0, %v4444
    %v4446 = vrcp.pop %v3822
    %v4447 = vmul.f32 1.0, %v4446
    %v4448 = vrcp.pop %v3825
    %v4449 = vmul.f32 1.0, %v4448
    %v4450 = vmul.f32 %v3899, %v4435
    %v4451 = vmul.f32 %v3975, %v4437
    %v4452 = vmul.f32 %v4051, %v4439
    %v4453 = vmul.f32 %v4127, %v4441
    %v4454 = vmul.f32 %v4203, %v4443
    %v4455 = vmul.f32 %v4279, %v4445
    %v4456 = vmul.f32 %v4355, %v4447
    %v4457 = vmul.f32 %v4431, %v4449
    %s4458 = scalar_lea.vmem %s2, 32
    %v4459 = vld [vmem:[%s4458] sm:$0xff]
    %v4460 = vld [vmem:[%s4458 + $0x8] sm:$0xff]
    %v4462 = vsel %vm196, %v4450, 0
    %v4465 = vsel %vm196, %v4451, 0
    %v4468 = vsel %vm196, %v4452, 0
    %v4471 = vsel %vm196, %v4453, 0
    %v4474 = vsel %vm196, %v4454, 0
    %v4477 = vsel %vm196, %v4455, 0
    %v4480 = vsel %vm196, %v4456, 0
    %v4483 = vsel %vm196, %v4457, 0
    %4485 = vmatprep.subr.mxu0 0.0
    %4486 = vmatpush1.msra.mxu0 %v4459
    %4487 = vmatprep.subr.mxu0 0.0
    %4488 = vmatpush1.msra.mxu0 %v4460
    %4489 = vmatprep.subr.mxu0 0.0
    %4490 = vmatpush1.msra.mxu0 0.0
    %4491 = vmatprep.subr.mxu0 0.0
    %4492 = vmatpush1.msra.mxu0 0.0
    %4493 = vmatprep.subr.mxu0 0.0
    %4494 = vmatpush1.msra.mxu0 0.0
    %4495 = vmatprep.subr.mxu0 0.0
    %4496 = vmatpush1.msra.mxu0 0.0
    %4497 = vmatprep.subr.mxu0 0.0
    %4498 = vmatpush1.msra.mxu0 0.0
    %4499 = vmatprep.subr.mxu0 0.0
    %4500 = vmatpush1.msra.mxu0 0.0
    %4501 = vmatprep.subr.mxu0 0.0
    %4502 = vmatpush1.msra.mxu0 0.0
    %4503 = vmatprep.subr.mxu0 0.0
    %4504 = vmatpush1.msra.mxu0 0.0
    %4505 = vmatprep.subr.mxu0 0.0
    %4506 = vmatpush1.msra.mxu0 0.0
    %4507 = vmatprep.subr.mxu0 0.0
    %4508 = vmatpush1.msra.mxu0 0.0
    %4509 = vmatprep.subr.mxu0 0.0
    %4510 = vmatpush1.msra.mxu0 0.0
    %4511 = vmatprep.subr.mxu0 0.0
    %4512 = vmatpush1.msra.mxu0 0.0
    %4513 = vmatprep.subr.mxu0 0.0
    %4514 = vmatpush1.msra.mxu0 0.0
    %4515 = vmatprep.subr.mxu0 0.0
    %4516 = vmatpush1.msra.mxu0 0.0
    %4517 = vmatprep.subr.mxu0 0.0
    %4518 = vmatpush1.msra.mxu0 0.0
    %4519 = vmatprep.subr.mxu0 0.0
    %4520 = vmatpush1.msra.mxu0 0.0
    %4521 = vmatprep.subr.mxu0 0.0
    %4522 = vmatpush1.msra.mxu0 0.0
    %4523 = vmatprep.subr.mxu0 0.0
    %4524 = vmatpush1.msra.mxu0 0.0
    %4525 = vmatprep.subr.mxu0 0.0
    %4526 = vmatpush1.msra.mxu0 0.0
    %4527 = vmatprep.subr.mxu0 0.0
    %4528 = vmatpush1.msra.mxu0 0.0
    %4529 = vmatprep.subr.mxu0 0.0
    %4530 = vmatpush1.msra.mxu0 0.0
    %4531 = vmatprep.subr.mxu0 0.0
    %4532 = vmatpush1.msra.mxu0 0.0
    %4533 = vmatprep.subr.mxu0 0.0
    %4534 = vmatpush1.msra.mxu0 0.0
    %4535 = vmatprep.subr.mxu0 0.0
    %4536 = vmatpush1.msra.mxu0 0.0
    %4537 = vmatprep.subr.mxu0 0.0
    %4538 = vmatpush1.msra.mxu0 0.0
    %4539 = vmatprep.subr.mxu0 0.0
    %4540 = vmatpush1.msra.mxu0 0.0
    %4541 = vmatprep.subr.mxu0 0.0
    %4542 = vmatpush1.msra.mxu0 0.0
    %4543 = vmatprep.subr.mxu0 0.0
    %4544 = vmatpush1.msra.mxu0 0.0
    %4545 = vmatprep.subr.mxu0 0.0
    %4546 = vmatpush1.msra.mxu0 0.0
    %4547 = vmatprep.subr.mxu0 0.0
    %4548 = vmatpush1.msra.mxu0 0.0
    %4549 = vmatprep.mubr.f32.mxu0 0.0
    %4550 = vmatmul.mubr.f32.gmra.mrb[0].mxu0 %v4462
    %v4551 = vpop.f32.mrb[0].mxu0
    %v4552 = vadd.f32 0.0, %v4551
    %v4553 = vpop.f32.mrb[0].mxu0
    %4554 = vmatprep.mubr.f32.mxu0 0.0
    %4555 = vmatmul.mubr.f32.gmra.mrb[0].mxu0 %v4465
    %v4556 = vpop.f32.mrb[0].mxu0
    %v4557 = vadd.f32 0.0, %v4556
    %v4558 = vpop.f32.mrb[0].mxu0
    %4559 = vmatprep.mubr.f32.mxu0 0.0
    %4560 = vmatmul.mubr.f32.gmra.mrb[0].mxu0 %v4468
    %v4561 = vpop.f32.mrb[0].mxu0
    %v4562 = vadd.f32 0.0, %v4561
    %v4563 = vpop.f32.mrb[0].mxu0
    %4564 = vmatprep.mubr.f32.mxu0 0.0
    %4565 = vmatmul.mubr.f32.gmra.mrb[0].mxu0 %v4471
    %v4566 = vpop.f32.mrb[0].mxu0
    %v4567 = vadd.f32 0.0, %v4566
    %v4568 = vpop.f32.mrb[0].mxu0
    %4569 = vmatprep.mubr.f32.mxu0 0.0
    %4570 = vmatmul.mubr.f32.gmra.mrb[0].mxu0 %v4474
    %v4571 = vpop.f32.mrb[0].mxu0
    %v4572 = vadd.f32 0.0, %v4571
    %v4573 = vpop.f32.mrb[0].mxu0
    %4574 = vmatprep.mubr.f32.mxu0 0.0
    %4575 = vmatmul.mubr.f32.gmra.mrb[0].mxu0 %v4477
    %v4576 = vpop.f32.mrb[0].mxu0
    %v4577 = vadd.f32 0.0, %v4576
    %v4578 = vpop.f32.mrb[0].mxu0
    %4579 = vmatprep.mubr.f32.mxu0 0.0
    %4580 = vmatmul.mubr.f32.gmra.mrb[0].mxu0 %v4480
    %v4581 = vpop.f32.mrb[0].mxu0
    %v4582 = vadd.f32 0.0, %v4581
    %v4583 = vpop.f32.mrb[0].mxu0
    %4584 = vmatprep.mubr.f32.mxu0 0.0
    %4585 = vmatmul.mubr.f32.gmra.mrb[0].mxu0 %v4483
    %v4586 = vpop.f32.mrb[0].mxu0
    %v4587 = vadd.f32 0.0, %v4586
    %v4588 = vpop.f32.mrb[0].mxu0
    %4589 = vdwg.mxu0
    %v4590 = vadd.f32 %v3114, %v4552
    %v4591 = vadd.f32 %v3115, %v4557
    %v4592 = vadd.f32 %v3116, %v4562
    %v4593 = vadd.f32 %v3117, %v4567
    %v4594 = vadd.f32 %v3118, %v4572
    %v4595 = vadd.f32 %v3119, %v4577
    %v4596 = vadd.f32 %v3120, %v4582
    %v4597 = vadd.f32 %v3121, %v4587
    %4598 = vrot.lane.b32.xlu0 %v140, 80
    %v4599 = vpop.permute.xlu0 %4598
    %4600 = vrot.lane.b32.xlu0 %v140, 16
    %v4601 = vpop.permute.xlu0 %4600
    %v4602 = vsel %vm196, %v4599, 0
    %v4604 = vsel %vm196, %v4601, 0
    %4606 = vmatprep.subr.mxu0 0.0
    %4607 = vmatpush1.xpose.msra.mxu0 %v4604
    %4608 = vmatprep.subr.mxu0 0.0
    %4609 = vmatpush1.xpose.msra.mxu0 0.0
    %4610 = vmatprep.subr.mxu0 0.0
    %4611 = vmatpush1.xpose.msra.mxu0 0.0
    %4612 = vmatprep.subr.mxu0 0.0
    %4613 = vmatpush1.xpose.msra.mxu0 0.0
    %4614 = vmatprep.subr.mxu0 0.0
    %4615 = vmatpush1.xpose.msra.mxu0 0.0
    %4616 = vmatprep.subr.mxu0 0.0
    %4617 = vmatpush1.xpose.msra.mxu0 0.0
    %4618 = vmatprep.subr.mxu0 0.0
    %4619 = vmatpush1.xpose.msra.mxu0 0.0
    %4620 = vmatprep.subr.mxu0 0.0
    %4621 = vmatpush1.xpose.msra.mxu0 0.0
    %4622 = vmatprep.subr.mxu0 0.0
    %4623 = vmatpush1.xpose.msra.mxu0 0.0
    %4624 = vmatprep.subr.mxu0 0.0
    %4625 = vmatpush1.xpose.msra.mxu0 0.0
    %4626 = vmatprep.subr.mxu0 0.0
    %4627 = vmatpush1.xpose.msra.mxu0 0.0
    %4628 = vmatprep.subr.mxu0 0.0
    %4629 = vmatpush1.xpose.msra.mxu0 0.0
    %4630 = vmatprep.subr.mxu0 0.0
    %4631 = vmatpush1.xpose.msra.mxu0 0.0
    %4632 = vmatprep.subr.mxu0 0.0
    %4633 = vmatpush1.xpose.msra.mxu0 0.0
    %4634 = vmatprep.subr.mxu0 0.0
    %4635 = vmatpush1.xpose.msra.mxu0 0.0
    %4636 = vmatprep.subr.mxu0 0.0
    %4637 = vmatpush1.xpose.msra.mxu0 0.0
    %4638 = vmatprep.subr.mxu0 0.0
    %4639 = vmatpush1.xpose.msra.mxu0 0.0
    %4640 = vmatprep.subr.mxu0 0.0
    %4641 = vmatpush1.xpose.msra.mxu0 0.0
    %4642 = vmatprep.subr.mxu0 0.0
    %4643 = vmatpush1.xpose.msra.mxu0 0.0
    %4644 = vmatprep.subr.mxu0 0.0
    %4645 = vmatpush1.xpose.msra.mxu0 0.0
    %4646 = vmatprep.subr.mxu0 0.0
    %4647 = vmatpush1.xpose.msra.mxu0 0.0
    %4648 = vmatprep.subr.mxu0 0.0
    %4649 = vmatpush1.xpose.msra.mxu0 0.0
    %4650 = vmatprep.subr.mxu0 0.0
    %4651 = vmatpush1.xpose.msra.mxu0 0.0
    %4652 = vmatprep.subr.mxu0 0.0
    %4653 = vmatpush1.xpose.msra.mxu0 0.0
    %4654 = vmatprep.subr.mxu0 0.0
    %4655 = vmatpush1.xpose.msra.mxu0 0.0
    %4656 = vmatprep.subr.mxu0 0.0
    %4657 = vmatpush1.xpose.msra.mxu0 0.0
    %4658 = vmatprep.subr.mxu0 0.0
    %4659 = vmatpush1.xpose.msra.mxu0 0.0
    %4660 = vmatprep.subr.mxu0 0.0
    %4661 = vmatpush1.xpose.msra.mxu0 0.0
    %4662 = vmatprep.subr.mxu0 0.0
    %4663 = vmatpush1.xpose.msra.mxu0 0.0
    %4664 = vmatprep.subr.mxu0 0.0
    %4665 = vmatpush1.xpose.msra.mxu0 0.0
    %4666 = vmatprep.subr.mxu0 0.0
    %4667 = vmatpush1.xpose.msra.mxu0 0.0
    %4668 = vmatprep.subr.mxu0 0.0
    %4669 = vmatpush1.xpose.msra.mxu0 0.0
    %4670 = vmatprep.mubr.f32.mxu0 0.0
    %4671 = vmatmul.mubr.f32.gmra.mrb[0].mxu0 %v4602
    %v4672 = vpop.f32.mrb[0].mxu0
    %v4673 = vadd.f32 0.0, %v4672
    %v4674 = vpop.f32.mrb[0].mxu0
    %4675 = vdwg.mxu0
    %4676 = vrot.lane.b32.xlu0 %v146, 80
    %v4677 = vpop.permute.xlu0 %4676
    %4678 = vrot.lane.b32.xlu0 %v146, 16
    %v4679 = vpop.permute.xlu0 %4678
    %v4680 = vsel %vm196, %v4677, 0
    %v4682 = vsel %vm196, %v4679, 0
    %4684 = vmatprep.subr.mxu0 0.0
    %4685 = vmatpush1.xpose.msra.mxu0 %v4682
    %4686 = vmatprep.subr.mxu0 0.0
    %4687 = vmatpush1.xpose.msra.mxu0 0.0
    %4688 = vmatprep.subr.mxu0 0.0
    %4689 = vmatpush1.xpose.msra.mxu0 0.0
    %4690 = vmatprep.subr.mxu0 0.0
    %4691 = vmatpush1.xpose.msra.mxu0 0.0
    %4692 = vmatprep.subr.mxu0 0.0
    %4693 = vmatpush1.xpose.msra.mxu0 0.0
    %4694 = vmatprep.subr.mxu0 0.0
    %4695 = vmatpush1.xpose.msra.mxu0 0.0
    %4696 = vmatprep.subr.mxu0 0.0
    %4697 = vmatpush1.xpose.msra.mxu0 0.0
    %4698 = vmatprep.subr.mxu0 0.0
    %4699 = vmatpush1.xpose.msra.mxu0 0.0
    %4700 = vmatprep.subr.mxu0 0.0
    %4701 = vmatpush1.xpose.msra.mxu0 0.0
    %4702 = vmatprep.subr.mxu0 0.0
    %4703 = vmatpush1.xpose.msra.mxu0 0.0
    %4704 = vmatprep.subr.mxu0 0.0
    %4705 = vmatpush1.xpose.msra.mxu0 0.0
    %4706 = vmatprep.subr.mxu0 0.0
    %4707 = vmatpush1.xpose.msra.mxu0 0.0
    %4708 = vmatprep.subr.mxu0 0.0
    %4709 = vmatpush1.xpose.msra.mxu0 0.0
    %4710 = vmatprep.subr.mxu0 0.0
    %4711 = vmatpush1.xpose.msra.mxu0 0.0
    %4712 = vmatprep.subr.mxu0 0.0
    %4713 = vmatpush1.xpose.msra.mxu0 0.0
    %4714 = vmatprep.subr.mxu0 0.0
    %4715 = vmatpush1.xpose.msra.mxu0 0.0
    %4716 = vmatprep.subr.mxu0 0.0
    %4717 = vmatpush1.xpose.msra.mxu0 0.0
    %4718 = vmatprep.subr.mxu0 0.0
    %4719 = vmatpush1.xpose.msra.mxu0 0.0
    %4720 = vmatprep.subr.mxu0 0.0
    %4721 = vmatpush1.xpose.msra.mxu0 0.0
    %4722 = vmatprep.subr.mxu0 0.0
    %4723 = vmatpush1.xpose.msra.mxu0 0.0
    %4724 = vmatprep.subr.mxu0 0.0
    %4725 = vmatpush1.xpose.msra.mxu0 0.0
    %4726 = vmatprep.subr.mxu0 0.0
    %4727 = vmatpush1.xpose.msra.mxu0 0.0
    %4728 = vmatprep.subr.mxu0 0.0
    %4729 = vmatpush1.xpose.msra.mxu0 0.0
    %4730 = vmatprep.subr.mxu0 0.0
    %4731 = vmatpush1.xpose.msra.mxu0 0.0
    %4732 = vmatprep.subr.mxu0 0.0
    %4733 = vmatpush1.xpose.msra.mxu0 0.0
    %4734 = vmatprep.subr.mxu0 0.0
    %4735 = vmatpush1.xpose.msra.mxu0 0.0
    %4736 = vmatprep.subr.mxu0 0.0
    %4737 = vmatpush1.xpose.msra.mxu0 0.0
    %4738 = vmatprep.subr.mxu0 0.0
    %4739 = vmatpush1.xpose.msra.mxu0 0.0
    %4740 = vmatprep.subr.mxu0 0.0
    %4741 = vmatpush1.xpose.msra.mxu0 0.0
    %4742 = vmatprep.subr.mxu0 0.0
    %4743 = vmatpush1.xpose.msra.mxu0 0.0
    %4744 = vmatprep.subr.mxu0 0.0
    %4745 = vmatpush1.xpose.msra.mxu0 0.0
    %4746 = vmatprep.subr.mxu0 0.0
    %4747 = vmatpush1.xpose.msra.mxu0 0.0
    %4748 = vmatprep.mubr.f32.mxu0 0.0
    %4749 = vmatmul.mubr.f32.gmra.mrb[0].mxu0 %v4680
    %v4750 = vpop.f32.mrb[0].mxu0
    %v4751 = vadd.f32 0.0, %v4750
    %v4752 = vpop.f32.mrb[0].mxu0
    %4753 = vdwg.mxu0
    %4754 = vrot.lane.b32.xlu0 %v152, 80
    %v4755 = vpop.permute.xlu0 %4754
    %4756 = vrot.lane.b32.xlu0 %v152, 16
    %v4757 = vpop.permute.xlu0 %4756
    %v4758 = vsel %vm196, %v4755, 0
    %v4760 = vsel %vm196, %v4757, 0
    %4762 = vmatprep.subr.mxu0 0.0
    %4763 = vmatpush1.xpose.msra.mxu0 %v4760
    %4764 = vmatprep.subr.mxu0 0.0
    %4765 = vmatpush1.xpose.msra.mxu0 0.0
    %4766 = vmatprep.subr.mxu0 0.0
    %4767 = vmatpush1.xpose.msra.mxu0 0.0
    %4768 = vmatprep.subr.mxu0 0.0
    %4769 = vmatpush1.xpose.msra.mxu0 0.0
    %4770 = vmatprep.subr.mxu0 0.0
    %4771 = vmatpush1.xpose.msra.mxu0 0.0
    %4772 = vmatprep.subr.mxu0 0.0
    %4773 = vmatpush1.xpose.msra.mxu0 0.0
    %4774 = vmatprep.subr.mxu0 0.0
    %4775 = vmatpush1.xpose.msra.mxu0 0.0
    %4776 = vmatprep.subr.mxu0 0.0
    %4777 = vmatpush1.xpose.msra.mxu0 0.0
    %4778 = vmatprep.subr.mxu0 0.0
    %4779 = vmatpush1.xpose.msra.mxu0 0.0
    %4780 = vmatprep.subr.mxu0 0.0
    %4781 = vmatpush1.xpose.msra.mxu0 0.0
    %4782 = vmatprep.subr.mxu0 0.0
    %4783 = vmatpush1.xpose.msra.mxu0 0.0
    %4784 = vmatprep.subr.mxu0 0.0
    %4785 = vmatpush1.xpose.msra.mxu0 0.0
    %4786 = vmatprep.subr.mxu0 0.0
    %4787 = vmatpush1.xpose.msra.mxu0 0.0
    %4788 = vmatprep.subr.mxu0 0.0
    %4789 = vmatpush1.xpose.msra.mxu0 0.0
    %4790 = vmatprep.subr.mxu0 0.0
    %4791 = vmatpush1.xpose.msra.mxu0 0.0
    %4792 = vmatprep.subr.mxu0 0.0
    %4793 = vmatpush1.xpose.msra.mxu0 0.0
    %4794 = vmatprep.subr.mxu0 0.0
    %4795 = vmatpush1.xpose.msra.mxu0 0.0
    %4796 = vmatprep.subr.mxu0 0.0
    %4797 = vmatpush1.xpose.msra.mxu0 0.0
    %4798 = vmatprep.subr.mxu0 0.0
    %4799 = vmatpush1.xpose.msra.mxu0 0.0
    %4800 = vmatprep.subr.mxu0 0.0
    %4801 = vmatpush1.xpose.msra.mxu0 0.0
    %4802 = vmatprep.subr.mxu0 0.0
    %4803 = vmatpush1.xpose.msra.mxu0 0.0
    %4804 = vmatprep.subr.mxu0 0.0
    %4805 = vmatpush1.xpose.msra.mxu0 0.0
    %4806 = vmatprep.subr.mxu0 0.0
    %4807 = vmatpush1.xpose.msra.mxu0 0.0
    %4808 = vmatprep.subr.mxu0 0.0
    %4809 = vmatpush1.xpose.msra.mxu0 0.0
    %4810 = vmatprep.subr.mxu0 0.0
    %4811 = vmatpush1.xpose.msra.mxu0 0.0
    %4812 = vmatprep.subr.mxu0 0.0
    %4813 = vmatpush1.xpose.msra.mxu0 0.0
    %4814 = vmatprep.subr.mxu0 0.0
    %4815 = vmatpush1.xpose.msra.mxu0 0.0
    %4816 = vmatprep.subr.mxu0 0.0
    %4817 = vmatpush1.xpose.msra.mxu0 0.0
    %4818 = vmatprep.subr.mxu0 0.0
    %4819 = vmatpush1.xpose.msra.mxu0 0.0
    %4820 = vmatprep.subr.mxu0 0.0
    %4821 = vmatpush1.xpose.msra.mxu0 0.0
    %4822 = vmatprep.subr.mxu0 0.0
    %4823 = vmatpush1.xpose.msra.mxu0 0.0
    %4824 = vmatprep.subr.mxu0 0.0
    %4825 = vmatpush1.xpose.msra.mxu0 0.0
    %4826 = vmatprep.mubr.f32.mxu0 0.0
    %4827 = vmatmul.mubr.f32.gmra.mrb[0].mxu0 %v4758
    %v4828 = vpop.f32.mrb[0].mxu0
    %v4829 = vadd.f32 0.0, %v4828
    %v4830 = vpop.f32.mrb[0].mxu0
    %4831 = vdwg.mxu0
    %4832 = vrot.lane.b32.xlu0 %v158, 80
    %v4833 = vpop.permute.xlu0 %4832
    %4834 = vrot.lane.b32.xlu0 %v158, 16
    %v4835 = vpop.permute.xlu0 %4834
    %v4836 = vsel %vm196, %v4833, 0
    %v4838 = vsel %vm196, %v4835, 0
    %4840 = vmatprep.subr.mxu0 0.0
    %4841 = vmatpush1.xpose.msra.mxu0 %v4838
    %4842 = vmatprep.subr.mxu0 0.0
    %4843 = vmatpush1.xpose.msra.mxu0 0.0
    %4844 = vmatprep.subr.mxu0 0.0
    %4845 = vmatpush1.xpose.msra.mxu0 0.0
    %4846 = vmatprep.subr.mxu0 0.0
    %4847 = vmatpush1.xpose.msra.mxu0 0.0
    %4848 = vmatprep.subr.mxu0 0.0
    %4849 = vmatpush1.xpose.msra.mxu0 0.0
    %4850 = vmatprep.subr.mxu0 0.0
    %4851 = vmatpush1.xpose.msra.mxu0 0.0
    %4852 = vmatprep.subr.mxu0 0.0
    %4853 = vmatpush1.xpose.msra.mxu0 0.0
    %4854 = vmatprep.subr.mxu0 0.0
    %4855 = vmatpush1.xpose.msra.mxu0 0.0
    %4856 = vmatprep.subr.mxu0 0.0
    %4857 = vmatpush1.xpose.msra.mxu0 0.0
    %4858 = vmatprep.subr.mxu0 0.0
    %4859 = vmatpush1.xpose.msra.mxu0 0.0
    %4860 = vmatprep.subr.mxu0 0.0
    %4861 = vmatpush1.xpose.msra.mxu0 0.0
    %4862 = vmatprep.subr.mxu0 0.0
    %4863 = vmatpush1.xpose.msra.mxu0 0.0
    %4864 = vmatprep.subr.mxu0 0.0
    %4865 = vmatpush1.xpose.msra.mxu0 0.0
    %4866 = vmatprep.subr.mxu0 0.0
    %4867 = vmatpush1.xpose.msra.mxu0 0.0
    %4868 = vmatprep.subr.mxu0 0.0
    %4869 = vmatpush1.xpose.msra.mxu0 0.0
    %4870 = vmatprep.subr.mxu0 0.0
    %4871 = vmatpush1.xpose.msra.mxu0 0.0
    %4872 = vmatprep.subr.mxu0 0.0
    %4873 = vmatpush1.xpose.msra.mxu0 0.0
    %4874 = vmatprep.subr.mxu0 0.0
    %4875 = vmatpush1.xpose.msra.mxu0 0.0
    %4876 = vmatprep.subr.mxu0 0.0
    %4877 = vmatpush1.xpose.msra.mxu0 0.0
    %4878 = vmatprep.subr.mxu0 0.0
    %4879 = vmatpush1.xpose.msra.mxu0 0.0
    %4880 = vmatprep.subr.mxu0 0.0
    %4881 = vmatpush1.xpose.msra.mxu0 0.0
    %4882 = vmatprep.subr.mxu0 0.0
    %4883 = vmatpush1.xpose.msra.mxu0 0.0
    %4884 = vmatprep.subr.mxu0 0.0
    %4885 = vmatpush1.xpose.msra.mxu0 0.0
    %4886 = vmatprep.subr.mxu0 0.0
    %4887 = vmatpush1.xpose.msra.mxu0 0.0
    %4888 = vmatprep.subr.mxu0 0.0
    %4889 = vmatpush1.xpose.msra.mxu0 0.0
    %4890 = vmatprep.subr.mxu0 0.0
    %4891 = vmatpush1.xpose.msra.mxu0 0.0
    %4892 = vmatprep.subr.mxu0 0.0
    %4893 = vmatpush1.xpose.msra.mxu0 0.0
    %4894 = vmatprep.subr.mxu0 0.0
    %4895 = vmatpush1.xpose.msra.mxu0 0.0
    %4896 = vmatprep.subr.mxu0 0.0
    %4897 = vmatpush1.xpose.msra.mxu0 0.0
    %4898 = vmatprep.subr.mxu0 0.0
    %4899 = vmatpush1.xpose.msra.mxu0 0.0
    %4900 = vmatprep.subr.mxu0 0.0
    %4901 = vmatpush1.xpose.msra.mxu0 0.0
    %4902 = vmatprep.subr.mxu0 0.0
    %4903 = vmatpush1.xpose.msra.mxu0 0.0
    %4904 = vmatprep.mubr.f32.mxu0 0.0
    %4905 = vmatmul.mubr.f32.gmra.mrb[0].mxu0 %v4836
    %v4906 = vpop.f32.mrb[0].mxu0
    %v4907 = vadd.f32 0.0, %v4906
    %v4908 = vpop.f32.mrb[0].mxu0
    %4909 = vdwg.mxu0
    %4910 = vrot.lane.b32.xlu0 %v164, 80
    %v4911 = vpop.permute.xlu0 %4910
    %4912 = vrot.lane.b32.xlu0 %v164, 16
    %v4913 = vpop.permute.xlu0 %4912
    %v4914 = vsel %vm196, %v4911, 0
    %v4916 = vsel %vm196, %v4913, 0
    %4918 = vmatprep.subr.mxu0 0.0
    %4919 = vmatpush1.xpose.msra.mxu0 %v4916
    %4920 = vmatprep.subr.mxu0 0.0
    %4921 = vmatpush1.xpose.msra.mxu0 0.0
    %4922 = vmatprep.subr.mxu0 0.0
    %4923 = vmatpush1.xpose.msra.mxu0 0.0
    %4924 = vmatprep.subr.mxu0 0.0
    %4925 = vmatpush1.xpose.msra.mxu0 0.0
    %4926 = vmatprep.subr.mxu0 0.0
    %4927 = vmatpush1.xpose.msra.mxu0 0.0
    %4928 = vmatprep.subr.mxu0 0.0
    %4929 = vmatpush1.xpose.msra.mxu0 0.0
    %4930 = vmatprep.subr.mxu0 0.0
    %4931 = vmatpush1.xpose.msra.mxu0 0.0
    %4932 = vmatprep.subr.mxu0 0.0
    %4933 = vmatpush1.xpose.msra.mxu0 0.0
    %4934 = vmatprep.subr.mxu0 0.0
    %4935 = vmatpush1.xpose.msra.mxu0 0.0
    %4936 = vmatprep.subr.mxu0 0.0
    %4937 = vmatpush1.xpose.msra.mxu0 0.0
    %4938 = vmatprep.subr.mxu0 0.0
    %4939 = vmatpush1.xpose.msra.mxu0 0.0
    %4940 = vmatprep.subr.mxu0 0.0
    %4941 = vmatpush1.xpose.msra.mxu0 0.0
    %4942 = vmatprep.subr.mxu0 0.0
    %4943 = vmatpush1.xpose.msra.mxu0 0.0
    %4944 = vmatprep.subr.mxu0 0.0
    %4945 = vmatpush1.xpose.msra.mxu0 0.0
    %4946 = vmatprep.subr.mxu0 0.0
    %4947 = vmatpush1.xpose.msra.mxu0 0.0
    %4948 = vmatprep.subr.mxu0 0.0
    %4949 = vmatpush1.xpose.msra.mxu0 0.0
    %4950 = vmatprep.subr.mxu0 0.0
    %4951 = vmatpush1.xpose.msra.mxu0 0.0
    %4952 = vmatprep.subr.mxu0 0.0
    %4953 = vmatpush1.xpose.msra.mxu0 0.0
    %4954 = vmatprep.subr.mxu0 0.0
    %4955 = vmatpush1.xpose.msra.mxu0 0.0
    %4956 = vmatprep.subr.mxu0 0.0
    %4957 = vmatpush1.xpose.msra.mxu0 0.0
    %4958 = vmatprep.subr.mxu0 0.0
    %4959 = vmatpush1.xpose.msra.mxu0 0.0
    %4960 = vmatprep.subr.mxu0 0.0
    %4961 = vmatpush1.xpose.msra.mxu0 0.0
    %4962 = vmatprep.subr.mxu0 0.0
    %4963 = vmatpush1.xpose.msra.mxu0 0.0
    %4964 = vmatprep.subr.mxu0 0.0
    %4965 = vmatpush1.xpose.msra.mxu0 0.0
    %4966 = vmatprep.subr.mxu0 0.0
    %4967 = vmatpush1.xpose.msra.mxu0 0.0
    %4968 = vmatprep.subr.mxu0 0.0
    %4969 = vmatpush1.xpose.msra.mxu0 0.0
    %4970 = vmatprep.subr.mxu0 0.0
    %4971 = vmatpush1.xpose.msra.mxu0 0.0
    %4972 = vmatprep.subr.mxu0 0.0
    %4973 = vmatpush1.xpose.msra.mxu0 0.0
    %4974 = vmatprep.subr.mxu0 0.0
    %4975 = vmatpush1.xpose.msra.mxu0 0.0
    %4976 = vmatprep.subr.mxu0 0.0
    %4977 = vmatpush1.xpose.msra.mxu0 0.0
    %4978 = vmatprep.subr.mxu0 0.0
    %4979 = vmatpush1.xpose.msra.mxu0 0.0
    %4980 = vmatprep.subr.mxu0 0.0
    %4981 = vmatpush1.xpose.msra.mxu0 0.0
    %4982 = vmatprep.mubr.f32.mxu0 0.0
    %4983 = vmatmul.mubr.f32.gmra.mrb[0].mxu0 %v4914
    %v4984 = vpop.f32.mrb[0].mxu0
    %v4985 = vadd.f32 0.0, %v4984
    %v4986 = vpop.f32.mrb[0].mxu0
    %4987 = vdwg.mxu0
    %4988 = vrot.lane.b32.xlu0 %v170, 80
    %v4989 = vpop.permute.xlu0 %4988
    %4990 = vrot.lane.b32.xlu0 %v170, 16
    %v4991 = vpop.permute.xlu0 %4990
    %v4992 = vsel %vm196, %v4989, 0
    %v4994 = vsel %vm196, %v4991, 0
    %4996 = vmatprep.subr.mxu0 0.0
    %4997 = vmatpush1.xpose.msra.mxu0 %v4994
    %4998 = vmatprep.subr.mxu0 0.0
    %4999 = vmatpush1.xpose.msra.mxu0 0.0
    %5000 = vmatprep.subr.mxu0 0.0
    %5001 = vmatpush1.xpose.msra.mxu0 0.0
    %5002 = vmatprep.subr.mxu0 0.0
    %5003 = vmatpush1.xpose.msra.mxu0 0.0
    %5004 = vmatprep.subr.mxu0 0.0
    %5005 = vmatpush1.xpose.msra.mxu0 0.0
    %5006 = vmatprep.subr.mxu0 0.0
    %5007 = vmatpush1.xpose.msra.mxu0 0.0
    %5008 = vmatprep.subr.mxu0 0.0
    %5009 = vmatpush1.xpose.msra.mxu0 0.0
    %5010 = vmatprep.subr.mxu0 0.0
    %5011 = vmatpush1.xpose.msra.mxu0 0.0
    %5012 = vmatprep.subr.mxu0 0.0
    %5013 = vmatpush1.xpose.msra.mxu0 0.0
    %5014 = vmatprep.subr.mxu0 0.0
    %5015 = vmatpush1.xpose.msra.mxu0 0.0
    %5016 = vmatprep.subr.mxu0 0.0
    %5017 = vmatpush1.xpose.msra.mxu0 0.0
    %5018 = vmatprep.subr.mxu0 0.0
    %5019 = vmatpush1.xpose.msra.mxu0 0.0
    %5020 = vmatprep.subr.mxu0 0.0
    %5021 = vmatpush1.xpose.msra.mxu0 0.0
    %5022 = vmatprep.subr.mxu0 0.0
    %5023 = vmatpush1.xpose.msra.mxu0 0.0
    %5024 = vmatprep.subr.mxu0 0.0
    %5025 = vmatpush1.xpose.msra.mxu0 0.0
    %5026 = vmatprep.subr.mxu0 0.0
    %5027 = vmatpush1.xpose.msra.mxu0 0.0
    %5028 = vmatprep.subr.mxu0 0.0
    %5029 = vmatpush1.xpose.msra.mxu0 0.0
    %5030 = vmatprep.subr.mxu0 0.0
    %5031 = vmatpush1.xpose.msra.mxu0 0.0
    %5032 = vmatprep.subr.mxu0 0.0
    %5033 = vmatpush1.xpose.msra.mxu0 0.0
    %5034 = vmatprep.subr.mxu0 0.0
    %5035 = vmatpush1.xpose.msra.mxu0 0.0
    %5036 = vmatprep.subr.mxu0 0.0
    %5037 = vmatpush1.xpose.msra.mxu0 0.0
    %5038 = vmatprep.subr.mxu0 0.0
    %5039 = vmatpush1.xpose.msra.mxu0 0.0
    %5040 = vmatprep.subr.mxu0 0.0
    %5041 = vmatpush1.xpose.msra.mxu0 0.0
    %5042 = vmatprep.subr.mxu0 0.0
    %5043 = vmatpush1.xpose.msra.mxu0 0.0
    %5044 = vmatprep.subr.mxu0 0.0
    %5045 = vmatpush1.xpose.msra.mxu0 0.0
    %5046 = vmatprep.subr.mxu0 0.0
    %5047 = vmatpush1.xpose.msra.mxu0 0.0
    %5048 = vmatprep.subr.mxu0 0.0
    %5049 = vmatpush1.xpose.msra.mxu0 0.0
    %5050 = vmatprep.subr.mxu0 0.0
    %5051 = vmatpush1.xpose.msra.mxu0 0.0
    %5052 = vmatprep.subr.mxu0 0.0
    %5053 = vmatpush1.xpose.msra.mxu0 0.0
    %5054 = vmatprep.subr.mxu0 0.0
    %5055 = vmatpush1.xpose.msra.mxu0 0.0
    %5056 = vmatprep.subr.mxu0 0.0
    %5057 = vmatpush1.xpose.msra.mxu0 0.0
    %5058 = vmatprep.subr.mxu0 0.0
    %5059 = vmatpush1.xpose.msra.mxu0 0.0
    %5060 = vmatprep.mubr.f32.mxu0 0.0
    %5061 = vmatmul.mubr.f32.gmra.mrb[0].mxu0 %v4992
    %v5062 = vpop.f32.mrb[0].mxu0
    %v5063 = vadd.f32 0.0, %v5062
    %v5064 = vpop.f32.mrb[0].mxu0
    %5065 = vdwg.mxu0
    %5066 = vrot.lane.b32.xlu0 %v176, 80
    %v5067 = vpop.permute.xlu0 %5066
    %5068 = vrot.lane.b32.xlu0 %v176, 16
    %v5069 = vpop.permute.xlu0 %5068
    %v5070 = vsel %vm196, %v5067, 0
    %v5072 = vsel %vm196, %v5069, 0
    %5074 = vmatprep.subr.mxu0 0.0
    %5075 = vmatpush1.xpose.msra.mxu0 %v5072
    %5076 = vmatprep.subr.mxu0 0.0
    %5077 = vmatpush1.xpose.msra.mxu0 0.0
    %5078 = vmatprep.subr.mxu0 0.0
    %5079 = vmatpush1.xpose.msra.mxu0 0.0
    %5080 = vmatprep.subr.mxu0 0.0
    %5081 = vmatpush1.xpose.msra.mxu0 0.0
    %5082 = vmatprep.subr.mxu0 0.0
    %5083 = vmatpush1.xpose.msra.mxu0 0.0
    %5084 = vmatprep.subr.mxu0 0.0
    %5085 = vmatpush1.xpose.msra.mxu0 0.0
    %5086 = vmatprep.subr.mxu0 0.0
    %5087 = vmatpush1.xpose.msra.mxu0 0.0
    %5088 = vmatprep.subr.mxu0 0.0
    %5089 = vmatpush1.xpose.msra.mxu0 0.0
    %5090 = vmatprep.subr.mxu0 0.0
    %5091 = vmatpush1.xpose.msra.mxu0 0.0
    %5092 = vmatprep.subr.mxu0 0.0
    %5093 = vmatpush1.xpose.msra.mxu0 0.0
    %5094 = vmatprep.subr.mxu0 0.0
    %5095 = vmatpush1.xpose.msra.mxu0 0.0
    %5096 = vmatprep.subr.mxu0 0.0
    %5097 = vmatpush1.xpose.msra.mxu0 0.0
    %5098 = vmatprep.subr.mxu0 0.0
    %5099 = vmatpush1.xpose.msra.mxu0 0.0
    %5100 = vmatprep.subr.mxu0 0.0
    %5101 = vmatpush1.xpose.msra.mxu0 0.0
    %5102 = vmatprep.subr.mxu0 0.0
    %5103 = vmatpush1.xpose.msra.mxu0 0.0
    %5104 = vmatprep.subr.mxu0 0.0
    %5105 = vmatpush1.xpose.msra.mxu0 0.0
    %5106 = vmatprep.subr.mxu0 0.0
    %5107 = vmatpush1.xpose.msra.mxu0 0.0
    %5108 = vmatprep.subr.mxu0 0.0
    %5109 = vmatpush1.xpose.msra.mxu0 0.0
    %5110 = vmatprep.subr.mxu0 0.0
    %5111 = vmatpush1.xpose.msra.mxu0 0.0
    %5112 = vmatprep.subr.mxu0 0.0
    %5113 = vmatpush1.xpose.msra.mxu0 0.0
    %5114 = vmatprep.subr.mxu0 0.0
    %5115 = vmatpush1.xpose.msra.mxu0 0.0
    %5116 = vmatprep.subr.mxu0 0.0
    %5117 = vmatpush1.xpose.msra.mxu0 0.0
    %5118 = vmatprep.subr.mxu0 0.0
    %5119 = vmatpush1.xpose.msra.mxu0 0.0
    %5120 = vmatprep.subr.mxu0 0.0
    %5121 = vmatpush1.xpose.msra.mxu0 0.0
    %5122 = vmatprep.subr.mxu0 0.0
    %5123 = vmatpush1.xpose.msra.mxu0 0.0
    %5124 = vmatprep.subr.mxu0 0.0
    %5125 = vmatpush1.xpose.msra.mxu0 0.0
    %5126 = vmatprep.subr.mxu0 0.0
    %5127 = vmatpush1.xpose.msra.mxu0 0.0
    %5128 = vmatprep.subr.mxu0 0.0
    %5129 = vmatpush1.xpose.msra.mxu0 0.0
    %5130 = vmatprep.subr.mxu0 0.0
    %5131 = vmatpush1.xpose.msra.mxu0 0.0
    %5132 = vmatprep.subr.mxu0 0.0
    %5133 = vmatpush1.xpose.msra.mxu0 0.0
    %5134 = vmatprep.subr.mxu0 0.0
    %5135 = vmatpush1.xpose.msra.mxu0 0.0
    %5136 = vmatprep.subr.mxu0 0.0
    %5137 = vmatpush1.xpose.msra.mxu0 0.0
    %5138 = vmatprep.mubr.f32.mxu0 0.0
    %5139 = vmatmul.mubr.f32.gmra.mrb[0].mxu0 %v5070
    %v5140 = vpop.f32.mrb[0].mxu0
    %v5141 = vadd.f32 0.0, %v5140
    %v5142 = vpop.f32.mrb[0].mxu0
    %5143 = vdwg.mxu0
    %5144 = vrot.lane.b32.xlu0 %v182, 80
    %v5145 = vpop.permute.xlu0 %5144
    %5146 = vrot.lane.b32.xlu0 %v182, 16
    %v5147 = vpop.permute.xlu0 %5146
    %v5148 = vsel %vm196, %v5145, 0
    %v5150 = vsel %vm196, %v5147, 0
    %5152 = vmatprep.subr.mxu0 0.0
    %5153 = vmatpush1.xpose.msra.mxu0 %v5150
    %5154 = vmatprep.subr.mxu0 0.0
    %5155 = vmatpush1.xpose.msra.mxu0 0.0
    %5156 = vmatprep.subr.mxu0 0.0
    %5157 = vmatpush1.xpose.msra.mxu0 0.0
    %5158 = vmatprep.subr.mxu0 0.0
    %5159 = vmatpush1.xpose.msra.mxu0 0.0
    %5160 = vmatprep.subr.mxu0 0.0
    %5161 = vmatpush1.xpose.msra.mxu0 0.0
    %5162 = vmatprep.subr.mxu0 0.0
    %5163 = vmatpush1.xpose.msra.mxu0 0.0
    %5164 = vmatprep.subr.mxu0 0.0
    %5165 = vmatpush1.xpose.msra.mxu0 0.0
    %5166 = vmatprep.subr.mxu0 0.0
    %5167 = vmatpush1.xpose.msra.mxu0 0.0
    %5168 = vmatprep.subr.mxu0 0.0
    %5169 = vmatpush1.xpose.msra.mxu0 0.0
    %5170 = vmatprep.subr.mxu0 0.0
    %5171 = vmatpush1.xpose.msra.mxu0 0.0
    %5172 = vmatprep.subr.mxu0 0.0
    %5173 = vmatpush1.xpose.msra.mxu0 0.0
    %5174 = vmatprep.subr.mxu0 0.0
    %5175 = vmatpush1.xpose.msra.mxu0 0.0
    %5176 = vmatprep.subr.mxu0 0.0
    %5177 = vmatpush1.xpose.msra.mxu0 0.0
    %5178 = vmatprep.subr.mxu0 0.0
    %5179 = vmatpush1.xpose.msra.mxu0 0.0
    %5180 = vmatprep.subr.mxu0 0.0
    %5181 = vmatpush1.xpose.msra.mxu0 0.0
    %5182 = vmatprep.subr.mxu0 0.0
    %5183 = vmatpush1.xpose.msra.mxu0 0.0
    %5184 = vmatprep.subr.mxu0 0.0
    %5185 = vmatpush1.xpose.msra.mxu0 0.0
    %5186 = vmatprep.subr.mxu0 0.0
    %5187 = vmatpush1.xpose.msra.mxu0 0.0
    %5188 = vmatprep.subr.mxu0 0.0
    %5189 = vmatpush1.xpose.msra.mxu0 0.0
    %5190 = vmatprep.subr.mxu0 0.0
    %5191 = vmatpush1.xpose.msra.mxu0 0.0
    %5192 = vmatprep.subr.mxu0 0.0
    %5193 = vmatpush1.xpose.msra.mxu0 0.0
    %5194 = vmatprep.subr.mxu0 0.0
    %5195 = vmatpush1.xpose.msra.mxu0 0.0
    %5196 = vmatprep.subr.mxu0 0.0
    %5197 = vmatpush1.xpose.msra.mxu0 0.0
    %5198 = vmatprep.subr.mxu0 0.0
    %5199 = vmatpush1.xpose.msra.mxu0 0.0
    %5200 = vmatprep.subr.mxu0 0.0
    %5201 = vmatpush1.xpose.msra.mxu0 0.0
    %5202 = vmatprep.subr.mxu0 0.0
    %5203 = vmatpush1.xpose.msra.mxu0 0.0
    %5204 = vmatprep.subr.mxu0 0.0
    %5205 = vmatpush1.xpose.msra.mxu0 0.0
    %5206 = vmatprep.subr.mxu0 0.0
    %5207 = vmatpush1.xpose.msra.mxu0 0.0
    %5208 = vmatprep.subr.mxu0 0.0
    %5209 = vmatpush1.xpose.msra.mxu0 0.0
    %5210 = vmatprep.subr.mxu0 0.0
    %5211 = vmatpush1.xpose.msra.mxu0 0.0
    %5212 = vmatprep.subr.mxu0 0.0
    %5213 = vmatpush1.xpose.msra.mxu0 0.0
    %5214 = vmatprep.subr.mxu0 0.0
    %5215 = vmatpush1.xpose.msra.mxu0 0.0
    %5216 = vmatprep.mubr.f32.mxu0 0.0
    %5217 = vmatmul.mubr.f32.gmra.mrb[0].mxu0 %v5148
    %v5218 = vpop.f32.mrb[0].mxu0
    %v5219 = vadd.f32 0.0, %v5218
    %v5220 = vpop.f32.mrb[0].mxu0
    %5221 = vdwg.mxu0
    %v5222 = vmul.f32 %v4673, 0.25
    %v5223 = vmul.f32 %v4751, 0.25
    %v5224 = vmul.f32 %v4829, 0.25
    %v5225 = vmul.f32 %v4907, 0.25
    %v5226 = vmul.f32 %v4985, 0.25
    %v5227 = vmul.f32 %v5063, 0.25
    %v5228 = vmul.f32 %v5141, 0.25
    %v5229 = vmul.f32 %v5219, 0.25
    %v5230 = vsel %vm818, %v5222, -inf
    %5231 = vmax.xlane.f32.xlu0 %v5230
    %v5232 = vpop.xlane.xlu0 %5231
    %v5233 = vsel %vm818, %v5223, -inf
    %5234 = vmax.xlane.f32.xlu0 %v5233
    %v5235 = vpop.xlane.xlu0 %5234
    %v5236 = vsel %vm818, %v5224, -inf
    %5237 = vmax.xlane.f32.xlu0 %v5236
    %v5238 = vpop.xlane.xlu0 %5237
    %v5239 = vsel %vm818, %v5225, -inf
    %5240 = vmax.xlane.f32.xlu0 %v5239
    %v5241 = vpop.xlane.xlu0 %5240
    %v5242 = vsel %vm818, %v5226, -inf
    %5243 = vmax.xlane.f32.xlu0 %v5242
    %v5244 = vpop.xlane.xlu0 %5243
    %v5245 = vsel %vm818, %v5227, -inf
    %5246 = vmax.xlane.f32.xlu0 %v5245
    %v5247 = vpop.xlane.xlu0 %5246
    %v5248 = vsel %vm818, %v5228, -inf
    %5249 = vmax.xlane.f32.xlu0 %v5248
    %v5250 = vpop.xlane.xlu0 %5249
    %v5251 = vsel %vm818, %v5229, -inf
    %5252 = vmax.xlane.f32.xlu0 %v5251
    %v5253 = vpop.xlane.xlu0 %5252
    %v5254 = vsub.f32 %v5222, %v5232
    %v5255 = vsub.f32 %v5223, %v5235
    %v5256 = vsub.f32 %v5224, %v5238
    %v5257 = vsub.f32 %v5225, %v5241
    %v5258 = vsub.f32 %v5226, %v5244
    %v5259 = vsub.f32 %v5227, %v5247
    %v5260 = vsub.f32 %v5228, %v5250
    %v5261 = vsub.f32 %v5229, %v5253
    %v5262 = vmul.f32 %v5254, 1.442695
    %v5263 = vpow.pop %v5262
    %v5264 = vmul.f32 %v5255, 1.442695
    %v5265 = vpow.pop %v5264
    %v5266 = vmul.f32 %v5256, 1.442695
    %v5267 = vpow.pop %v5266
    %v5268 = vmul.f32 %v5257, 1.442695
    %v5269 = vpow.pop %v5268
    %v5270 = vmul.f32 %v5258, 1.442695
    %v5271 = vpow.pop %v5270
    %v5272 = vmul.f32 %v5259, 1.442695
    %v5273 = vpow.pop %v5272
    %v5274 = vmul.f32 %v5260, 1.442695
    %v5275 = vpow.pop %v5274
    %v5276 = vmul.f32 %v5261, 1.442695
    %v5277 = vpow.pop %v5276
    %v5278 = vsel %vm818, %v5263, 0.0
    %5279 = vadd.xlane.f32.xlu0 %v5278
    %v5280 = vpop.xlane.xlu0 %5279
    %v5281 = vsel %vm818, %v5265, 0.0
    %5282 = vadd.xlane.f32.xlu0 %v5281
    %v5283 = vpop.xlane.xlu0 %5282
    %v5284 = vsel %vm818, %v5267, 0.0
    %5285 = vadd.xlane.f32.xlu0 %v5284
    %v5286 = vpop.xlane.xlu0 %5285
    %v5287 = vsel %vm818, %v5269, 0.0
    %5288 = vadd.xlane.f32.xlu0 %v5287
    %v5289 = vpop.xlane.xlu0 %5288
    %v5290 = vsel %vm818, %v5271, 0.0
    %5291 = vadd.xlane.f32.xlu0 %v5290
    %v5292 = vpop.xlane.xlu0 %5291
    %v5293 = vsel %vm818, %v5273, 0.0
    %5294 = vadd.xlane.f32.xlu0 %v5293
    %v5295 = vpop.xlane.xlu0 %5294
    %v5296 = vsel %vm818, %v5275, 0.0
    %5297 = vadd.xlane.f32.xlu0 %v5296
    %v5298 = vpop.xlane.xlu0 %5297
    %v5299 = vsel %vm818, %v5277, 0.0
    %5300 = vadd.xlane.f32.xlu0 %v5299
    %v5301 = vpop.xlane.xlu0 %5300
    %5302 = vrot.lane.b32.xlu0 %v142, 80
    %v5303 = vpop.permute.xlu0 %5302
    %v5306 = vsel %vm818, %v5263, 0
    %5308 = vmatprep.subr.mxu0 0.0
    %5309 = vmatpush1.msra.mxu0 %v5303
    %5310 = vmatprep.subr.mxu0 0.0
    %5311 = vmatpush1.msra.mxu0 0.0
    %5312 = vmatprep.subr.mxu0 0.0
    %5313 = vmatpush1.msra.mxu0 0.0
    %5314 = vmatprep.subr.mxu0 0.0
    %5315 = vmatpush1.msra.mxu0 0.0
    %5316 = vmatprep.subr.mxu0 0.0
    %5317 = vmatpush1.msra.mxu0 0.0
    %5318 = vmatprep.subr.mxu0 0.0
    %5319 = vmatpush1.msra.mxu0 0.0
    %5320 = vmatprep.subr.mxu0 0.0
    %5321 = vmatpush1.msra.mxu0 0.0
    %5322 = vmatprep.subr.mxu0 0.0
    %5323 = vmatpush1.msra.mxu0 0.0
    %5324 = vmatprep.subr.mxu0 0.0
    %5325 = vmatpush1.msra.mxu0 0.0
    %5326 = vmatprep.subr.mxu0 0.0
    %5327 = vmatpush1.msra.mxu0 0.0
    %5328 = vmatprep.subr.mxu0 0.0
    %5329 = vmatpush1.msra.mxu0 0.0
    %5330 = vmatprep.subr.mxu0 0.0
    %5331 = vmatpush1.msra.mxu0 0.0
    %5332 = vmatprep.subr.mxu0 0.0
    %5333 = vmatpush1.msra.mxu0 0.0
    %5334 = vmatprep.subr.mxu0 0.0
    %5335 = vmatpush1.msra.mxu0 0.0
    %5336 = vmatprep.subr.mxu0 0.0
    %5337 = vmatpush1.msra.mxu0 0.0
    %5338 = vmatprep.subr.mxu0 0.0
    %5339 = vmatpush1.msra.mxu0 0.0
    %5340 = vmatprep.subr.mxu0 0.0
    %5341 = vmatpush1.msra.mxu0 0.0
    %5342 = vmatprep.subr.mxu0 0.0
    %5343 = vmatpush1.msra.mxu0 0.0
    %5344 = vmatprep.subr.mxu0 0.0
    %5345 = vmatpush1.msra.mxu0 0.0
    %5346 = vmatprep.subr.mxu0 0.0
    %5347 = vmatpush1.msra.mxu0 0.0
    %5348 = vmatprep.subr.mxu0 0.0
    %5349 = vmatpush1.msra.mxu0 0.0
    %5350 = vmatprep.subr.mxu0 0.0
    %5351 = vmatpush1.msra.mxu0 0.0
    %5352 = vmatprep.subr.mxu0 0.0
    %5353 = vmatpush1.msra.mxu0 0.0
    %5354 = vmatprep.subr.mxu0 0.0
    %5355 = vmatpush1.msra.mxu0 0.0
    %5356 = vmatprep.subr.mxu0 0.0
    %5357 = vmatpush1.msra.mxu0 0.0
    %5358 = vmatprep.subr.mxu0 0.0
    %5359 = vmatpush1.msra.mxu0 0.0
    %5360 = vmatprep.subr.mxu0 0.0
    %5361 = vmatpush1.msra.mxu0 0.0
    %5362 = vmatprep.subr.mxu0 0.0
    %5363 = vmatpush1.msra.mxu0 0.0
    %5364 = vmatprep.subr.mxu0 0.0
    %5365 = vmatpush1.msra.mxu0 0.0
    %5366 = vmatprep.subr.mxu0 0.0
    %5367 = vmatpush1.msra.mxu0 0.0
    %5368 = vmatprep.subr.mxu0 0.0
    %5369 = vmatpush1.msra.mxu0 0.0
    %5370 = vmatprep.subr.mxu0 0.0
    %5371 = vmatpush1.msra.mxu0 0.0
    %5372 = vmatprep.mubr.f32.mxu0 0.0
    %5373 = vmatmul.mubr.f32.gmra.mrb[0].mxu0 %v5306
    %v5374 = vpop.f32.mrb[0].mxu0
    %v5375 = vadd.f32 0.0, %v5374
    %v5376 = vpop.f32.mrb[0].mxu0
    %5377 = vdwg.mxu0
    %5378 = vrot.lane.b32.xlu0 %v148, 80
    %v5379 = vpop.permute.xlu0 %5378
    %v5382 = vsel %vm818, %v5265, 0
    %5384 = vmatprep.subr.mxu0 0.0
    %5385 = vmatpush1.msra.mxu0 %v5379
    %5386 = vmatprep.subr.mxu0 0.0
    %5387 = vmatpush1.msra.mxu0 0.0
    %5388 = vmatprep.subr.mxu0 0.0
    %5389 = vmatpush1.msra.mxu0 0.0
    %5390 = vmatprep.subr.mxu0 0.0
    %5391 = vmatpush1.msra.mxu0 0.0
    %5392 = vmatprep.subr.mxu0 0.0
    %5393 = vmatpush1.msra.mxu0 0.0
    %5394 = vmatprep.subr.mxu0 0.0
    %5395 = vmatpush1.msra.mxu0 0.0
    %5396 = vmatprep.subr.mxu0 0.0
    %5397 = vmatpush1.msra.mxu0 0.0
    %5398 = vmatprep.subr.mxu0 0.0
    %5399 = vmatpush1.msra.mxu0 0.0
    %5400 = vmatprep.subr.mxu0 0.0
    %5401 = vmatpush1.msra.mxu0 0.0
    %5402 = vmatprep.subr.mxu0 0.0
    %5403 = vmatpush1.msra.mxu0 0.0
    %5404 = vmatprep.subr.mxu0 0.0
    %5405 = vmatpush1.msra.mxu0 0.0
    %5406 = vmatprep.subr.mxu0 0.0
    %5407 = vmatpush1.msra.mxu0 0.0
    %5408 = vmatprep.subr.mxu0 0.0
    %5409 = vmatpush1.msra.mxu0 0.0
    %5410 = vmatprep.subr.mxu0 0.0
    %5411 = vmatpush1.msra.mxu0 0.0
    %5412 = vmatprep.subr.mxu0 0.0
    %5413 = vmatpush1.msra.mxu0 0.0
    %5414 = vmatprep.subr.mxu0 0.0
    %5415 = vmatpush1.msra.mxu0 0.0
    %5416 = vmatprep.subr.mxu0 0.0
    %5417 = vmatpush1.msra.mxu0 0.0
    %5418 = vmatprep.subr.mxu0 0.0
    %5419 = vmatpush1.msra.mxu0 0.0
    %5420 = vmatprep.subr.mxu0 0.0
    %5421 = vmatpush1.msra.mxu0 0.0
    %5422 = vmatprep.subr.mxu0 0.0
    %5423 = vmatpush1.msra.mxu0 0.0
    %5424 = vmatprep.subr.mxu0 0.0
    %5425 = vmatpush1.msra.mxu0 0.0
    %5426 = vmatprep.subr.mxu0 0.0
    %5427 = vmatpush1.msra.mxu0 0.0
    %5428 = vmatprep.subr.mxu0 0.0
    %5429 = vmatpush1.msra.mxu0 0.0
    %5430 = vmatprep.subr.mxu0 0.0
    %5431 = vmatpush1.msra.mxu0 0.0
    %5432 = vmatprep.subr.mxu0 0.0
    %5433 = vmatpush1.msra.mxu0 0.0
    %5434 = vmatprep.subr.mxu0 0.0
    %5435 = vmatpush1.msra.mxu0 0.0
    %5436 = vmatprep.subr.mxu0 0.0
    %5437 = vmatpush1.msra.mxu0 0.0
    %5438 = vmatprep.subr.mxu0 0.0
    %5439 = vmatpush1.msra.mxu0 0.0
    %5440 = vmatprep.subr.mxu0 0.0
    %5441 = vmatpush1.msra.mxu0 0.0
    %5442 = vmatprep.subr.mxu0 0.0
    %5443 = vmatpush1.msra.mxu0 0.0
    %5444 = vmatprep.subr.mxu0 0.0
    %5445 = vmatpush1.msra.mxu0 0.0
    %5446 = vmatprep.subr.mxu0 0.0
    %5447 = vmatpush1.msra.mxu0 0.0
    %5448 = vmatprep.mubr.f32.mxu0 0.0
    %5449 = vmatmul.mubr.f32.gmra.mrb[0].mxu0 %v5382
    %v5450 = vpop.f32.mrb[0].mxu0
    %v5451 = vadd.f32 0.0, %v5450
    %v5452 = vpop.f32.mrb[0].mxu0
    %5453 = vdwg.mxu0
    %5454 = vrot.lane.b32.xlu0 %v154, 80
    %v5455 = vpop.permute.xlu0 %5454
    %v5458 = vsel %vm818, %v5267, 0
    %5460 = vmatprep.subr.mxu0 0.0
    %5461 = vmatpush1.msra.mxu0 %v5455
    %5462 = vmatprep.subr.mxu0 0.0
    %5463 = vmatpush1.msra.mxu0 0.0
    %5464 = vmatprep.subr.mxu0 0.0
    %5465 = vmatpush1.msra.mxu0 0.0
    %5466 = vmatprep.subr.mxu0 0.0
    %5467 = vmatpush1.msra.mxu0 0.0
    %5468 = vmatprep.subr.mxu0 0.0
    %5469 = vmatpush1.msra.mxu0 0.0
    %5470 = vmatprep.subr.mxu0 0.0
    %5471 = vmatpush1.msra.mxu0 0.0
    %5472 = vmatprep.subr.mxu0 0.0
    %5473 = vmatpush1.msra.mxu0 0.0
    %5474 = vmatprep.subr.mxu0 0.0
    %5475 = vmatpush1.msra.mxu0 0.0
    %5476 = vmatprep.subr.mxu0 0.0
    %5477 = vmatpush1.msra.mxu0 0.0
    %5478 = vmatprep.subr.mxu0 0.0
    %5479 = vmatpush1.msra.mxu0 0.0
    %5480 = vmatprep.subr.mxu0 0.0
    %5481 = vmatpush1.msra.mxu0 0.0
    %5482 = vmatprep.subr.mxu0 0.0
    %5483 = vmatpush1.msra.mxu0 0.0
    %5484 = vmatprep.subr.mxu0 0.0
    %5485 = vmatpush1.msra.mxu0 0.0
    %5486 = vmatprep.subr.mxu0 0.0
    %5487 = vmatpush1.msra.mxu0 0.0
    %5488 = vmatprep.subr.mxu0 0.0
    %5489 = vmatpush1.msra.mxu0 0.0
    %5490 = vmatprep.subr.mxu0 0.0
    %5491 = vmatpush1.msra.mxu0 0.0
    %5492 = vmatprep.subr.mxu0 0.0
    %5493 = vmatpush1.msra.mxu0 0.0
    %5494 = vmatprep.subr.mxu0 0.0
    %5495 = vmatpush1.msra.mxu0 0.0
    %5496 = vmatprep.subr.mxu0 0.0
    %5497 = vmatpush1.msra.mxu0 0.0
    %5498 = vmatprep.subr.mxu0 0.0
    %5499 = vmatpush1.msra.mxu0 0.0
    %5500 = vmatprep.subr.mxu0 0.0
    %5501 = vmatpush1.msra.mxu0 0.0
    %5502 = vmatprep.subr.mxu0 0.0
    %5503 = vmatpush1.msra.mxu0 0.0
    %5504 = vmatprep.subr.mxu0 0.0
    %5505 = vmatpush1.msra.mxu0 0.0
    %5506 = vmatprep.subr.mxu0 0.0
    %5507 = vmatpush1.msra.mxu0 0.0
    %5508 = vmatprep.subr.mxu0 0.0
    %5509 = vmatpush1.msra.mxu0 0.0
    %5510 = vmatprep.subr.mxu0 0.0
    %5511 = vmatpush1.msra.mxu0 0.0
    %5512 = vmatprep.subr.mxu0 0.0
    %5513 = vmatpush1.msra.mxu0 0.0
    %5514 = vmatprep.subr.mxu0 0.0
    %5515 = vmatpush1.msra.mxu0 0.0
    %5516 = vmatprep.subr.mxu0 0.0
    %5517 = vmatpush1.msra.mxu0 0.0
    %5518 = vmatprep.subr.mxu0 0.0
    %5519 = vmatpush1.msra.mxu0 0.0
    %5520 = vmatprep.subr.mxu0 0.0
    %5521 = vmatpush1.msra.mxu0 0.0
    %5522 = vmatprep.subr.mxu0 0.0
    %5523 = vmatpush1.msra.mxu0 0.0
    %5524 = vmatprep.mubr.f32.mxu0 0.0
    %5525 = vmatmul.mubr.f32.gmra.mrb[0].mxu0 %v5458
    %v5526 = vpop.f32.mrb[0].mxu0
    %v5527 = vadd.f32 0.0, %v5526
    %v5528 = vpop.f32.mrb[0].mxu0
    %5529 = vdwg.mxu0
    %5530 = vrot.lane.b32.xlu0 %v160, 80
    %v5531 = vpop.permute.xlu0 %5530
    %v5534 = vsel %vm818, %v5269, 0
    %5536 = vmatprep.subr.mxu0 0.0
    %5537 = vmatpush1.msra.mxu0 %v5531
    %5538 = vmatprep.subr.mxu0 0.0
    %5539 = vmatpush1.msra.mxu0 0.0
    %5540 = vmatprep.subr.mxu0 0.0
    %5541 = vmatpush1.msra.mxu0 0.0
    %5542 = vmatprep.subr.mxu0 0.0
    %5543 = vmatpush1.msra.mxu0 0.0
    %5544 = vmatprep.subr.mxu0 0.0
    %5545 = vmatpush1.msra.mxu0 0.0
    %5546 = vmatprep.subr.mxu0 0.0
    %5547 = vmatpush1.msra.mxu0 0.0
    %5548 = vmatprep.subr.mxu0 0.0
    %5549 = vmatpush1.msra.mxu0 0.0
    %5550 = vmatprep.subr.mxu0 0.0
    %5551 = vmatpush1.msra.mxu0 0.0
    %5552 = vmatprep.subr.mxu0 0.0
    %5553 = vmatpush1.msra.mxu0 0.0
    %5554 = vmatprep.subr.mxu0 0.0
    %5555 = vmatpush1.msra.mxu0 0.0
    %5556 = vmatprep.subr.mxu0 0.0
    %5557 = vmatpush1.msra.mxu0 0.0
    %5558 = vmatprep.subr.mxu0 0.0
    %5559 = vmatpush1.msra.mxu0 0.0
    %5560 = vmatprep.subr.mxu0 0.0
    %5561 = vmatpush1.msra.mxu0 0.0
    %5562 = vmatprep.subr.mxu0 0.0
    %5563 = vmatpush1.msra.mxu0 0.0
    %5564 = vmatprep.subr.mxu0 0.0
    %5565 = vmatpush1.msra.mxu0 0.0
    %5566 = vmatprep.subr.mxu0 0.0
    %5567 = vmatpush1.msra.mxu0 0.0
    %5568 = vmatprep.subr.mxu0 0.0
    %5569 = vmatpush1.msra.mxu0 0.0
    %5570 = vmatprep.subr.mxu0 0.0
    %5571 = vmatpush1.msra.mxu0 0.0
    %5572 = vmatprep.subr.mxu0 0.0
    %5573 = vmatpush1.msra.mxu0 0.0
    %5574 = vmatprep.subr.mxu0 0.0
    %5575 = vmatpush1.msra.mxu0 0.0
    %5576 = vmatprep.subr.mxu0 0.0
    %5577 = vmatpush1.msra.mxu0 0.0
    %5578 = vmatprep.subr.mxu0 0.0
    %5579 = vmatpush1.msra.mxu0 0.0
    %5580 = vmatprep.subr.mxu0 0.0
    %5581 = vmatpush1.msra.mxu0 0.0
    %5582 = vmatprep.subr.mxu0 0.0
    %5583 = vmatpush1.msra.mxu0 0.0
    %5584 = vmatprep.subr.mxu0 0.0
    %5585 = vmatpush1.msra.mxu0 0.0
    %5586 = vmatprep.subr.mxu0 0.0
    %5587 = vmatpush1.msra.mxu0 0.0
    %5588 = vmatprep.subr.mxu0 0.0
    %5589 = vmatpush1.msra.mxu0 0.0
    %5590 = vmatprep.subr.mxu0 0.0
    %5591 = vmatpush1.msra.mxu0 0.0
    %5592 = vmatprep.subr.mxu0 0.0
    %5593 = vmatpush1.msra.mxu0 0.0
    %5594 = vmatprep.subr.mxu0 0.0
    %5595 = vmatpush1.msra.mxu0 0.0
    %5596 = vmatprep.subr.mxu0 0.0
    %5597 = vmatpush1.msra.mxu0 0.0
    %5598 = vmatprep.subr.mxu0 0.0
    %5599 = vmatpush1.msra.mxu0 0.0
    %5600 = vmatprep.mubr.f32.mxu0 0.0
    %5601 = vmatmul.mubr.f32.gmra.mrb[0].mxu0 %v5534
    %v5602 = vpop.f32.mrb[0].mxu0
    %v5603 = vadd.f32 0.0, %v5602
    %v5604 = vpop.f32.mrb[0].mxu0
    %5605 = vdwg.mxu0
    %5606 = vrot.lane.b32.xlu0 %v166, 80
    %v5607 = vpop.permute.xlu0 %5606
    %v5610 = vsel %vm818, %v5271, 0
    %5612 = vmatprep.subr.mxu0 0.0
    %5613 = vmatpush1.msra.mxu0 %v5607
    %5614 = vmatprep.subr.mxu0 0.0
    %5615 = vmatpush1.msra.mxu0 0.0
    %5616 = vmatprep.subr.mxu0 0.0
    %5617 = vmatpush1.msra.mxu0 0.0
    %5618 = vmatprep.subr.mxu0 0.0
    %5619 = vmatpush1.msra.mxu0 0.0
    %5620 = vmatprep.subr.mxu0 0.0
    %5621 = vmatpush1.msra.mxu0 0.0
    %5622 = vmatprep.subr.mxu0 0.0
    %5623 = vmatpush1.msra.mxu0 0.0
    %5624 = vmatprep.subr.mxu0 0.0
    %5625 = vmatpush1.msra.mxu0 0.0
    %5626 = vmatprep.subr.mxu0 0.0
    %5627 = vmatpush1.msra.mxu0 0.0
    %5628 = vmatprep.subr.mxu0 0.0
    %5629 = vmatpush1.msra.mxu0 0.0
    %5630 = vmatprep.subr.mxu0 0.0
    %5631 = vmatpush1.msra.mxu0 0.0
    %5632 = vmatprep.subr.mxu0 0.0
    %5633 = vmatpush1.msra.mxu0 0.0
    %5634 = vmatprep.subr.mxu0 0.0
    %5635 = vmatpush1.msra.mxu0 0.0
    %5636 = vmatprep.subr.mxu0 0.0
    %5637 = vmatpush1.msra.mxu0 0.0
    %5638 = vmatprep.subr.mxu0 0.0
    %5639 = vmatpush1.msra.mxu0 0.0
    %5640 = vmatprep.subr.mxu0 0.0
    %5641 = vmatpush1.msra.mxu0 0.0
    %5642 = vmatprep.subr.mxu0 0.0
    %5643 = vmatpush1.msra.mxu0 0.0
    %5644 = vmatprep.subr.mxu0 0.0
    %5645 = vmatpush1.msra.mxu0 0.0
    %5646 = vmatprep.subr.mxu0 0.0
    %5647 = vmatpush1.msra.mxu0 0.0
    %5648 = vmatprep.subr.mxu0 0.0
    %5649 = vmatpush1.msra.mxu0 0.0
    %5650 = vmatprep.subr.mxu0 0.0
    %5651 = vmatpush1.msra.mxu0 0.0
    %5652 = vmatprep.subr.mxu0 0.0
    %5653 = vmatpush1.msra.mxu0 0.0
    %5654 = vmatprep.subr.mxu0 0.0
    %5655 = vmatpush1.msra.mxu0 0.0
    %5656 = vmatprep.subr.mxu0 0.0
    %5657 = vmatpush1.msra.mxu0 0.0
    %5658 = vmatprep.subr.mxu0 0.0
    %5659 = vmatpush1.msra.mxu0 0.0
    %5660 = vmatprep.subr.mxu0 0.0
    %5661 = vmatpush1.msra.mxu0 0.0
    %5662 = vmatprep.subr.mxu0 0.0
    %5663 = vmatpush1.msra.mxu0 0.0
    %5664 = vmatprep.subr.mxu0 0.0
    %5665 = vmatpush1.msra.mxu0 0.0
    %5666 = vmatprep.subr.mxu0 0.0
    %5667 = vmatpush1.msra.mxu0 0.0
    %5668 = vmatprep.subr.mxu0 0.0
    %5669 = vmatpush1.msra.mxu0 0.0
    %5670 = vmatprep.subr.mxu0 0.0
    %5671 = vmatpush1.msra.mxu0 0.0
    %5672 = vmatprep.subr.mxu0 0.0
    %5673 = vmatpush1.msra.mxu0 0.0
    %5674 = vmatprep.subr.mxu0 0.0
    %5675 = vmatpush1.msra.mxu0 0.0
    %5676 = vmatprep.mubr.f32.mxu0 0.0
    %5677 = vmatmul.mubr.f32.gmra.mrb[0].mxu0 %v5610
    %v5678 = vpop.f32.mrb[0].mxu0
    %v5679 = vadd.f32 0.0, %v5678
    %v5680 = vpop.f32.mrb[0].mxu0
    %5681 = vdwg.mxu0
    %5682 = vrot.lane.b32.xlu0 %v172, 80
    %v5683 = vpop.permute.xlu0 %5682
    %v5686 = vsel %vm818, %v5273, 0
    %5688 = vmatprep.subr.mxu0 0.0
    %5689 = vmatpush1.msra.mxu0 %v5683
    %5690 = vmatprep.subr.mxu0 0.0
    %5691 = vmatpush1.msra.mxu0 0.0
    %5692 = vmatprep.subr.mxu0 0.0
    %5693 = vmatpush1.msra.mxu0 0.0
    %5694 = vmatprep.subr.mxu0 0.0
    %5695 = vmatpush1.msra.mxu0 0.0
    %5696 = vmatprep.subr.mxu0 0.0
    %5697 = vmatpush1.msra.mxu0 0.0
    %5698 = vmatprep.subr.mxu0 0.0
    %5699 = vmatpush1.msra.mxu0 0.0
    %5700 = vmatprep.subr.mxu0 0.0
    %5701 = vmatpush1.msra.mxu0 0.0
    %5702 = vmatprep.subr.mxu0 0.0
    %5703 = vmatpush1.msra.mxu0 0.0
    %5704 = vmatprep.subr.mxu0 0.0
    %5705 = vmatpush1.msra.mxu0 0.0
    %5706 = vmatprep.subr.mxu0 0.0
    %5707 = vmatpush1.msra.mxu0 0.0
    %5708 = vmatprep.subr.mxu0 0.0
    %5709 = vmatpush1.msra.mxu0 0.0
    %5710 = vmatprep.subr.mxu0 0.0
    %5711 = vmatpush1.msra.mxu0 0.0
    %5712 = vmatprep.subr.mxu0 0.0
    %5713 = vmatpush1.msra.mxu0 0.0
    %5714 = vmatprep.subr.mxu0 0.0
    %5715 = vmatpush1.msra.mxu0 0.0
    %5716 = vmatprep.subr.mxu0 0.0
    %5717 = vmatpush1.msra.mxu0 0.0
    %5718 = vmatprep.subr.mxu0 0.0
    %5719 = vmatpush1.msra.mxu0 0.0
    %5720 = vmatprep.subr.mxu0 0.0
    %5721 = vmatpush1.msra.mxu0 0.0
    %5722 = vmatprep.subr.mxu0 0.0
    %5723 = vmatpush1.msra.mxu0 0.0
    %5724 = vmatprep.subr.mxu0 0.0
    %5725 = vmatpush1.msra.mxu0 0.0
    %5726 = vmatprep.subr.mxu0 0.0
    %5727 = vmatpush1.msra.mxu0 0.0
    %5728 = vmatprep.subr.mxu0 0.0
    %5729 = vmatpush1.msra.mxu0 0.0
    %5730 = vmatprep.subr.mxu0 0.0
    %5731 = vmatpush1.msra.mxu0 0.0
    %5732 = vmatprep.subr.mxu0 0.0
    %5733 = vmatpush1.msra.mxu0 0.0
    %5734 = vmatprep.subr.mxu0 0.0
    %5735 = vmatpush1.msra.mxu0 0.0
    %5736 = vmatprep.subr.mxu0 0.0
    %5737 = vmatpush1.msra.mxu0 0.0
    %5738 = vmatprep.subr.mxu0 0.0
    %5739 = vmatpush1.msra.mxu0 0.0
    %5740 = vmatprep.subr.mxu0 0.0
    %5741 = vmatpush1.msra.mxu0 0.0
    %5742 = vmatprep.subr.mxu0 0.0
    %5743 = vmatpush1.msra.mxu0 0.0
    %5744 = vmatprep.subr.mxu0 0.0
    %5745 = vmatpush1.msra.mxu0 0.0
    %5746 = vmatprep.subr.mxu0 0.0
    %5747 = vmatpush1.msra.mxu0 0.0
    %5748 = vmatprep.subr.mxu0 0.0
    %5749 = vmatpush1.msra.mxu0 0.0
    %5750 = vmatprep.subr.mxu0 0.0
    %5751 = vmatpush1.msra.mxu0 0.0
    %5752 = vmatprep.mubr.f32.mxu0 0.0
    %5753 = vmatmul.mubr.f32.gmra.mrb[0].mxu0 %v5686
    %v5754 = vpop.f32.mrb[0].mxu0
    %v5755 = vadd.f32 0.0, %v5754
    %v5756 = vpop.f32.mrb[0].mxu0
    %5757 = vdwg.mxu0
    %5758 = vrot.lane.b32.xlu0 %v178, 80
    %v5759 = vpop.permute.xlu0 %5758
    %v5762 = vsel %vm818, %v5275, 0
    %5764 = vmatprep.subr.mxu0 0.0
    %5765 = vmatpush1.msra.mxu0 %v5759
    %5766 = vmatprep.subr.mxu0 0.0
    %5767 = vmatpush1.msra.mxu0 0.0
    %5768 = vmatprep.subr.mxu0 0.0
    %5769 = vmatpush1.msra.mxu0 0.0
    %5770 = vmatprep.subr.mxu0 0.0
    %5771 = vmatpush1.msra.mxu0 0.0
    %5772 = vmatprep.subr.mxu0 0.0
    %5773 = vmatpush1.msra.mxu0 0.0
    %5774 = vmatprep.subr.mxu0 0.0
    %5775 = vmatpush1.msra.mxu0 0.0
    %5776 = vmatprep.subr.mxu0 0.0
    %5777 = vmatpush1.msra.mxu0 0.0
    %5778 = vmatprep.subr.mxu0 0.0
    %5779 = vmatpush1.msra.mxu0 0.0
    %5780 = vmatprep.subr.mxu0 0.0
    %5781 = vmatpush1.msra.mxu0 0.0
    %5782 = vmatprep.subr.mxu0 0.0
    %5783 = vmatpush1.msra.mxu0 0.0
    %5784 = vmatprep.subr.mxu0 0.0
    %5785 = vmatpush1.msra.mxu0 0.0
    %5786 = vmatprep.subr.mxu0 0.0
    %5787 = vmatpush1.msra.mxu0 0.0
    %5788 = vmatprep.subr.mxu0 0.0
    %5789 = vmatpush1.msra.mxu0 0.0
    %5790 = vmatprep.subr.mxu0 0.0
    %5791 = vmatpush1.msra.mxu0 0.0
    %5792 = vmatprep.subr.mxu0 0.0
    %5793 = vmatpush1.msra.mxu0 0.0
    %5794 = vmatprep.subr.mxu0 0.0
    %5795 = vmatpush1.msra.mxu0 0.0
    %5796 = vmatprep.subr.mxu0 0.0
    %5797 = vmatpush1.msra.mxu0 0.0
    %5798 = vmatprep.subr.mxu0 0.0
    %5799 = vmatpush1.msra.mxu0 0.0
    %5800 = vmatprep.subr.mxu0 0.0
    %5801 = vmatpush1.msra.mxu0 0.0
    %5802 = vmatprep.subr.mxu0 0.0
    %5803 = vmatpush1.msra.mxu0 0.0
    %5804 = vmatprep.subr.mxu0 0.0
    %5805 = vmatpush1.msra.mxu0 0.0
    %5806 = vmatprep.subr.mxu0 0.0
    %5807 = vmatpush1.msra.mxu0 0.0
    %5808 = vmatprep.subr.mxu0 0.0
    %5809 = vmatpush1.msra.mxu0 0.0
    %5810 = vmatprep.subr.mxu0 0.0
    %5811 = vmatpush1.msra.mxu0 0.0
    %5812 = vmatprep.subr.mxu0 0.0
    %5813 = vmatpush1.msra.mxu0 0.0
    %5814 = vmatprep.subr.mxu0 0.0
    %5815 = vmatpush1.msra.mxu0 0.0
    %5816 = vmatprep.subr.mxu0 0.0
    %5817 = vmatpush1.msra.mxu0 0.0
    %5818 = vmatprep.subr.mxu0 0.0
    %5819 = vmatpush1.msra.mxu0 0.0
    %5820 = vmatprep.subr.mxu0 0.0
    %5821 = vmatpush1.msra.mxu0 0.0
    %5822 = vmatprep.subr.mxu0 0.0
    %5823 = vmatpush1.msra.mxu0 0.0
    %5824 = vmatprep.subr.mxu0 0.0
    %5825 = vmatpush1.msra.mxu0 0.0
    %5826 = vmatprep.subr.mxu0 0.0
    %5827 = vmatpush1.msra.mxu0 0.0
    %5828 = vmatprep.mubr.f32.mxu0 0.0
    %5829 = vmatmul.mubr.f32.gmra.mrb[0].mxu0 %v5762
    %v5830 = vpop.f32.mrb[0].mxu0
    %v5831 = vadd.f32 0.0, %v5830
    %v5832 = vpop.f32.mrb[0].mxu0
    %5833 = vdwg.mxu0
    %5834 = vrot.lane.b32.xlu0 %v184, 80
    %v5835 = vpop.permute.xlu0 %5834
    %v5838 = vsel %vm818, %v5277, 0
    %5840 = vmatprep.subr.mxu0 0.0
    %5841 = vmatpush1.msra.mxu0 %v5835
    %5842 = vmatprep.subr.mxu0 0.0
    %5843 = vmatpush1.msra.mxu0 0.0
    %5844 = vmatprep.subr.mxu0 0.0
    %5845 = vmatpush1.msra.mxu0 0.0
    %5846 = vmatprep.subr.mxu0 0.0
    %5847 = vmatpush1.msra.mxu0 0.0
    %5848 = vmatprep.subr.mxu0 0.0
    %5849 = vmatpush1.msra.mxu0 0.0
    %5850 = vmatprep.subr.mxu0 0.0
    %5851 = vmatpush1.msra.mxu0 0.0
    %5852 = vmatprep.subr.mxu0 0.0
    %5853 = vmatpush1.msra.mxu0 0.0
    %5854 = vmatprep.subr.mxu0 0.0
    %5855 = vmatpush1.msra.mxu0 0.0
    %5856 = vmatprep.subr.mxu0 0.0
    %5857 = vmatpush1.msra.mxu0 0.0
    %5858 = vmatprep.subr.mxu0 0.0
    %5859 = vmatpush1.msra.mxu0 0.0
    %5860 = vmatprep.subr.mxu0 0.0
    %5861 = vmatpush1.msra.mxu0 0.0
    %5862 = vmatprep.subr.mxu0 0.0
    %5863 = vmatpush1.msra.mxu0 0.0
    %5864 = vmatprep.subr.mxu0 0.0
    %5865 = vmatpush1.msra.mxu0 0.0
    %5866 = vmatprep.subr.mxu0 0.0
    %5867 = vmatpush1.msra.mxu0 0.0
    %5868 = vmatprep.subr.mxu0 0.0
    %5869 = vmatpush1.msra.mxu0 0.0
    %5870 = vmatprep.subr.mxu0 0.0
    %5871 = vmatpush1.msra.mxu0 0.0
    %5872 = vmatprep.subr.mxu0 0.0
    %5873 = vmatpush1.msra.mxu0 0.0
    %5874 = vmatprep.subr.mxu0 0.0
    %5875 = vmatpush1.msra.mxu0 0.0
    %5876 = vmatprep.subr.mxu0 0.0
    %5877 = vmatpush1.msra.mxu0 0.0
    %5878 = vmatprep.subr.mxu0 0.0
    %5879 = vmatpush1.msra.mxu0 0.0
    %5880 = vmatprep.subr.mxu0 0.0
    %5881 = vmatpush1.msra.mxu0 0.0
    %5882 = vmatprep.subr.mxu0 0.0
    %5883 = vmatpush1.msra.mxu0 0.0
    %5884 = vmatprep.subr.mxu0 0.0
    %5885 = vmatpush1.msra.mxu0 0.0
    %5886 = vmatprep.subr.mxu0 0.0
    %5887 = vmatpush1.msra.mxu0 0.0
    %5888 = vmatprep.subr.mxu0 0.0
    %5889 = vmatpush1.msra.mxu0 0.0
    %5890 = vmatprep.subr.mxu0 0.0
    %5891 = vmatpush1.msra.mxu0 0.0
    %5892 = vmatprep.subr.mxu0 0.0
    %5893 = vmatpush1.msra.mxu0 0.0
    %5894 = vmatprep.subr.mxu0 0.0
    %5895 = vmatpush1.msra.mxu0 0.0
    %5896 = vmatprep.subr.mxu0 0.0
    %5897 = vmatpush1.msra.mxu0 0.0
    %5898 = vmatprep.subr.mxu0 0.0
    %5899 = vmatpush1.msra.mxu0 0.0
    %5900 = vmatprep.subr.mxu0 0.0
    %5901 = vmatpush1.msra.mxu0 0.0
    %5902 = vmatprep.subr.mxu0 0.0
    %5903 = vmatpush1.msra.mxu0 0.0
    %5904 = vmatprep.mubr.f32.mxu0 0.0
    %5905 = vmatmul.mubr.f32.gmra.mrb[0].mxu0 %v5838
    %v5906 = vpop.f32.mrb[0].mxu0
    %v5907 = vadd.f32 0.0, %v5906
    %v5908 = vpop.f32.mrb[0].mxu0
    %5909 = vdwg.mxu0
    %v5910 = vrcp.pop %v5280
    %v5911 = vmul.f32 1.0, %v5910
    %v5912 = vrcp.pop %v5283
    %v5913 = vmul.f32 1.0, %v5912
    %v5914 = vrcp.pop %v5286
    %v5915 = vmul.f32 1.0, %v5914
    %v5916 = vrcp.pop %v5289
    %v5917 = vmul.f32 1.0, %v5916
    %v5918 = vrcp.pop %v5292
    %v5919 = vmul.f32 1.0, %v5918
    %v5920 = vrcp.pop %v5295
    %v5921 = vmul.f32 1.0, %v5920
    %v5922 = vrcp.pop %v5298
    %v5923 = vmul.f32 1.0, %v5922
    %v5924 = vrcp.pop %v5301
    %v5925 = vmul.f32 1.0, %v5924
    %v5926 = vmul.f32 %v5375, %v5911
    %v5927 = vmul.f32 %v5451, %v5913
    %v5928 = vmul.f32 %v5527, %v5915
    %v5929 = vmul.f32 %v5603, %v5917
    %v5930 = vmul.f32 %v5679, %v5919
    %v5931 = vmul.f32 %v5755, %v5921
    %v5932 = vmul.f32 %v5831, %v5923
    %v5933 = vmul.f32 %v5907, %v5925
    %s5934 = scalar_lea.vmem %s2, 48
    %v5935 = vld [vmem:[%s5934] sm:$0xff]
    %v5936 = vld [vmem:[%s5934 + $0x8] sm:$0xff]
    %v5938 = vsel %vm196, %v5926, 0
    %v5941 = vsel %vm196, %v5927, 0
    %v5944 = vsel %vm196, %v5928, 0
    %v5947 = vsel %vm196, %v5929, 0
    %v5950 = vsel %vm196, %v5930, 0
    %v5953 = vsel %vm196, %v5931, 0
    %v5956 = vsel %vm196, %v5932, 0
    %v5959 = vsel %vm196, %v5933, 0
    %5961 = vmatprep.subr.mxu0 0.0
    %5962 = vmatpush1.msra.mxu0 %v5935
    %5963 = vmatprep.subr.mxu0 0.0
    %5964 = vmatpush1.msra.mxu0 %v5936
    %5965 = vmatprep.subr.mxu0 0.0
    %5966 = vmatpush1.msra.mxu0 0.0
    %5967 = vmatprep.subr.mxu0 0.0
    %5968 = vmatpush1.msra.mxu0 0.0
    %5969 = vmatprep.subr.mxu0 0.0
    %5970 = vmatpush1.msra.mxu0 0.0
    %5971 = vmatprep.subr.mxu0 0.0
    %5972 = vmatpush1.msra.mxu0 0.0
    %5973 = vmatprep.subr.mxu0 0.0
    %5974 = vmatpush1.msra.mxu0 0.0
    %5975 = vmatprep.subr.mxu0 0.0
    %5976 = vmatpush1.msra.mxu0 0.0
    %5977 = vmatprep.subr.mxu0 0.0
    %5978 = vmatpush1.msra.mxu0 0.0
    %5979 = vmatprep.subr.mxu0 0.0
    %5980 = vmatpush1.msra.mxu0 0.0
    %5981 = vmatprep.subr.mxu0 0.0
    %5982 = vmatpush1.msra.mxu0 0.0
    %5983 = vmatprep.subr.mxu0 0.0
    %5984 = vmatpush1.msra.mxu0 0.0
    %5985 = vmatprep.subr.mxu0 0.0
    %5986 = vmatpush1.msra.mxu0 0.0
    %5987 = vmatprep.subr.mxu0 0.0
    %5988 = vmatpush1.msra.mxu0 0.0
    %5989 = vmatprep.subr.mxu0 0.0
    %5990 = vmatpush1.msra.mxu0 0.0
    %5991 = vmatprep.subr.mxu0 0.0
    %5992 = vmatpush1.msra.mxu0 0.0
    %5993 = vmatprep.subr.mxu0 0.0
    %5994 = vmatpush1.msra.mxu0 0.0
    %5995 = vmatprep.subr.mxu0 0.0
    %5996 = vmatpush1.msra.mxu0 0.0
    %5997 = vmatprep.subr.mxu0 0.0
    %5998 = vmatpush1.msra.mxu0 0.0
    %5999 = vmatprep.subr.mxu0 0.0
    %6000 = vmatpush1.msra.mxu0 0.0
    %6001 = vmatprep.subr.mxu0 0.0
    %6002 = vmatpush1.msra.mxu0 0.0
    %6003 = vmatprep.subr.mxu0 0.0
    %6004 = vmatpush1.msra.mxu0 0.0
    %6005 = vmatprep.subr.mxu0 0.0
    %6006 = vmatpush1.msra.mxu0 0.0
    %6007 = vmatprep.subr.mxu0 0.0
    %6008 = vmatpush1.msra.mxu0 0.0
    %6009 = vmatprep.subr.mxu0 0.0
    %6010 = vmatpush1.msra.mxu0 0.0
    %6011 = vmatprep.subr.mxu0 0.0
    %6012 = vmatpush1.msra.mxu0 0.0
    %6013 = vmatprep.subr.mxu0 0.0
    %6014 = vmatpush1.msra.mxu0 0.0
    %6015 = vmatprep.subr.mxu0 0.0
    %6016 = vmatpush1.msra.mxu0 0.0
    %6017 = vmatprep.subr.mxu0 0.0
    %6018 = vmatpush1.msra.mxu0 0.0
    %6019 = vmatprep.subr.mxu0 0.0
    %6020 = vmatpush1.msra.mxu0 0.0
    %6021 = vmatprep.subr.mxu0 0.0
    %6022 = vmatpush1.msra.mxu0 0.0
    %6023 = vmatprep.subr.mxu0 0.0
    %6024 = vmatpush1.msra.mxu0 0.0
    %6025 = vmatprep.mubr.f32.mxu0 0.0
    %6026 = vmatmul.mubr.f32.gmra.mrb[0].mxu0 %v5938
    %v6027 = vpop.f32.mrb[0].mxu0
    %v6028 = vadd.f32 0.0, %v6027
    %v6029 = vpop.f32.mrb[0].mxu0
    %6030 = vmatprep.mubr.f32.mxu0 0.0
    %6031 = vmatmul.mubr.f32.gmra.mrb[0].mxu0 %v5941
    %v6032 = vpop.f32.mrb[0].mxu0
    %v6033 = vadd.f32 0.0, %v6032
    %v6034 = vpop.f32.mrb[0].mxu0
    %6035 = vmatprep.mubr.f32.mxu0 0.0
    %6036 = vmatmul.mubr.f32.gmra.mrb[0].mxu0 %v5944
    %v6037 = vpop.f32.mrb[0].mxu0
    %v6038 = vadd.f32 0.0, %v6037
    %v6039 = vpop.f32.mrb[0].mxu0
    %6040 = vmatprep.mubr.f32.mxu0 0.0
    %6041 = vmatmul.mubr.f32.gmra.mrb[0].mxu0 %v5947
    %v6042 = vpop.f32.mrb[0].mxu0
    %v6043 = vadd.f32 0.0, %v6042
    %v6044 = vpop.f32.mrb[0].mxu0
    %6045 = vmatprep.mubr.f32.mxu0 0.0
    %6046 = vmatmul.mubr.f32.gmra.mrb[0].mxu0 %v5950
    %v6047 = vpop.f32.mrb[0].mxu0
    %v6048 = vadd.f32 0.0, %v6047
    %v6049 = vpop.f32.mrb[0].mxu0
    %6050 = vmatprep.mubr.f32.mxu0 0.0
    %6051 = vmatmul.mubr.f32.gmra.mrb[0].mxu0 %v5953
    %v6052 = vpop.f32.mrb[0].mxu0
    %v6053 = vadd.f32 0.0, %v6052
    %v6054 = vpop.f32.mrb[0].mxu0
    %6055 = vmatprep.mubr.f32.mxu0 0.0
    %6056 = vmatmul.mubr.f32.gmra.mrb[0].mxu0 %v5956
    %v6057 = vpop.f32.mrb[0].mxu0
    %v6058 = vadd.f32 0.0, %v6057
    %v6059 = vpop.f32.mrb[0].mxu0
    %6060 = vmatprep.mubr.f32.mxu0 0.0
    %6061 = vmatmul.mubr.f32.gmra.mrb[0].mxu0 %v5959
    %v6062 = vpop.f32.mrb[0].mxu0
    %v6063 = vadd.f32 0.0, %v6062
    %v6064 = vpop.f32.mrb[0].mxu0
    %6065 = vdwg.mxu0
    %v6066 = vadd.f32 %v4590, %v6028
    %v6067 = vadd.f32 %v4591, %v6033
    %v6068 = vadd.f32 %v4592, %v6038
    %v6069 = vadd.f32 %v4593, %v6043
    %v6070 = vadd.f32 %v4594, %v6048
    %v6071 = vadd.f32 %v4595, %v6053
    %v6072 = vadd.f32 %v4596, %v6058
    %v6073 = vadd.f32 %v4597, %v6063
    %6074 = vst.msk [vmem:[#allocation5] sm:$0xff] %vm48, %v6066
    %6075 = vst.msk [vmem:[#allocation5 + $0x8] sm:$0xff] %vm48, %v6067
    %6076 = vst.msk [vmem:[#allocation5 + $0x10] sm:$0xff] %vm48, %v6068
    %6077 = vst.msk [vmem:[#allocation5 + $0x18] sm:$0xff] %vm48, %v6069
    %6078 = vst.msk [vmem:[#allocation5 + $0x20] sm:$0xff] %vm48, %v6070
    %6079 = vst.msk [vmem:[#allocation5 + $0x28] sm:$0xff] %vm48, %v6071
    %6080 = vst.msk [vmem:[#allocation5 + $0x30] sm:$0xff] %vm48, %v6072
    %6081 = vst.msk [vmem:[#allocation5 + $0x38] sm:$0xff] %vm48, %v6073
    // Predicated region
    $region22: #{attention_forward.1} parent=1 // pred_check
      _
    $region23: #{attention_forward.1} parent=1 // pred_check_branch
      %6083 = sbr.rel (0) target = $region25
    $region24: #{attention_forward.1} parent=1 // pred_region
      %s6085 = ssub.s32 1024, 1024
      %6086 = vsyncadd [#allocation4], %s6085
      %s6087 = sshll.u32 [#allocation5], 4
      %s6088 = int_to_ptr.vmem [resolvable:$true] %s6087
      %6093 = dma.vmem_to_hbm [thread:$0]  %s6088, 1024, %s4, [#allocation4], 128, 128, 8
    $region25: #{attention_forward.1} parent=1 // pred_fallthru
      _
    // Predicated region
    $region26: #{attention_forward.1} parent=1 // pred_check
      _
    $region27: #{attention_forward.1} parent=1 // pred_check_branch
      %6095 = sbr.rel (0) target = $region29
    $region28: #{attention_forward.1} parent=1 // pred_region
      %6096 = dma.done [#allocation4], 1024
    $region29: #{attention_forward.1} parent=1 // pred_fallthru
      _
    %6097 = vsyncpa [#allocation3], 1
    %6098 = vsyncpa [#allocation4], 1

</llo_original>
